<compile_context>
chip_gen: v7x
topology: tpu7x:2x2x1
jax: 0.10.0
libtpu: 0.0.40
codegen_flags: <defaults>
</compile_context>

<pallas_src>
import functools

import jax
import jax.numpy as jnp
from jax import lax
from jax.experimental import pallas as pl
from jax.experimental.pallas import tpu as pltpu

LANE = 128


def _round_up(n, m):
    return ((n + m - 1) // m) * m


# ----------------------------- Pallas kernel ---------------------------------

def bottleneck_kernel(x_ref, w1_ref, b1_ref, w2_ref, b2_ref, w3_ref, b3_ref,
                      o_ref, pad_ref, col_ref, *, H, W, Cp, Pp, half1, half3):
    """One batch element per grid step. x_ref block: (1,H,W,Cp) f32; weights bf16."""
    HW = H * W

    # Hoisted BiReLU masks (JAX does not CSE broadcast_in_dim -> build once, reuse).
    mask1 = lax.broadcasted_iota(jnp.int32, (HW, Pp), 1) < half1   # conv1/conv2 act
    mask3 = lax.broadcasted_iota(jnp.int32, (HW, Cp), 1) < half3   # final act

    def birelu(v, m):
        return jnp.where(m, jnp.maximum(v, 0.0), jnp.minimum(v, 0.0))

    x_f32 = x_ref[0].reshape(HW, Cp)              # f32 residual kept at full precision
    x_bf = x_f32.astype(jnp.bfloat16)             # bf16 only at the MXU boundary

    # conv1 (1x1) == lane-dense bf16 matmul, f32 accumulate.
    h1 = jnp.dot(x_bf, w1_ref[...], preferred_element_type=jnp.float32) + b1_ref[...]
    h1 = birelu(h1, mask1)                        # (HW, Pp) f32

    # conv2 (3x3, stride=1, pad=1) via zero-halo scratch + im2col + single matmul.
    # Only the 1-px halo is zero-filled (interior fully overwritten).  It is
    # re-zeroed every step (a few KB) so correctness holds under "parallel" grid
    # sharding on v7x, where each core owns its own scratch instance.
    h1_bf = h1.astype(jnp.bfloat16).reshape(H, W, Pp)
    zrow = jnp.zeros((1, W + 2, Pp), jnp.bfloat16)
    zcol = jnp.zeros((H + 2, 1, Pp), jnp.bfloat16)
    pad_ref[0:1] = zrow
    pad_ref[H + 1:H + 2] = zrow
    pad_ref[:, 0:1, :] = zcol
    pad_ref[:, W + 1:W + 2, :] = zcol
    pad_ref[1:H + 1, 1:W + 1, :] = h1_bf

    # Three W-shifted full-height slabs (only 2 of 3 are sublane-offset reads);
    # the nine (dh, dw) windows are free leading-dim slices of these values and
    # are packed into col_ref with lane-aligned (multiple-of-128) stores.
    slabs = [pad_ref[:, dw:dw + W, :] for dw in range(3)]   # each (H+2, W, Pp) bf16
    for dh in range(3):
        for dw in range(3):
            k = dh * 3 + dw
            col_ref[:, k * Pp:(k + 1) * Pp] = slabs[dw][dh:dh + H].reshape(HW, Pp)

    # Single K = 9*Pp matmul (better MXU cadence than nine K=Pp matmuls).
    h2 = jnp.dot(col_ref[...], w2_ref[...],
                 preferred_element_type=jnp.float32) + b2_ref[...]
    h2 = birelu(h2, mask1)                        # (HW, Pp) f32

    # conv3 (1x1) matmul, residual add (downsample=None), final BiReLU.
    h3 = jnp.dot(h2.astype(jnp.bfloat16), w3_ref[...],
                 preferred_element_type=jnp.float32) + b3_ref[...]
    out = birelu(h3 + x_f32, mask3)               # (HW, Cp) f32, lane-dense store
    o_ref[0] = out.reshape(H, W, Cp)


# ------------------------------ pallas_call wrapper ---------------------------

def bottleneck_forward(x_nhwc, params_oihw):
    """x_nhwc: (N,H,W,Cin) f32.  params_oihw: weight-normalized OIHW conv params."""
    w1o, b1, w2o, b2, w3o, b3 = params_oihw
    N, H, W, Cin = x_nhwc.shape
    P = w1o.shape[0]
    Cout = w3o.shape[0]
    assert Cin == Cout, "downsample is None => inplanes must equal planes*4"
    assert P % 2 == 0 and Cout % 2 == 0, "BiReLU needs an even channel count"
    assert W % 8 == 0, "keep W a multiple of 8 so in-kernel reshapes stay layout-free"
    # TODO(synk): stride>1 / downsample path (needs strided windows + residual projection).
    # TODO(synk): row-tile H with a 1-row halo for large feature maps so per-step VMEM
    #             stays well under v7x's 64 MiB; full-image blocks are fine at demo sizes.

    Pp = _round_up(P, LANE)
    Cp = _round_up(Cin, LANE)
    HW = H * W

    # Lane-dense, channels-last matmul operands: zero-pad channels to 128 and cast
    # weights to bf16 once in the wrapper (biases stay f32).
    w1k = jnp.zeros((Cp, Pp), jnp.float32).at[:Cin, :P].set(
        jnp.transpose(w1o[:, :, 0, 0], (1, 0))).astype(jnp.bfloat16)
    w2t = jnp.transpose(w2o, (2, 3, 1, 0))                       # (kh, kw, cin, cout)
    w2k = jnp.zeros((3, 3, Pp, Pp), jnp.float32).at[:, :, :P, :P].set(w2t)
    w2k = w2k.reshape(9 * Pp, Pp).astype(jnp.bfloat16)           # im2col weight matrix
    w3k = jnp.zeros((Pp, Cp), jnp.float32).at[:P, :Cout].set(
        jnp.transpose(w3o[:, :, 0, 0], (1, 0))).astype(jnp.bfloat16)
    b1k = jnp.zeros((1, Pp), jnp.float32).at[0, :P].set(b1)
    b2k = jnp.zeros((1, Pp), jnp.float32).at[0, :P].set(b2)
    b3k = jnp.zeros((1, Cp), jnp.float32).at[0, :Cout].set(b3)
    xp = jnp.zeros((N, H, W, Cp), jnp.float32).at[..., :Cin].set(x_nhwc)

    kernel = functools.partial(bottleneck_kernel, H=H, W=W, Cp=Cp, Pp=Pp,
                               half1=P // 2, half3=Cout // 2)

    # Advisory cost hint for XLA's scheduler around the custom call.
    flops = 2 * N * HW * (Cp * Pp + 9 * Pp * Pp + Pp * Cp)
    bytes_accessed = (2 * N * H * W * Cp * 4                      # x in + out (f32)
                      + (Cp * Pp + 9 * Pp * Pp + Pp * Cp) * 2     # bf16 weights
                      + (2 * Pp + Cp) * 4)                        # f32 biases
    cost = pl.CostEstimate(flops=flops, transcendentals=0,
                           bytes_accessed=bytes_accessed)

    out = pl.pallas_call(
        kernel,
        out_shape=jax.ShapeDtypeStruct((N, H, W, Cp), jnp.float32),
        grid_spec=pltpu.PrefetchScalarGridSpec(
            num_scalar_prefetch=0,
            grid=(N,),
            in_specs=[
                pl.BlockSpec((1, H, W, Cp), lambda b: (b, 0, 0, 0)),
                pl.BlockSpec((Cp, Pp), lambda b: (0, 0)),
                pl.BlockSpec((1, Pp), lambda b: (0, 0)),
                pl.BlockSpec((9 * Pp, Pp), lambda b: (0, 0)),
                pl.BlockSpec((1, Pp), lambda b: (0, 0)),
                pl.BlockSpec((Pp, Cp), lambda b: (0, 0)),
                pl.BlockSpec((1, Cp), lambda b: (0, 0)),
            ],
            out_specs=pl.BlockSpec((1, H, W, Cp), lambda b: (b, 0, 0, 0)),
            scratch_shapes=[
                pltpu.VMEM((H + 2, W + 2, Pp), jnp.bfloat16),    # zero-halo conv2 input
                pltpu.VMEM((H * W, 9 * Pp), jnp.bfloat16),       # im2col matrix
            ],
        ),
        compiler_params=pltpu.CompilerParams(
            # Batch elements are independent -> shard across v7x's 2 TensorCores;
            # harmless (near no-op) on single-core v5e/v6e.
            dimension_semantics=("parallel",),
            # Above v5e's 16 MiB default scoped limit; well under v7x's 64 MiB VMEM.
            vmem_limit_bytes=32 * 1024 * 1024,
        ),
        cost_estimate=cost,
    )(xp, w1k, b1k, w2k, b2k, w3k, b3k)
    return out[..., :Cout]


# --------------------------- parameter setup (glue) ---------------------------

def _weight_norm(v, g):
    # torch.nn.utils.weight_norm with dim=0: w = g * v / ||v||, norm over all dims but 0.
    axes = tuple(range(1, v.ndim))
    norm = jnp.sqrt(jnp.sum(v * v, axis=axes, keepdims=True))
    return v * (g.reshape((-1,) + (1,) * (v.ndim - 1)) / norm)


def init_params(key, inplanes, planes):
    ks = jax.random.split(key, 9)
    # conv1: (planes, inplanes, 1, 1)
    v1 = jax.random.normal(ks[0], (planes, inplanes, 1, 1), jnp.float32)
    g1 = jax.random.uniform(ks[1], (planes,), jnp.float32, 0.5, 1.5)
    b1 = 0.1 * jax.random.normal(ks[2], (planes,), jnp.float32)
    # conv2: (planes, planes, 3, 3)
    v2 = jax.random.normal(ks[3], (planes, planes, 3, 3), jnp.float32)
    g2 = jax.random.uniform(ks[4], (planes,), jnp.float32, 0.5, 1.5)
    b2 = 0.1 * jax.random.normal(ks[5], (planes,), jnp.float32)
    # conv3: (planes*4, planes, 1, 1)
    v3 = jax.random.normal(ks[6], (planes * 4, planes, 1, 1), jnp.float32)
    g3 = jax.random.uniform(ks[7], (planes * 4,), jnp.float32, 0.5, 1.5)
    b3 = 0.1 * jax.random.normal(ks[8], (planes * 4,), jnp.float32)

    return (_weight_norm(v1, g1), b1,
            _weight_norm(v2, g2), b2,
            _weight_norm(v3, g3), b3)


# --------------------------- pure-JAX reference (NCHW) ------------------------

def _birelu_nchw(x):
    c = x.shape[1]
    pos, neg = x[:, : c // 2], x[:, c // 2:]
    return jnp.concatenate([jnp.maximum(pos, 0.0), jnp.minimum(neg, 0.0)], axis=1)


def bottleneck_ref(x_nchw, params):
    w1, b1, w2, b2, w3, b3 = params
    dn = ("NCHW", "OIHW", "NCHW")
    conv = functools.partial(lax.conv_general_dilated, window_strides=(1, 1),
                             dimension_numbers=dn, precision=lax.Precision.HIGHEST)
    h = conv(x_nchw, w1, padding=[(0, 0), (0, 0)]) + b1[None, :, None, None]
    h = _birelu_nchw(h)
    h = conv(h, w2, padding=[(1, 1), (1, 1)]) + b2[None, :, None, None]
    h = _birelu_nchw(h)
    h = conv(h, w3, padding=[(0, 0), (0, 0)]) + b3[None, :, None, None]
    return _birelu_nchw(h + x_nchw)


# ------------------------------------ main ------------------------------------

if __name__ == "__main__":
    key = jax.random.PRNGKey(0)
    k_x, k_p = jax.random.split(key)

    planes = 4
    inplanes = planes * 4          # 16 (downsample=None requires inplanes == planes*4)
    N, H, W = 2, 16, 16
    x_nchw = jax.random.normal(k_x, (N, inplanes, H, W), jnp.float32)
    params = init_params(k_p, inplanes, planes)

    x_nhwc = jnp.transpose(x_nchw, (0, 2, 3, 1))                 # kernel uses NHWC
    out_nhwc = jax.block_until_ready(bottleneck_forward(x_nhwc, params))
    out_nchw = jnp.transpose(out_nhwc, (0, 3, 1, 2))

    ref = bottleneck_ref(x_nchw, params)
    # Kernel matmuls use bf16 operands with f32 accumulation (MXU-native); the
    # reference is f32 HIGHEST, so the tolerance is intentionally looser.
    if not jnp.allclose(out_nchw, ref, atol=5e-2, rtol=5e-2):
        err = float(jnp.max(jnp.abs(out_nchw - ref)))
        raise AssertionError(
            f"Pallas Bottleneck output mismatch vs JAX reference (max abs err {err:.3e})")
    print("KERNEL_OK")
</pallas_src>

<mosaic_0001>
module attributes {stable_mosaic.version = 11 : i64} {
  func.func @bottleneck_kernel(%arg0: i32, %arg1: memref<1x16x16x128xf32, #tpu.memory_space<vmem>>, %arg2: memref<128x128xbf16, #tpu.memory_space<vmem>>, %arg3: memref<1x128xf32, #tpu.memory_space<vmem>>, %arg4: memref<1152x128xbf16, #tpu.memory_space<vmem>>, %arg5: memref<1x128xf32, #tpu.memory_space<vmem>>, %arg6: memref<128x128xbf16, #tpu.memory_space<vmem>>, %arg7: memref<1x128xf32, #tpu.memory_space<vmem>>, %arg8: memref<1x16x16x128xf32, #tpu.memory_space<vmem>>, %arg9: memref<18x18x128xbf16, #tpu.memory_space<vmem>>, %arg10: memref<256x1152xbf16, #tpu.memory_space<vmem>>) attributes {dimension_semantics = [#tpu.dimension_semantics<parallel>], iteration_bounds = array<i64: 2>, scalar_prefetch = 0 : i64, scratch_operands = 2 : i64, tpu.core_type = #tpu.core_type<tc>, window_params = [{transform_indices = @transform_0, window_bounds = array<i64: 1, 16, 16, 128>}, {pipeline_mode = #tpu.pipeline_mode<synchronous>, transform_indices = @transform_1, window_bounds = array<i64: 128, 128>}, {pipeline_mode = #tpu.pipeline_mode<synchronous>, transform_indices = @transform_2, window_bounds = array<i64: 1, 128>}, {pipeline_mode = #tpu.pipeline_mode<synchronous>, transform_indices = @transform_3, window_bounds = array<i64: 1152, 128>}, {pipeline_mode = #tpu.pipeline_mode<synchronous>, transform_indices = @transform_4, window_bounds = array<i64: 1, 128>}, {pipeline_mode = #tpu.pipeline_mode<synchronous>, transform_indices = @transform_5, window_bounds = array<i64: 128, 128>}, {pipeline_mode = #tpu.pipeline_mode<synchronous>, transform_indices = @transform_6, window_bounds = array<i64: 1, 128>}, {transform_indices = @transform_7, window_bounds = array<i64: 1, 16, 16, 128>}]} {
    %0 = tpu.iota {dimensions = array<i32: 1>} : vector<256x128xi32>
    %c2_i32 = arith.constant 2 : i32
    %1 = vector.broadcast %c2_i32 : i32 to vector<256x128xi32>
    %2 = arith.cmpi slt, %0, %1 : vector<256x128xi32>
    %3 = tpu.iota {dimensions = array<i32: 1>} : vector<256x128xi32>
    %c8_i32 = arith.constant 8 : i32
    %4 = vector.broadcast %c8_i32 : i32 to vector<256x128xi32>
    %5 = arith.cmpi slt, %3, %4 : vector<256x128xi32>
    %c0 = arith.constant 0 : index
    %c0_0 = arith.constant 0 : index
    %c0_1 = arith.constant 0 : index
    %c0_2 = arith.constant 0 : index
    %6 = vector.load %arg1[%c0, %c0_0, %c0_1, %c0_2] : memref<1x16x16x128xf32, #tpu.memory_space<vmem>>, vector<1x16x16x128xf32>
    %7 = vector.shape_cast %6 : vector<1x16x16x128xf32> to vector<16x16x128xf32>
    %8 = vector.shape_cast %7 : vector<16x16x128xf32> to vector<256x128xf32>
    %9 = arith.truncf %8 : vector<256x128xf32> to vector<256x128xbf16>
    %c0_3 = arith.constant 0 : index
    %c0_4 = arith.constant 0 : index
    %10 = vector.load %arg2[%c0_3, %c0_4] : memref<128x128xbf16, #tpu.memory_space<vmem>>, vector<128x128xbf16>
    %cst = arith.constant dense<0.000000e+00> : vector<256x128xf32>
    %11 = tpu.matmul %9, %10, %cst {dimension_numbers = #tpu.dot_dimension_numbers<[1], [0], [0], [1], [0, 0, 1, 1], [], []>} : vector<256x128xbf16>, vector<128x128xbf16>, vector<256x128xf32> -> vector<256x128xf32>
    %c0_5 = arith.constant 0 : index
    %c0_6 = arith.constant 0 : index
    %12 = vector.load %arg3[%c0_5, %c0_6] : memref<1x128xf32, #tpu.memory_space<vmem>>, vector<1x128xf32>
    %13 = vector.broadcast %12 : vector<1x128xf32> to vector<256x128xf32>
    %14 = arith.addf %11, %13 : vector<256x128xf32>
    %cst_7 = arith.constant 0.000000e+00 : f32
    %15 = vector.broadcast %cst_7 : f32 to vector<256x128xf32>
    %16 = arith.maximumf %14, %15 : vector<256x128xf32>
    %cst_8 = arith.constant 0.000000e+00 : f32
    %17 = vector.broadcast %cst_8 : f32 to vector<256x128xf32>
    %18 = arith.minimumf %14, %17 : vector<256x128xf32>
    %19 = arith.select %2, %16, %18 : vector<256x128xi1>, vector<256x128xf32>
    %20 = arith.truncf %19 : vector<256x128xf32> to vector<256x128xbf16>
    %21 = vector.shape_cast %20 : vector<256x128xbf16> to vector<16x16x128xbf16>
    %cst_9 = arith.constant 0.000000e+00 : bf16
    %22 = vector.broadcast %cst_9 : bf16 to vector<1x18x128xbf16>
    %cst_10 = arith.constant 0.000000e+00 : bf16
    %23 = vector.broadcast %cst_10 : bf16 to vector<18x1x128xbf16>
    %c0_11 = arith.constant 0 : index
    %c0_12 = arith.constant 0 : index
    %c0_13 = arith.constant 0 : index
    %24 = vector.load %arg9[%c0_11, %c0_12, %c0_13] : memref<18x18x128xbf16, #tpu.memory_space<vmem>>, vector<1x18x128xbf16>
    tpu.vector_store %arg9[%c0_11, %c0_12, %c0_13], %22 {strides = array<i32>} : memref<18x18x128xbf16, #tpu.memory_space<vmem>>, vector<1x18x128xbf16>,
    %c17 = arith.constant 17 : index
    %c0_14 = arith.constant 0 : index
    %c0_15 = arith.constant 0 : index
    %25 = vector.load %arg9[%c17, %c0_14, %c0_15] : memref<18x18x128xbf16, #tpu.memory_space<vmem>>, vector<1x18x128xbf16>
    tpu.vector_store %arg9[%c17, %c0_14, %c0_15], %22 {strides = array<i32>} : memref<18x18x128xbf16, #tpu.memory_space<vmem>>, vector<1x18x128xbf16>,
    %c0_16 = arith.constant 0 : index
    %c0_17 = arith.constant 0 : index
    %c0_18 = arith.constant 0 : index
    %26 = vector.load %arg9[%c0_16, %c0_17, %c0_18] : memref<18x18x128xbf16, #tpu.memory_space<vmem>>, vector<18x1x128xbf16>
    tpu.vector_store %arg9[%c0_16, %c0_17, %c0_18], %23 {strides = array<i32>} : memref<18x18x128xbf16, #tpu.memory_space<vmem>>, vector<18x1x128xbf16>,
    %c0_19 = arith.constant 0 : index
    %c17_20 = arith.constant 17 : index
    %c0_21 = arith.constant 0 : index
    %27 = vector.load %arg9[%c0_19, %c17_20, %c0_21] : memref<18x18x128xbf16, #tpu.memory_space<vmem>>, vector<18x1x128xbf16>
    tpu.vector_store %arg9[%c0_19, %c17_20, %c0_21], %23 {strides = array<i32>} : memref<18x18x128xbf16, #tpu.memory_space<vmem>>, vector<18x1x128xbf16>,
    %c1 = arith.constant 1 : index
    %c1_22 = arith.constant 1 : index
    %c0_23 = arith.constant 0 : index
    %28 = vector.load %arg9[%c1, %c1_22, %c0_23] : memref<18x18x128xbf16, #tpu.memory_space<vmem>>, vector<16x16x128xbf16>
    tpu.vector_store %arg9[%c1, %c1_22, %c0_23], %21 {strides = array<i32>} : memref<18x18x128xbf16, #tpu.memory_space<vmem>>, vector<16x16x128xbf16>,
    %c0_24 = arith.constant 0 : index
    %c0_25 = arith.constant 0 : index
    %c0_26 = arith.constant 0 : index
    %29 = vector.load %arg9[%c0_24, %c0_25, %c0_26] : memref<18x18x128xbf16, #tpu.memory_space<vmem>>, vector<18x16x128xbf16>
    %c0_27 = arith.constant 0 : index
    %c1_28 = arith.constant 1 : index
    %c0_29 = arith.constant 0 : index
    %30 = vector.load %arg9[%c0_27, %c1_28, %c0_29] : memref<18x18x128xbf16, #tpu.memory_space<vmem>>, vector<18x16x128xbf16>
    %c0_30 = arith.constant 0 : index
    %c2 = arith.constant 2 : index
    %c0_31 = arith.constant 0 : index
    %31 = vector.load %arg9[%c0_30, %c2, %c0_31] : memref<18x18x128xbf16, #tpu.memory_space<vmem>>, vector<18x16x128xbf16>
    %32 = vector.extract_strided_slice %29 {offsets = [0, 0, 0], sizes = [16, 16, 128], strides = [1, 1, 1]} : vector<18x16x128xbf16> to vector<16x16x128xbf16>
    %33 = vector.shape_cast %32 : vector<16x16x128xbf16> to vector<256x128xbf16>
    %c0_32 = arith.constant 0 : index
    %c0_33 = arith.constant 0 : index
    %34 = vector.load %arg10[%c0_32, %c0_33] : memref<256x1152xbf16, #tpu.memory_space<vmem>>, vector<256x128xbf16>
    tpu.vector_store %arg10[%c0_32, %c0_33], %33 {strides = array<i32>} : memref<256x1152xbf16, #tpu.memory_space<vmem>>, vector<256x128xbf16>,
    %35 = vector.extract_strided_slice %30 {offsets = [0, 0, 0], sizes = [16, 16, 128], strides = [1, 1, 1]} : vector<18x16x128xbf16> to vector<16x16x128xbf16>
    %36 = vector.shape_cast %35 : vector<16x16x128xbf16> to vector<256x128xbf16>
    %c0_34 = arith.constant 0 : index
    %c128 = arith.constant 128 : index
    %37 = vector.load %arg10[%c0_34, %c128] : memref<256x1152xbf16, #tpu.memory_space<vmem>>, vector<256x128xbf16>
    tpu.vector_store %arg10[%c0_34, %c128], %36 {strides = array<i32>} : memref<256x1152xbf16, #tpu.memory_space<vmem>>, vector<256x128xbf16>,
    %38 = vector.extract_strided_slice %31 {offsets = [0, 0, 0], sizes = [16, 16, 128], strides = [1, 1, 1]} : vector<18x16x128xbf16> to vector<16x16x128xbf16>
    %39 = vector.shape_cast %38 : vector<16x16x128xbf16> to vector<256x128xbf16>
    %c0_35 = arith.constant 0 : index
    %c256 = arith.constant 256 : index
    %40 = vector.load %arg10[%c0_35, %c256] : memref<256x1152xbf16, #tpu.memory_space<vmem>>, vector<256x128xbf16>
    tpu.vector_store %arg10[%c0_35, %c256], %39 {strides = array<i32>} : memref<256x1152xbf16, #tpu.memory_space<vmem>>, vector<256x128xbf16>,
    %41 = vector.extract_strided_slice %29 {offsets = [1, 0, 0], sizes = [16, 16, 128], strides = [1, 1, 1]} : vector<18x16x128xbf16> to vector<16x16x128xbf16>
    %42 = vector.shape_cast %41 : vector<16x16x128xbf16> to vector<256x128xbf16>
    %c0_36 = arith.constant 0 : index
    %c384 = arith.constant 384 : index
    %43 = vector.load %arg10[%c0_36, %c384] : memref<256x1152xbf16, #tpu.memory_space<vmem>>, vector<256x128xbf16>
    tpu.vector_store %arg10[%c0_36, %c384], %42 {strides = array<i32>} : memref<256x1152xbf16, #tpu.memory_space<vmem>>, vector<256x128xbf16>,
    %44 = vector.extract_strided_slice %30 {offsets = [1, 0, 0], sizes = [16, 16, 128], strides = [1, 1, 1]} : vector<18x16x128xbf16> to vector<16x16x128xbf16>
    %45 = vector.shape_cast %44 : vector<16x16x128xbf16> to vector<256x128xbf16>
    %c0_37 = arith.constant 0 : index
    %c512 = arith.constant 512 : index
    %46 = vector.load %arg10[%c0_37, %c512] : memref<256x1152xbf16, #tpu.memory_space<vmem>>, vector<256x128xbf16>
    tpu.vector_store %arg10[%c0_37, %c512], %45 {strides = array<i32>} : memref<256x1152xbf16, #tpu.memory_space<vmem>>, vector<256x128xbf16>,
    %47 = vector.extract_strided_slice %31 {offsets = [1, 0, 0], sizes = [16, 16, 128], strides = [1, 1, 1]} : vector<18x16x128xbf16> to vector<16x16x128xbf16>
    %48 = vector.shape_cast %47 : vector<16x16x128xbf16> to vector<256x128xbf16>
    %c0_38 = arith.constant 0 : index
    %c640 = arith.constant 640 : index
    %49 = vector.load %arg10[%c0_38, %c640] : memref<256x1152xbf16, #tpu.memory_space<vmem>>, vector<256x128xbf16>
    tpu.vector_store %arg10[%c0_38, %c640], %48 {strides = array<i32>} : memref<256x1152xbf16, #tpu.memory_space<vmem>>, vector<256x128xbf16>,
    %50 = vector.extract_strided_slice %29 {offsets = [2, 0, 0], sizes = [16, 16, 128], strides = [1, 1, 1]} : vector<18x16x128xbf16> to vector<16x16x128xbf16>
    %51 = vector.shape_cast %50 : vector<16x16x128xbf16> to vector<256x128xbf16>
    %c0_39 = arith.constant 0 : index
    %c768 = arith.constant 768 : index
    %52 = vector.load %arg10[%c0_39, %c768] : memref<256x1152xbf16, #tpu.memory_space<vmem>>, vector<256x128xbf16>
    tpu.vector_store %arg10[%c0_39, %c768], %51 {strides = array<i32>} : memref<256x1152xbf16, #tpu.memory_space<vmem>>, vector<256x128xbf16>,
    %53 = vector.extract_strided_slice %30 {offsets = [2, 0, 0], sizes = [16, 16, 128], strides = [1, 1, 1]} : vector<18x16x128xbf16> to vector<16x16x128xbf16>
    %54 = vector.shape_cast %53 : vector<16x16x128xbf16> to vector<256x128xbf16>
    %c0_40 = arith.constant 0 : index
    %c896 = arith.constant 896 : index
    %55 = vector.load %arg10[%c0_40, %c896] : memref<256x1152xbf16, #tpu.memory_space<vmem>>, vector<256x128xbf16>
    tpu.vector_store %arg10[%c0_40, %c896], %54 {strides = array<i32>} : memref<256x1152xbf16, #tpu.memory_space<vmem>>, vector<256x128xbf16>,
    %56 = vector.extract_strided_slice %31 {offsets = [2, 0, 0], sizes = [16, 16, 128], strides = [1, 1, 1]} : vector<18x16x128xbf16> to vector<16x16x128xbf16>
    %57 = vector.shape_cast %56 : vector<16x16x128xbf16> to vector<256x128xbf16>
    %c0_41 = arith.constant 0 : index
    %c1024 = arith.constant 1024 : index
    %58 = vector.load %arg10[%c0_41, %c1024] : memref<256x1152xbf16, #tpu.memory_space<vmem>>, vector<256x128xbf16>
    tpu.vector_store %arg10[%c0_41, %c1024], %57 {strides = array<i32>} : memref<256x1152xbf16, #tpu.memory_space<vmem>>, vector<256x128xbf16>,
    %c0_42 = arith.constant 0 : index
    %c0_43 = arith.constant 0 : index
    %59 = vector.load %arg10[%c0_42, %c0_43] : memref<256x1152xbf16, #tpu.memory_space<vmem>>, vector<256x1152xbf16>
    %c0_44 = arith.constant 0 : index
    %c0_45 = arith.constant 0 : index
    %60 = vector.load %arg4[%c0_44, %c0_45] : memref<1152x128xbf16, #tpu.memory_space<vmem>>, vector<1152x128xbf16>
    %cst_46 = arith.constant dense<0.000000e+00> : vector<256x128xf32>
    %61 = tpu.matmul %59, %60, %cst_46 {dimension_numbers = #tpu.dot_dimension_numbers<[1], [0], [0], [1], [0, 0, 1, 1], [], []>} : vector<256x1152xbf16>, vector<1152x128xbf16>, vector<256x128xf32> -> vector<256x128xf32>
    %c0_47 = arith.constant 0 : index
    %c0_48 = arith.constant 0 : index
    %62 = vector.load %arg5[%c0_47, %c0_48] : memref<1x128xf32, #tpu.memory_space<vmem>>, vector<1x128xf32>
    %63 = vector.broadcast %62 : vector<1x128xf32> to vector<256x128xf32>
    %64 = arith.addf %61, %63 : vector<256x128xf32>
    %cst_49 = arith.constant 0.000000e+00 : f32
    %65 = vector.broadcast %cst_49 : f32 to vector<256x128xf32>
    %66 = arith.maximumf %64, %65 : vector<256x128xf32>
    %cst_50 = arith.constant 0.000000e+00 : f32
    %67 = vector.broadcast %cst_50 : f32 to vector<256x128xf32>
    %68 = arith.minimumf %64, %67 : vector<256x128xf32>
    %69 = arith.select %2, %66, %68 : vector<256x128xi1>, vector<256x128xf32>
    %70 = arith.truncf %69 : vector<256x128xf32> to vector<256x128xbf16>
    %c0_51 = arith.constant 0 : index
    %c0_52 = arith.constant 0 : index
    %71 = vector.load %arg6[%c0_51, %c0_52] : memref<128x128xbf16, #tpu.memory_space<vmem>>, vector<128x128xbf16>
    %cst_53 = arith.constant dense<0.000000e+00> : vector<256x128xf32>
    %72 = tpu.matmul %70, %71, %cst_53 {dimension_numbers = #tpu.dot_dimension_numbers<[1], [0], [0], [1], [0, 0, 1, 1], [], []>} : vector<256x128xbf16>, vector<128x128xbf16>, vector<256x128xf32> -> vector<256x128xf32>
    %c0_54 = arith.constant 0 : index
    %c0_55 = arith.constant 0 : index
    %73 = vector.load %arg7[%c0_54, %c0_55] : memref<1x128xf32, #tpu.memory_space<vmem>>, vector<1x128xf32>
    %74 = vector.broadcast %73 : vector<1x128xf32> to vector<256x128xf32>
    %75 = arith.addf %72, %74 : vector<256x128xf32>
    %76 = arith.addf %75, %8 : vector<256x128xf32>
    %cst_56 = arith.constant 0.000000e+00 : f32
    %77 = vector.broadcast %cst_56 : f32 to vector<256x128xf32>
    %78 = arith.maximumf %76, %77 : vector<256x128xf32>
    %cst_57 = arith.constant 0.000000e+00 : f32
    %79 = vector.broadcast %cst_57 : f32 to vector<256x128xf32>
    %80 = arith.minimumf %76, %79 : vector<256x128xf32>
    %81 = arith.select %5, %78, %80 : vector<256x128xi1>, vector<256x128xf32>
    %82 = vector.shape_cast %81 : vector<256x128xf32> to vector<16x16x128xf32>
    %c0_58 = arith.constant 0 : index
    %c0_59 = arith.constant 0 : index
    %c0_60 = arith.constant 0 : index
    %c0_61 = arith.constant 0 : index
    %83 = vector.load %arg8[%c0_58, %c0_59, %c0_60, %c0_61] : memref<1x16x16x128xf32, #tpu.memory_space<vmem>>, vector<1x16x16x128xf32>
    %84 = vector.shape_cast %83 : vector<1x16x16x128xf32> to vector<16x16x128xf32>
    %85 = vector.shape_cast %82 : vector<16x16x128xf32> to vector<1x16x16x128xf32>
    tpu.vector_store %arg8[%c0_58, %c0_59, %c0_60, %c0_61], %85 {strides = array<i32>} : memref<1x16x16x128xf32, #tpu.memory_space<vmem>>, vector<1x16x16x128xf32>,
    return
  }
  func.func @transform_0(%arg0: i32) -> (i32, i32, i32, i32) {
    %c0_i32 = arith.constant 0 : i32
    %c0_i32_0 = arith.constant 0 : i32
    %c0_i32_1 = arith.constant 0 : i32
    %c0_i32_2 = arith.constant 0 : i32
    return %arg0, %c0_i32, %c0_i32_0, %c0_i32_1 : i32, i32, i32, i32
  }
  func.func @transform_1(%arg0: i32) -> (i32, i32) {
    %c0_i32 = arith.constant 0 : i32
    %c0_i32_0 = arith.constant 0 : i32
    %c0_i32_1 = arith.constant 0 : i32
    return %c0_i32, %c0_i32_0 : i32, i32
  }
  func.func @transform_2(%arg0: i32) -> (i32, i32) {
    %c0_i32 = arith.constant 0 : i32
    %c0_i32_0 = arith.constant 0 : i32
    %c0_i32_1 = arith.constant 0 : i32
    return %c0_i32, %c0_i32_0 : i32, i32
  }
  func.func @transform_3(%arg0: i32) -> (i32, i32) {
    %c0_i32 = arith.constant 0 : i32
    %c0_i32_0 = arith.constant 0 : i32
    %c0_i32_1 = arith.constant 0 : i32
    return %c0_i32, %c0_i32_0 : i32, i32
  }
  func.func @transform_4(%arg0: i32) -> (i32, i32) {
    %c0_i32 = arith.constant 0 : i32
    %c0_i32_0 = arith.constant 0 : i32
    %c0_i32_1 = arith.constant 0 : i32
    return %c0_i32, %c0_i32_0 : i32, i32
  }
  func.func @transform_5(%arg0: i32) -> (i32, i32) {
    %c0_i32 = arith.constant 0 : i32
    %c0_i32_0 = arith.constant 0 : i32
    %c0_i32_1 = arith.constant 0 : i32
    return %c0_i32, %c0_i32_0 : i32, i32
  }
  func.func @transform_6(%arg0: i32) -> (i32, i32) {
    %c0_i32 = arith.constant 0 : i32
    %c0_i32_0 = arith.constant 0 : i32
    %c0_i32_1 = arith.constant 0 : i32
    return %c0_i32, %c0_i32_0 : i32, i32
  }
  func.func @transform_7(%arg0: i32) -> (i32, i32, i32, i32) {
    %c0_i32 = arith.constant 0 : i32
    %c0_i32_0 = arith.constant 0 : i32
    %c0_i32_1 = arith.constant 0 : i32
    %c0_i32_2 = arith.constant 0 : i32
    return %arg0, %c0_i32, %c0_i32_0, %c0_i32_1 : i32, i32, i32, i32
  }
}

</mosaic_0001>

<llo_original>
// kernel: tpu_custom_call.1
$region0: #{tpu_custom_call.1}
  #allocation0 [shape = 'u32[]', space=smem, size = 0x4, offset = 0x4, fixed_abs, tag = 'smem constant byte address 0x4 - core index']
  #allocation1 [shape = 'u32[144,128]{1,0:T(1,128)}', space=vmem, size = 0x12000, scoped, tag = 'internal scratch']
  #allocation2 [shape = 'bf16[18,18,128]{2,1,0:T(8,128)(2,1)}', space=vmem, size = 0x1b000, scoped, tag = 'scratch operand']
  #allocation3 [shape = 'bf16[256,1152]{1,0:T(16,128)(2,1)}', space=vmem, size = 0x90000, scoped, tag = 'scratch operand']
  %s0 = inlined_call_operand.hbm [shape: f32[2,16,16,128], index: 0, kind: input, shape index: {}]
  %s1 = inlined_call_operand.hbm [shape: bf16[128,128], index: 1, kind: input, shape index: {}]
  %s2 = inlined_call_operand.vmem [shape: f32[1,128], index: 2, kind: input, shape index: {}]
  %s3 = inlined_call_operand.hbm [shape: bf16[1152,128], index: 3, kind: input, shape index: {}]
  %s4 = inlined_call_operand.vmem [shape: f32[1,128], index: 4, kind: input, shape index: {}]
  %s5 = inlined_call_operand.hbm [shape: bf16[128,128], index: 5, kind: input, shape index: {}]
  %s6 = inlined_call_operand.vmem [shape: f32[1,128], index: 6, kind: input, shape index: {}]
  %s7 = inlined_call_operand.hbm [shape: f32[2,16,16,128], index: 7, kind: output, shape index: {}]
  %s8 = sld [smem:[#allocation0]]
  $region77: #{tpu_custom_call.1} parent=0
    _
  %s10 = ssub.s32 1, %s8
  %s11 = scalar_select 0, %s10, %s8
  $region1: #{tpu_custom_call.1} parent=0
    #allocation4 [shape = 'u8[262144]{0}', space=vmem, size = 0x40000, scoped, tag = 'input window, operand 0']
    #allocation5 [shape = 's32[2]{0}', space=sflag, size = 0x8, scoped, tag = 'scoped memory for tpu_custom_call.1']
    #allocation6 [shape = 's32[2]{0}', space=sflag, size = 0x8, scoped, tag = 'scoped memory for tpu_custom_call.1']
    #allocation7 [shape = 'u8[32768]{0}', space=vmem, size = 0x8000, scoped, tag = 'input window, operand 1, single buffered']
    #allocation8 [shape = 's32[1]{0}', space=sflag, size = 0x4, scoped, tag = 'scoped memory for tpu_custom_call.1']
    #allocation9 [shape = 'u8[294912]{0}', space=vmem, size = 0x48000, scoped, tag = 'input window, operand 3, single buffered']
    #allocation10 [shape = 'u8[32768]{0}', space=vmem, size = 0x8000, scoped, tag = 'input window, operand 5, single buffered']
    #allocation11 [shape = 's32[1]{0}', space=sflag, size = 0x4, scoped, tag = 'scoped memory for tpu_custom_call.1']
    #allocation12 [shape = 'u8[262144]{0}', space=vmem, size = 0x40000, scoped, tag = 'output window, operand 0']
    %12 = vsyncpa [#allocation5], 0
    %s13 = scalar_lea.sflag [#allocation5], 1
    %14 = vsyncpa %s13, 0
    %15 = vsyncpa [#allocation8], 0
    %16 = vsyncpa [#allocation11], 0
    %17 = vsyncpa [#allocation6], 0
    %s18 = scalar_lea.sflag [#allocation6], 1
    %19 = vsyncpa %s18, 0
    loop: start=0, step=1, limit=4
    $region2: #{tpu_custom_call.1} parent=1 // loop_pre_header
      _
    $region3: #{tpu_custom_call.1} parent=1 // loop_header
      %s21 = sphi 0, %s25
      %p22 = scmp.ge.s32.totalorder %s21, 4
      %s31 = sphi 0, %s33
      %s34 = sphi 0, %s31
      %s35 = sphi 0, %s34
      %s51 = sphi 0, %s35
      %s55 = sphi 0, %s55
      %s57 = sphi 0, %s55
      %s58 = sphi 0, %s57
      %s72 = sphi 0, %s58
      %s76 = sphi 0, %s76
      %s78 = sphi 0, %s76
      %s79 = sphi 0, %s78
      %s93 = sphi 0, %s79
      %s97 = sphi 0, %s97
      %s99 = sphi 0, %s97
      %s100 = sphi 0, %s99
      %s114 = sphi 0, %s100
      %s118 = sphi 0, %s118
      %s120 = sphi 0, %s118
      %s121 = sphi 0, %s120
      %s135 = sphi 0, %s121
      %s139 = sphi 0, %s139
      %s141 = sphi 0, %s139
      %s142 = sphi 0, %s141
      %s156 = sphi 0, %s142
      %s160 = sphi 0, %s160
      %s162 = sphi 0, %s160
      %s163 = sphi 0, %s162
      %s177 = sphi 0, %s163
      %s183 = sphi 0, %s185
      %s186 = sphi 0, %s183
      %s187 = sphi 0, %s186
      %s203 = sphi 0, %s187
    $region4: #{tpu_custom_call.1} parent=1 // loop_header_branch
      %24 = sbr.rel (%p22) target = $region8
    $region5: #{tpu_custom_call.1} parent=1 // loop_body
      %s26 = ssub.s32 %s21, 1
      %s27 = ssub.s32 %s21, 2
      %s28 = sadd.s32 %s21, 1
      %s29 = ssub.s32 %s21, %s28
      %p30 = scmp.eq.s32.totalorder %s29, 0
      %s32 = sadd.s32 %s31, 1
      %s33 = scalar_select %p30, %s31, %s32
      %p36 = pneg %p30
      %p37 = scmp.eq.s32.totalorder %s21, 1
      %p38 = por %p36, %p37
      %p39 = scmp.ne.s32.totalorder %s31, %s34
      %p40 = scmp.eq.s32.totalorder %s21, 0
      %p41 = por %p39, %p40
      %p42 = scmp.ne.s32.totalorder %s31, %s34
      %p43 = scmp.eq.s32.totalorder %s26, 1
      %p44 = por %p42, %p43
      %p45 = scmp.ne.s32.totalorder %s34, %s35
      %p46 = scmp.eq.s32.totalorder %s26, 0
      %p47 = por %p45, %p46
      %p48 = scmp.ne.s32.totalorder %s34, %s35
      %p49 = scmp.eq.s32.totalorder %s27, 1
      %p50 = por %p48, %p49
      %p52 = scmp.ne.s32.totalorder %s35, %s51
      %p53 = scmp.eq.s32.totalorder %s27, 0
      %p54 = por %p52, %p53
      %s56 = sadd.s32 %s55, 1
      %p59 = scmp.eq.s32.totalorder %s21, 1
      %p60 = scmp.ne.s32.totalorder %s55, %s57
      %p61 = scmp.eq.s32.totalorder %s21, 0
      %p62 = por %p60, %p61
      %p63 = scmp.ne.s32.totalorder %s55, %s57
      %p64 = scmp.eq.s32.totalorder %s26, 1
      %p65 = por %p63, %p64
      %p66 = scmp.ne.s32.totalorder %s57, %s58
      %p67 = scmp.eq.s32.totalorder %s26, 0
      %p68 = por %p66, %p67
      %p69 = scmp.ne.s32.totalorder %s57, %s58
      %p70 = scmp.eq.s32.totalorder %s27, 1
      %p71 = por %p69, %p70
      %p73 = scmp.ne.s32.totalorder %s58, %s72
      %p74 = scmp.eq.s32.totalorder %s27, 0
      %p75 = por %p73, %p74
      %s77 = sadd.s32 %s76, 1
      %p80 = scmp.eq.s32.totalorder %s21, 1
      %p81 = scmp.ne.s32.totalorder %s76, %s78
      %p82 = scmp.eq.s32.totalorder %s21, 0
      %p83 = por %p81, %p82
      %p84 = scmp.ne.s32.totalorder %s76, %s78
      %p85 = scmp.eq.s32.totalorder %s26, 1
      %p86 = por %p84, %p85
      %p87 = scmp.ne.s32.totalorder %s78, %s79
      %p88 = scmp.eq.s32.totalorder %s26, 0
      %p89 = por %p87, %p88
      %p90 = scmp.ne.s32.totalorder %s78, %s79
      %p91 = scmp.eq.s32.totalorder %s27, 1
      %p92 = por %p90, %p91
      %p94 = scmp.ne.s32.totalorder %s79, %s93
      %p95 = scmp.eq.s32.totalorder %s27, 0
      %p96 = por %p94, %p95
      %s98 = sadd.s32 %s97, 1
      %p101 = scmp.eq.s32.totalorder %s21, 1
      %p102 = scmp.ne.s32.totalorder %s97, %s99
      %p103 = scmp.eq.s32.totalorder %s21, 0
      %p104 = por %p102, %p103
      %p105 = scmp.ne.s32.totalorder %s97, %s99
      %p106 = scmp.eq.s32.totalorder %s26, 1
      %p107 = por %p105, %p106
      %p108 = scmp.ne.s32.totalorder %s99, %s100
      %p109 = scmp.eq.s32.totalorder %s26, 0
      %p110 = por %p108, %p109
      %p111 = scmp.ne.s32.totalorder %s99, %s100
      %p112 = scmp.eq.s32.totalorder %s27, 1
      %p113 = por %p111, %p112
      %p115 = scmp.ne.s32.totalorder %s100, %s114
      %p116 = scmp.eq.s32.totalorder %s27, 0
      %p117 = por %p115, %p116
      %s119 = sadd.s32 %s118, 1
      %p122 = scmp.eq.s32.totalorder %s21, 1
      %p123 = scmp.ne.s32.totalorder %s118, %s120
      %p124 = scmp.eq.s32.totalorder %s21, 0
      %p125 = por %p123, %p124
      %p126 = scmp.ne.s32.totalorder %s118, %s120
      %p127 = scmp.eq.s32.totalorder %s26, 1
      %p128 = por %p126, %p127
      %p129 = scmp.ne.s32.totalorder %s120, %s121
      %p130 = scmp.eq.s32.totalorder %s26, 0
      %p131 = por %p129, %p130
      %p132 = scmp.ne.s32.totalorder %s120, %s121
      %p133 = scmp.eq.s32.totalorder %s27, 1
      %p134 = por %p132, %p133
      %p136 = scmp.ne.s32.totalorder %s121, %s135
      %p137 = scmp.eq.s32.totalorder %s27, 0
      %p138 = por %p136, %p137
      %s140 = sadd.s32 %s139, 1
      %p143 = scmp.eq.s32.totalorder %s21, 1
      %p144 = scmp.ne.s32.totalorder %s139, %s141
      %p145 = scmp.eq.s32.totalorder %s21, 0
      %p146 = por %p144, %p145
      %p147 = scmp.ne.s32.totalorder %s139, %s141
      %p148 = scmp.eq.s32.totalorder %s26, 1
      %p149 = por %p147, %p148
      %p150 = scmp.ne.s32.totalorder %s141, %s142
      %p151 = scmp.eq.s32.totalorder %s26, 0
      %p152 = por %p150, %p151
      %p153 = scmp.ne.s32.totalorder %s141, %s142
      %p154 = scmp.eq.s32.totalorder %s27, 1
      %p155 = por %p153, %p154
      %p157 = scmp.ne.s32.totalorder %s142, %s156
      %p158 = scmp.eq.s32.totalorder %s27, 0
      %p159 = por %p157, %p158
      %s161 = sadd.s32 %s160, 1
      %p164 = scmp.eq.s32.totalorder %s21, 1
      %p165 = scmp.ne.s32.totalorder %s160, %s162
      %p166 = scmp.eq.s32.totalorder %s21, 0
      %p167 = por %p165, %p166
      %p168 = scmp.ne.s32.totalorder %s160, %s162
      %p169 = scmp.eq.s32.totalorder %s26, 1
      %p170 = por %p168, %p169
      %p171 = scmp.ne.s32.totalorder %s162, %s163
      %p172 = scmp.eq.s32.totalorder %s26, 0
      %p173 = por %p171, %p172
      %p174 = scmp.ne.s32.totalorder %s162, %s163
      %p175 = scmp.eq.s32.totalorder %s27, 1
      %p176 = por %p174, %p175
      %p178 = scmp.ne.s32.totalorder %s163, %s177
      %p179 = scmp.eq.s32.totalorder %s27, 0
      %p180 = por %p178, %p179
      %s181 = ssub.s32 %s21, %s28
      %p182 = scmp.eq.s32.totalorder %s181, 0
      %s184 = sadd.s32 %s183, 1
      %s185 = scalar_select %p182, %s183, %s184
      %p188 = pneg %p182
      %p189 = scmp.eq.s32.totalorder %s21, 1
      %p190 = por %p188, %p189
      %p191 = scmp.ne.s32.totalorder %s183, %s186
      %p192 = scmp.eq.s32.totalorder %s21, 0
      %p193 = por %p191, %p192
      %p194 = scmp.ne.s32.totalorder %s183, %s186
      %p195 = scmp.eq.s32.totalorder %s26, 1
      %p196 = por %p194, %p195
      %p197 = scmp.ne.s32.totalorder %s186, %s187
      %p198 = scmp.eq.s32.totalorder %s26, 0
      %p199 = por %p197, %p198
      %p200 = scmp.ne.s32.totalorder %s186, %s187
      %p201 = scmp.eq.s32.totalorder %s27, 1
      %p202 = por %p200, %p201
      %p204 = scmp.ne.s32.totalorder %s187, %s203
      %p205 = scmp.eq.s32.totalorder %s27, 0
      %p206 = por %p204, %p205
      %p207 = scmp.le.s32.totalorder 1, %s21
      %p208 = scmp.lt.s32.totalorder %s21, 3
      %p209 = pnand %p207, %p208
      %p210 = pneg %p209
      // Predicated region
      $region9: #{tpu_custom_call.1} parent=5 // pred_check
        _
      $region10: #{tpu_custom_call.1} parent=5 // pred_check_branch
        %212 = sbr.rel (%p209) target = $region12
      $region11: #{tpu_custom_call.1} parent=5 // pred_region
        %s213 = ssub.s32 %s21, 1
        // Predicated region
        $region13: #{tpu_custom_call.1} parent=11 // pred_check
          %p214 = pneg %p68
        $region14: #{tpu_custom_call.1} parent=11 // pred_check_branch
          %216 = sbr.rel (%p214) target = $region16
        $region15: #{tpu_custom_call.1} parent=11 // pred_region
          %s218 = ssub.s32 1024, 1024
          %219 = vsyncadd [#allocation8], %s218
          %s220 = sshll.u32 [#allocation7], 4
          %s221 = int_to_ptr.vmem [resolvable:$true] %s220
          %226 = dma.hbm_to_vmem [thread:$0]  %s1, 1024, %s221, [#allocation8], 64, 64, 4
        $region16: #{tpu_custom_call.1} parent=11 // pred_fallthru
          _
        // Predicated region
        $region17: #{tpu_custom_call.1} parent=11 // pred_check
          %p227 = pneg %p89
        $region18: #{tpu_custom_call.1} parent=11 // pred_check_branch
          %229 = sbr.rel (%p227) target = $region20
        $region19: #{tpu_custom_call.1} parent=11 // pred_region
          _
        $region20: #{tpu_custom_call.1} parent=11 // pred_fallthru
          _
        // Predicated region
        $region21: #{tpu_custom_call.1} parent=11 // pred_check
          %p230 = pneg %p110
        $region22: #{tpu_custom_call.1} parent=11 // pred_check_branch
          %232 = sbr.rel (%p230) target = $region24
        $region23: #{tpu_custom_call.1} parent=11 // pred_region
          %s234 = ssub.s32 9216, 9216
          %235 = vsyncadd [#allocation8], %s234
          %s236 = sshll.u32 [#allocation9], 4
          %s237 = int_to_ptr.vmem [resolvable:$true] %s236
          %242 = dma.hbm_to_vmem [thread:$0]  %s3, 9216, %s237, [#allocation8], 64, 64, 4
        $region24: #{tpu_custom_call.1} parent=11 // pred_fallthru
          _
        // Predicated region
        $region25: #{tpu_custom_call.1} parent=11 // pred_check
          %p243 = pneg %p131
        $region26: #{tpu_custom_call.1} parent=11 // pred_check_branch
          %245 = sbr.rel (%p243) target = $region28
        $region27: #{tpu_custom_call.1} parent=11 // pred_region
          _
        $region28: #{tpu_custom_call.1} parent=11 // pred_fallthru
          _
        // Predicated region
        $region29: #{tpu_custom_call.1} parent=11 // pred_check
          %p246 = pneg %p152
        $region30: #{tpu_custom_call.1} parent=11 // pred_check_branch
          %248 = sbr.rel (%p246) target = $region32
        $region31: #{tpu_custom_call.1} parent=11 // pred_region
          %s250 = ssub.s32 1024, 1024
          %251 = vsyncadd [#allocation11], %s250
          %s252 = sshll.u32 [#allocation10], 4
          %s253 = int_to_ptr.vmem [resolvable:$true] %s252
          %258 = dma.hbm_to_vmem [thread:$0]  %s5, 1024, %s253, [#allocation11], 64, 64, 4
        $region32: #{tpu_custom_call.1} parent=11 // pred_fallthru
          _
        // Predicated region
        $region33: #{tpu_custom_call.1} parent=11 // pred_check
          %p259 = pneg %p173
        $region34: #{tpu_custom_call.1} parent=11 // pred_check_branch
          %261 = sbr.rel (%p259) target = $region36
        $region35: #{tpu_custom_call.1} parent=11 // pred_region
          _
        $region36: #{tpu_custom_call.1} parent=11 // pred_fallthru
          _
      $region12: #{tpu_custom_call.1} parent=5 // pred_fallthru
        _
      %p262 = scmp.lt.s32.totalorder %s21, 2
      // Predicated region
      $region37: #{tpu_custom_call.1} parent=5 // pred_check
        %p263 = pneg %p262
      $region38: #{tpu_custom_call.1} parent=5 // pred_check_branch
        %265 = sbr.rel (%p263) target = $region40
      $region39: #{tpu_custom_call.1} parent=5 // pred_region
        // Predicated region
        $region41: #{tpu_custom_call.1} parent=39 // pred_check
          %p266 = pneg %p41
        $region42: #{tpu_custom_call.1} parent=39 // pred_check_branch
          %268 = sbr.rel (%p266) target = $region44
        $region43: #{tpu_custom_call.1} parent=39 // pred_region
          %s269 = sand.u32 %s31, 1
          %s270 = scalar_lea.sflag [#allocation5], %s269
          %s271 = sand.u32 %s31, 1
          %s272 = smul.addr %s271, 256
          %s273 = scalar_lea.vmem [#allocation4], %s272
          %s275 = ssub.s32 4096, 4096
          %276 = vsyncadd %s270, %s275
          %s277 = smul.addr %s21, 32
          %s278 = smul.addr %s277, 128
          %s279 = scalar_lea.hbm %s0, %s278
          %s280 = sshll.u32 %s273, 4
          %s281 = int_to_ptr.vmem [resolvable:$true] %s280
          %286 = dma.hbm_to_vmem [thread:$0]  %s279, 4096, %s281, %s270, 128, 128, 8
        $region44: #{tpu_custom_call.1} parent=39 // pred_fallthru
          _
      $region40: #{tpu_custom_call.1} parent=5 // pred_fallthru
        _
      %p287 = scmp.le.s32.totalorder 1, %s21
      %p288 = scmp.lt.s32.totalorder %s21, 3
      %p289 = pnand %p287, %p288
      %p290 = pneg %p289
      // Predicated region
      $region45: #{tpu_custom_call.1} parent=5 // pred_check
        _
      $region46: #{tpu_custom_call.1} parent=5 // pred_check_branch
        %292 = sbr.rel (%p289) target = $region48
      $region47: #{tpu_custom_call.1} parent=5 // pred_region
        %s293 = ssub.s32 %s21, 1
        %s294 = sand.u32 %s34, 1
        %s295 = scalar_lea.sflag [#allocation5], %s294
        %s296 = sand.u32 %s34, 1
        %s297 = smul.addr %s296, 256
        %s298 = scalar_lea.vmem [#allocation4], %s297
        // Predicated region
        $region49: #{tpu_custom_call.1} parent=47 // pred_check
          %p299 = pneg %p47
        $region50: #{tpu_custom_call.1} parent=47 // pred_check_branch
          %301 = sbr.rel (%p299) target = $region52
        $region51: #{tpu_custom_call.1} parent=47 // pred_region
          %302 = dma.done %s295, 4096
        $region52: #{tpu_custom_call.1} parent=47 // pred_fallthru
          _
        // Predicated region
        $region53: #{tpu_custom_call.1} parent=47 // pred_check
          %p303 = pneg %p68
        $region54: #{tpu_custom_call.1} parent=47 // pred_check_branch
          %305 = sbr.rel (%p303) target = $region56
        $region55: #{tpu_custom_call.1} parent=47 // pred_region
          %306 = dma.done [#allocation8], 1024
        $region56: #{tpu_custom_call.1} parent=47 // pred_fallthru
          _
        // Predicated region
        $region57: #{tpu_custom_call.1} parent=47 // pred_check
          %p307 = pneg %p110
        $region58: #{tpu_custom_call.1} parent=47 // pred_check_branch
          %309 = sbr.rel (%p307) target = $region60
        $region59: #{tpu_custom_call.1} parent=47 // pred_region
          %310 = dma.done [#allocation8], 9216
        $region60: #{tpu_custom_call.1} parent=47 // pred_fallthru
          _
        // Predicated region
        $region61: #{tpu_custom_call.1} parent=47 // pred_check
          %p311 = pneg %p152
        $region62: #{tpu_custom_call.1} parent=47 // pred_check_branch
          %313 = sbr.rel (%p311) target = $region64
        $region63: #{tpu_custom_call.1} parent=47 // pred_region
          %314 = dma.done [#allocation11], 1024
        $region64: #{tpu_custom_call.1} parent=47 // pred_fallthru
          _
        %s315 = sand.u32 %s34, 1
        %s316 = scalar_lea.sflag [#allocation5], %s315
        %s317 = sand.u32 %s34, 1
        %s318 = smul.addr %s317, 256
        %s319 = scalar_lea.vmem [#allocation4], %s318
        %p320 = pneg %p47
        %p321 = pneg %p44
        %p322 = pneg %p68
        %p323 = pneg %p65
        %p324 = pneg %p89
        %p325 = pneg %p86
        %p326 = pneg %p110
        %p327 = pneg %p107
        %p328 = pneg %p131
        %p329 = pneg %p128
        %p330 = pneg %p152
        %p331 = pneg %p149
        %p332 = pneg %p173
        %p333 = pneg %p170
        %p334 = pneg %p199
        %p335 = pneg %p196
        %s336 = sand.u32 %s186, 1
        %s337 = scalar_lea.sflag [#allocation6], %s336
        %s338 = sand.u32 %s186, 1
        %s339 = smul.addr %s338, 256
        %s340 = scalar_lea.vmem [#allocation12], %s339
        %v342 = vlaneseq
        %v343 = vand.u32 %v342, 127
        %vm344 = vcmp.lt.s32.totalorder %v343, 2
        %vm345 = vcmp.lt.s32.totalorder %v343, 8
        %v346 = vld [vmem:[%s298] sm:$0xff]
        %v347 = vld [vmem:[%s298 + $0x8] sm:$0xff]
        %v348 = vld [vmem:[%s298 + $0x10] sm:$0xff]
        %v349 = vld [vmem:[%s298 + $0x18] sm:$0xff]
        %v350 = vld [vmem:[%s298 + $0x20] sm:$0xff]
        %v351 = vld [vmem:[%s298 + $0x28] sm:$0xff]
        %v352 = vld [vmem:[%s298 + $0x30] sm:$0xff]
        %v353 = vld [vmem:[%s298 + $0x38] sm:$0xff]
        %v354 = vld [vmem:[%s298 + $0x40] sm:$0xff]
        %v355 = vld [vmem:[%s298 + $0x48] sm:$0xff]
        %v356 = vld [vmem:[%s298 + $0x50] sm:$0xff]
        %v357 = vld [vmem:[%s298 + $0x58] sm:$0xff]
        %v358 = vld [vmem:[%s298 + $0x60] sm:$0xff]
        %v359 = vld [vmem:[%s298 + $0x68] sm:$0xff]
        %v360 = vld [vmem:[%s298 + $0x70] sm:$0xff]
        %v361 = vld [vmem:[%s298 + $0x78] sm:$0xff]
        %v362 = vld [vmem:[%s298 + $0x80] sm:$0xff]
        %v363 = vld [vmem:[%s298 + $0x88] sm:$0xff]
        %v364 = vld [vmem:[%s298 + $0x90] sm:$0xff]
        %v365 = vld [vmem:[%s298 + $0x98] sm:$0xff]
        %v366 = vld [vmem:[%s298 + $0xa0] sm:$0xff]
        %v367 = vld [vmem:[%s298 + $0xa8] sm:$0xff]
        %v368 = vld [vmem:[%s298 + $0xb0] sm:$0xff]
        %v369 = vld [vmem:[%s298 + $0xb8] sm:$0xff]
        %v370 = vld [vmem:[%s298 + $0xc0] sm:$0xff]
        %v371 = vld [vmem:[%s298 + $0xc8] sm:$0xff]
        %v372 = vld [vmem:[%s298 + $0xd0] sm:$0xff]
        %v373 = vld [vmem:[%s298 + $0xd8] sm:$0xff]
        %v374 = vld [vmem:[%s298 + $0xe0] sm:$0xff]
        %v375 = vld [vmem:[%s298 + $0xe8] sm:$0xff]
        %v376 = vld [vmem:[%s298 + $0xf0] sm:$0xff]
        %v377 = vld [vmem:[%s298 + $0xf8] sm:$0xff]
        %v378 = vpack.c.bf16 %v347, %v346
        %v379 = vpack.c.bf16 %v349, %v348
        %v380 = vpack.c.bf16 %v351, %v350
        %v381 = vpack.c.bf16 %v353, %v352
        %v382 = vpack.c.bf16 %v355, %v354
        %v383 = vpack.c.bf16 %v357, %v356
        %v384 = vpack.c.bf16 %v359, %v358
        %v385 = vpack.c.bf16 %v361, %v360
        %v386 = vpack.c.bf16 %v363, %v362
        %v387 = vpack.c.bf16 %v365, %v364
        %v388 = vpack.c.bf16 %v367, %v366
        %v389 = vpack.c.bf16 %v369, %v368
        %v390 = vpack.c.bf16 %v371, %v370
        %v391 = vpack.c.bf16 %v373, %v372
        %v392 = vpack.c.bf16 %v375, %v374
        %v393 = vpack.c.bf16 %v377, %v376
        %v394 = vld [vmem:[#allocation7] sm:$0xf]
        %v395 = vld [vmem:[#allocation7 + $0x4] sm:$0xf]
        %v396 = vld [vmem:[#allocation7 + $0x8] sm:$0xf]
        %v397 = vld [vmem:[#allocation7 + $0xc] sm:$0xf]
        %v398 = vld [vmem:[#allocation7 + $0x10] sm:$0xf]
        %v399 = vld [vmem:[#allocation7 + $0x14] sm:$0xf]
        %v400 = vld [vmem:[#allocation7 + $0x18] sm:$0xf]
        %v401 = vld [vmem:[#allocation7 + $0x1c] sm:$0xf]
        %v402 = vld [vmem:[#allocation7 + $0x20] sm:$0xf]
        %v403 = vld [vmem:[#allocation7 + $0x24] sm:$0xf]
        %v404 = vld [vmem:[#allocation7 + $0x28] sm:$0xf]
        %v405 = vld [vmem:[#allocation7 + $0x2c] sm:$0xf]
        %v406 = vld [vmem:[#allocation7 + $0x30] sm:$0xf]
        %v407 = vld [vmem:[#allocation7 + $0x34] sm:$0xf]
        %v408 = vld [vmem:[#allocation7 + $0x38] sm:$0xf]
        %v409 = vld [vmem:[#allocation7 + $0x3c] sm:$0xf]
        %v410 = vld [vmem:[%s2] sm:$0x1]
        %v412 = vlaneseq
        %v413 = vshrl.u32 %v412, 7
        %v414 = vsub.s32 0, %v413
        %v415 = vrot.slane %v410, %v414
        %v433 = vunpack.c.l.b16 %v394
        %v434 = vunpack.c.l.b16 %v395
        %v435 = vunpack.c.l.b16 %v396
        %v436 = vunpack.c.l.b16 %v397
        %v437 = vunpack.c.l.b16 %v398
        %v438 = vunpack.c.l.b16 %v399
        %v439 = vunpack.c.l.b16 %v400
        %v440 = vunpack.c.l.b16 %v401
        %v441 = vunpack.c.l.b16 %v402
        %v442 = vunpack.c.l.b16 %v403
        %v443 = vunpack.c.l.b16 %v404
        %v444 = vunpack.c.l.b16 %v405
        %v445 = vunpack.c.l.b16 %v406
        %v446 = vunpack.c.l.b16 %v407
        %v447 = vunpack.c.l.b16 %v408
        %v448 = vunpack.c.l.b16 %v409
        %v449 = vpack.c.b16 %v434, %v433
        %v450 = vpack.c.b16 %v436, %v435
        %v451 = vpack.c.b16 %v438, %v437
        %v452 = vpack.c.b16 %v440, %v439
        %v453 = vpack.c.b16 %v442, %v441
        %v454 = vpack.c.b16 %v444, %v443
        %v455 = vpack.c.b16 %v446, %v445
        %v456 = vpack.c.b16 %v448, %v447
        %465 = vmatprep.subr.bf16.mxu0 0
        %466 = vmatpush1.bf16.msra.mxu0 %v449
        %467 = vmatprep.subr.bf16.mxu0 0
        %468 = vmatpush1.bf16.msra.mxu0 %v450
        %469 = vmatprep.subr.bf16.mxu0 0
        %470 = vmatpush1.bf16.msra.mxu0 %v451
        %471 = vmatprep.subr.bf16.mxu0 0
        %472 = vmatpush1.bf16.msra.mxu0 %v452
        %473 = vmatprep.subr.bf16.mxu0 0
        %474 = vmatpush1.bf16.msra.mxu0 %v453
        %475 = vmatprep.subr.bf16.mxu0 0
        %476 = vmatpush1.bf16.msra.mxu0 %v454
        %477 = vmatprep.subr.bf16.mxu0 0
        %478 = vmatpush1.bf16.msra.mxu0 %v455
        %479 = vmatprep.subr.bf16.mxu0 0
        %480 = vmatpush1.bf16.msra.mxu0 %v456
        %481 = vmatprep.subr.bf16.mxu0 0
        %482 = vmatpush1.bf16.msra.mxu0 0
        %483 = vmatprep.subr.bf16.mxu0 0
        %484 = vmatpush1.bf16.msra.mxu0 0
        %485 = vmatprep.subr.bf16.mxu0 0
        %486 = vmatpush1.bf16.msra.mxu0 0
        %487 = vmatprep.subr.bf16.mxu0 0
        %488 = vmatpush1.bf16.msra.mxu0 0
        %489 = vmatprep.subr.bf16.mxu0 0
        %490 = vmatpush1.bf16.msra.mxu0 0
        %491 = vmatprep.subr.bf16.mxu0 0
        %492 = vmatpush1.bf16.msra.mxu0 0
        %493 = vmatprep.subr.bf16.mxu0 0
        %494 = vmatpush1.bf16.msra.mxu0 0
        %495 = vmatprep.subr.bf16.mxu0 0
        %496 = vmatpush1.bf16.msra.mxu0 0
        %497 = vmatprep.mubr.bf16.mxu0 0
        %498 = vmatmul.mubr.bf16.gmra.mrb[0].mxu0 %v378
        %v499 = vpop.f32.mrb[0].mxu0
        %v500 = vadd.f32 %v415, %v499
        %v501 = vpop.f32.mrb[0].mxu0
        %v502 = vpop.f32.mrb[0].mxu0
        %v503 = vadd.f32 %v415, %v502
        %v504 = vpop.f32.mrb[0].mxu0
        %505 = vmatprep.mubr.bf16.mxu0 0
        %506 = vmatmul.mubr.bf16.gmra.mrb[0].mxu0 %v379
        %v507 = vpop.f32.mrb[0].mxu0
        %v508 = vadd.f32 %v415, %v507
        %v509 = vpop.f32.mrb[0].mxu0
        %v510 = vpop.f32.mrb[0].mxu0
        %v511 = vadd.f32 %v415, %v510
        %v512 = vpop.f32.mrb[0].mxu0
        %513 = vmatprep.mubr.bf16.mxu0 0
        %514 = vmatmul.mubr.bf16.gmra.mrb[0].mxu0 %v380
        %v515 = vpop.f32.mrb[0].mxu0
        %v516 = vadd.f32 %v415, %v515
        %v517 = vpop.f32.mrb[0].mxu0
        %v518 = vpop.f32.mrb[0].mxu0
        %v519 = vadd.f32 %v415, %v518
        %v520 = vpop.f32.mrb[0].mxu0
        %521 = vmatprep.mubr.bf16.mxu0 0
        %522 = vmatmul.mubr.bf16.gmra.mrb[0].mxu0 %v381
        %v523 = vpop.f32.mrb[0].mxu0
        %v524 = vadd.f32 %v415, %v523
        %v525 = vpop.f32.mrb[0].mxu0
        %v526 = vpop.f32.mrb[0].mxu0
        %v527 = vadd.f32 %v415, %v526
        %v528 = vpop.f32.mrb[0].mxu0
        %529 = vmatprep.mubr.bf16.mxu0 0
        %530 = vmatmul.mubr.bf16.gmra.mrb[0].mxu0 %v382
        %v531 = vpop.f32.mrb[0].mxu0
        %v532 = vadd.f32 %v415, %v531
        %v533 = vpop.f32.mrb[0].mxu0
        %v534 = vpop.f32.mrb[0].mxu0
        %v535 = vadd.f32 %v415, %v534
        %v536 = vpop.f32.mrb[0].mxu0
        %537 = vmatprep.mubr.bf16.mxu0 0
        %538 = vmatmul.mubr.bf16.gmra.mrb[0].mxu0 %v383
        %v539 = vpop.f32.mrb[0].mxu0
        %v540 = vadd.f32 %v415, %v539
        %v541 = vpop.f32.mrb[0].mxu0
        %v542 = vpop.f32.mrb[0].mxu0
        %v543 = vadd.f32 %v415, %v542
        %v544 = vpop.f32.mrb[0].mxu0
        %545 = vmatprep.mubr.bf16.mxu0 0
        %546 = vmatmul.mubr.bf16.gmra.mrb[0].mxu0 %v384
        %v547 = vpop.f32.mrb[0].mxu0
        %v548 = vadd.f32 %v415, %v547
        %v549 = vpop.f32.mrb[0].mxu0
        %v550 = vpop.f32.mrb[0].mxu0
        %v551 = vadd.f32 %v415, %v550
        %v552 = vpop.f32.mrb[0].mxu0
        %553 = vmatprep.mubr.bf16.mxu0 0
        %554 = vmatmul.mubr.bf16.gmra.mrb[0].mxu0 %v385
        %v555 = vpop.f32.mrb[0].mxu0
        %v556 = vadd.f32 %v415, %v555
        %v557 = vpop.f32.mrb[0].mxu0
        %v558 = vpop.f32.mrb[0].mxu0
        %v559 = vadd.f32 %v415, %v558
        %v560 = vpop.f32.mrb[0].mxu0
        %561 = vmatprep.mubr.bf16.mxu0 0
        %562 = vmatmul.mubr.bf16.gmra.mrb[0].mxu0 %v386
        %v563 = vpop.f32.mrb[0].mxu0
        %v564 = vadd.f32 %v415, %v563
        %v565 = vpop.f32.mrb[0].mxu0
        %v566 = vpop.f32.mrb[0].mxu0
        %v567 = vadd.f32 %v415, %v566
        %v568 = vpop.f32.mrb[0].mxu0
        %569 = vmatprep.mubr.bf16.mxu0 0
        %570 = vmatmul.mubr.bf16.gmra.mrb[0].mxu0 %v387
        %v571 = vpop.f32.mrb[0].mxu0
        %v572 = vadd.f32 %v415, %v571
        %v573 = vpop.f32.mrb[0].mxu0
        %v574 = vpop.f32.mrb[0].mxu0
        %v575 = vadd.f32 %v415, %v574
        %v576 = vpop.f32.mrb[0].mxu0
        %577 = vmatprep.mubr.bf16.mxu0 0
        %578 = vmatmul.mubr.bf16.gmra.mrb[0].mxu0 %v388
        %v579 = vpop.f32.mrb[0].mxu0
        %v580 = vadd.f32 %v415, %v579
        %v581 = vpop.f32.mrb[0].mxu0
        %v582 = vpop.f32.mrb[0].mxu0
        %v583 = vadd.f32 %v415, %v582
        %v584 = vpop.f32.mrb[0].mxu0
        %585 = vmatprep.mubr.bf16.mxu0 0
        %586 = vmatmul.mubr.bf16.gmra.mrb[0].mxu0 %v389
        %v587 = vpop.f32.mrb[0].mxu0
        %v588 = vadd.f32 %v415, %v587
        %v589 = vpop.f32.mrb[0].mxu0
        %v590 = vpop.f32.mrb[0].mxu0
        %v591 = vadd.f32 %v415, %v590
        %v592 = vpop.f32.mrb[0].mxu0
        %593 = vmatprep.mubr.bf16.mxu0 0
        %594 = vmatmul.mubr.bf16.gmra.mrb[0].mxu0 %v390
        %v595 = vpop.f32.mrb[0].mxu0
        %v596 = vadd.f32 %v415, %v595
        %v597 = vpop.f32.mrb[0].mxu0
        %v598 = vpop.f32.mrb[0].mxu0
        %v599 = vadd.f32 %v415, %v598
        %v600 = vpop.f32.mrb[0].mxu0
        %601 = vmatprep.mubr.bf16.mxu0 0
        %602 = vmatmul.mubr.bf16.gmra.mrb[0].mxu0 %v391
        %v603 = vpop.f32.mrb[0].mxu0
        %v604 = vadd.f32 %v415, %v603
        %v605 = vpop.f32.mrb[0].mxu0
        %v606 = vpop.f32.mrb[0].mxu0
        %v607 = vadd.f32 %v415, %v606
        %v608 = vpop.f32.mrb[0].mxu0
        %609 = vmatprep.mubr.bf16.mxu0 0
        %610 = vmatmul.mubr.bf16.gmra.mrb[0].mxu0 %v392
        %v611 = vpop.f32.mrb[0].mxu0
        %v612 = vadd.f32 %v415, %v611
        %v613 = vpop.f32.mrb[0].mxu0
        %v614 = vpop.f32.mrb[0].mxu0
        %v615 = vadd.f32 %v415, %v614
        %v616 = vpop.f32.mrb[0].mxu0
        %617 = vmatprep.mubr.bf16.mxu0 0
        %618 = vmatmul.mubr.bf16.gmra.mrb[0].mxu0 %v393
        %v619 = vpop.f32.mrb[0].mxu0
        %v620 = vadd.f32 %v415, %v619
        %v621 = vpop.f32.mrb[0].mxu0
        %v622 = vpop.f32.mrb[0].mxu0
        %v623 = vadd.f32 %v415, %v622
        %v624 = vpop.f32.mrb[0].mxu0
        %625 = vdwg.mxu0
        %v626 = vmax.f32 %v500, 0.0
        %v627 = vmax.f32 %v503, 0.0
        %v628 = vmax.f32 %v508, 0.0
        %v629 = vmax.f32 %v511, 0.0
        %v630 = vmax.f32 %v516, 0.0
        %v631 = vmax.f32 %v519, 0.0
        %v632 = vmax.f32 %v524, 0.0
        %v633 = vmax.f32 %v527, 0.0
        %v634 = vmax.f32 %v532, 0.0
        %v635 = vmax.f32 %v535, 0.0
        %v636 = vmax.f32 %v540, 0.0
        %v637 = vmax.f32 %v543, 0.0
        %v638 = vmax.f32 %v548, 0.0
        %v639 = vmax.f32 %v551, 0.0
        %v640 = vmax.f32 %v556, 0.0
        %v641 = vmax.f32 %v559, 0.0
        %v642 = vmax.f32 %v564, 0.0
        %v643 = vmax.f32 %v567, 0.0
        %v644 = vmax.f32 %v572, 0.0
        %v645 = vmax.f32 %v575, 0.0
        %v646 = vmax.f32 %v580, 0.0
        %v647 = vmax.f32 %v583, 0.0
        %v648 = vmax.f32 %v588, 0.0
        %v649 = vmax.f32 %v591, 0.0
        %v650 = vmax.f32 %v596, 0.0
        %v651 = vmax.f32 %v599, 0.0
        %v652 = vmax.f32 %v604, 0.0
        %v653 = vmax.f32 %v607, 0.0
        %v654 = vmax.f32 %v612, 0.0
        %v655 = vmax.f32 %v615, 0.0
        %v656 = vmax.f32 %v620, 0.0
        %v657 = vmax.f32 %v623, 0.0
        %v658 = vmin.f32 %v500, 0.0
        %v659 = vmin.f32 %v503, 0.0
        %v660 = vmin.f32 %v508, 0.0
        %v661 = vmin.f32 %v511, 0.0
        %v662 = vmin.f32 %v516, 0.0
        %v663 = vmin.f32 %v519, 0.0
        %v664 = vmin.f32 %v524, 0.0
        %v665 = vmin.f32 %v527, 0.0
        %v666 = vmin.f32 %v532, 0.0
        %v667 = vmin.f32 %v535, 0.0
        %v668 = vmin.f32 %v540, 0.0
        %v669 = vmin.f32 %v543, 0.0
        %v670 = vmin.f32 %v548, 0.0
        %v671 = vmin.f32 %v551, 0.0
        %v672 = vmin.f32 %v556, 0.0
        %v673 = vmin.f32 %v559, 0.0
        %v674 = vmin.f32 %v564, 0.0
        %v675 = vmin.f32 %v567, 0.0
        %v676 = vmin.f32 %v572, 0.0
        %v677 = vmin.f32 %v575, 0.0
        %v678 = vmin.f32 %v580, 0.0
        %v679 = vmin.f32 %v583, 0.0
        %v680 = vmin.f32 %v588, 0.0
        %v681 = vmin.f32 %v591, 0.0
        %v682 = vmin.f32 %v596, 0.0
        %v683 = vmin.f32 %v599, 0.0
        %v684 = vmin.f32 %v604, 0.0
        %v685 = vmin.f32 %v607, 0.0
        %v686 = vmin.f32 %v612, 0.0
        %v687 = vmin.f32 %v615, 0.0
        %v688 = vmin.f32 %v620, 0.0
        %v689 = vmin.f32 %v623, 0.0
        %v690 = vsel %vm344, %v626, %v658
        %v691 = vsel %vm344, %v627, %v659
        %v692 = vsel %vm344, %v628, %v660
        %v693 = vsel %vm344, %v629, %v661
        %v694 = vsel %vm344, %v630, %v662
        %v695 = vsel %vm344, %v631, %v663
        %v696 = vsel %vm344, %v632, %v664
        %v697 = vsel %vm344, %v633, %v665
        %v698 = vsel %vm344, %v634, %v666
        %v699 = vsel %vm344, %v635, %v667
        %v700 = vsel %vm344, %v636, %v668
        %v701 = vsel %vm344, %v637, %v669
        %v702 = vsel %vm344, %v638, %v670
        %v703 = vsel %vm344, %v639, %v671
        %v704 = vsel %vm344, %v640, %v672
        %v705 = vsel %vm344, %v641, %v673
        %v706 = vsel %vm344, %v642, %v674
        %v707 = vsel %vm344, %v643, %v675
        %v708 = vsel %vm344, %v644, %v676
        %v709 = vsel %vm344, %v645, %v677
        %v710 = vsel %vm344, %v646, %v678
        %v711 = vsel %vm344, %v647, %v679
        %v712 = vsel %vm344, %v648, %v680
        %v713 = vsel %vm344, %v649, %v681
        %v714 = vsel %vm344, %v650, %v682
        %v715 = vsel %vm344, %v651, %v683
        %v716 = vsel %vm344, %v652, %v684
        %v717 = vsel %vm344, %v653, %v685
        %v718 = vsel %vm344, %v654, %v686
        %v719 = vsel %vm344, %v655, %v687
        %v720 = vsel %vm344, %v656, %v688
        %v721 = vsel %vm344, %v657, %v689
        %v722 = vpack.c.bf16 %v691, %v690
        %v723 = vpack.c.bf16 %v693, %v692
        %v724 = vpack.c.bf16 %v695, %v694
        %v725 = vpack.c.bf16 %v697, %v696
        %v726 = vpack.c.bf16 %v699, %v698
        %v727 = vpack.c.bf16 %v701, %v700
        %v728 = vpack.c.bf16 %v703, %v702
        %v729 = vpack.c.bf16 %v705, %v704
        %v730 = vpack.c.bf16 %v707, %v706
        %v731 = vpack.c.bf16 %v709, %v708
        %v732 = vpack.c.bf16 %v711, %v710
        %v733 = vpack.c.bf16 %v713, %v712
        %v734 = vpack.c.bf16 %v715, %v714
        %v735 = vpack.c.bf16 %v717, %v716
        %v736 = vpack.c.bf16 %v719, %v718
        %v737 = vpack.c.bf16 %v721, %v720
        %738 = vst [vmem:[#allocation2] sm:$0xf] 0
        %739 = vst [vmem:[#allocation2 + $0x4] sm:$0xf] 0
        %740 = vst [vmem:[#allocation2 + $0x8] sm:$0x1] 0
        %s741 = scalar_lea.vmem [#allocation2], 204
        %742 = vst [vmem:[%s741] sm:$0xf] 0
        %743 = vst [vmem:[%s741 + $0x4] sm:$0xf] 0
        %744 = vst [vmem:[%s741 + $0x8] sm:$0x1] 0
        %vm745 = vcmask 1040384
        %vm746 = vsmask.f32 256
        %vm747 = vmand %vm745, %vm746
        %v748 = vld [vmem:[#allocation2] sm:$0x1]
        %v749 = vsel %vm747, 0, %v748
        %750 = vst [vmem:[#allocation2] sm:$0x1] %v749
        %v751 = vld [vmem:[#allocation2 + $0xc] sm:$0x1]
        %v752 = vsel %vm747, 0, %v751
        %753 = vst [vmem:[#allocation2 + $0xc] sm:$0x1] %v752
        %v754 = vld [vmem:[#allocation2 + $0x18] sm:$0x1]
        %v755 = vsel %vm747, 0, %v754
        %756 = vst [vmem:[#allocation2 + $0x18] sm:$0x1] %v755
        %v757 = vld [vmem:[#allocation2 + $0x24] sm:$0x1]
        %v758 = vsel %vm747, 0, %v757
        %759 = vst [vmem:[#allocation2 + $0x24] sm:$0x1] %v758
        %v760 = vld [vmem:[#allocation2 + $0x30] sm:$0x1]
        %v761 = vsel %vm747, 0, %v760
        %762 = vst [vmem:[#allocation2 + $0x30] sm:$0x1] %v761
        %v763 = vld [vmem:[#allocation2 + $0x3c] sm:$0x1]
        %v764 = vsel %vm747, 0, %v763
        %765 = vst [vmem:[#allocation2 + $0x3c] sm:$0x1] %v764
        %v766 = vld [vmem:[#allocation2 + $0x48] sm:$0x1]
        %v767 = vsel %vm747, 0, %v766
        %768 = vst [vmem:[#allocation2 + $0x48] sm:$0x1] %v767
        %v769 = vld [vmem:[#allocation2 + $0x54] sm:$0x1]
        %v770 = vsel %vm747, 0, %v769
        %771 = vst [vmem:[#allocation2 + $0x54] sm:$0x1] %v770
        %v772 = vld [vmem:[#allocation2 + $0x60] sm:$0x1]
        %v773 = vsel %vm747, 0, %v772
        %774 = vst [vmem:[#allocation2 + $0x60] sm:$0x1] %v773
        %v775 = vld [vmem:[#allocation2 + $0x6c] sm:$0x1]
        %v776 = vsel %vm747, 0, %v775
        %777 = vst [vmem:[#allocation2 + $0x6c] sm:$0x1] %v776
        %v778 = vld [vmem:[#allocation2 + $0x78] sm:$0x1]
        %v779 = vsel %vm747, 0, %v778
        %780 = vst [vmem:[#allocation2 + $0x78] sm:$0x1] %v779
        %v781 = vld [vmem:[#allocation2 + $0x84] sm:$0x1]
        %v782 = vsel %vm747, 0, %v781
        %783 = vst [vmem:[#allocation2 + $0x84] sm:$0x1] %v782
        %v784 = vld [vmem:[#allocation2 + $0x90] sm:$0x1]
        %v785 = vsel %vm747, 0, %v784
        %786 = vst [vmem:[#allocation2 + $0x90] sm:$0x1] %v785
        %v787 = vld [vmem:[#allocation2 + $0x9c] sm:$0x1]
        %v788 = vsel %vm747, 0, %v787
        %789 = vst [vmem:[#allocation2 + $0x9c] sm:$0x1] %v788
        %v790 = vld [vmem:[#allocation2 + $0xa8] sm:$0x1]
        %v791 = vsel %vm747, 0, %v790
        %792 = vst [vmem:[#allocation2 + $0xa8] sm:$0x1] %v791
        %v793 = vld [vmem:[#allocation2 + $0xb4] sm:$0x1]
        %v794 = vsel %vm747, 0, %v793
        %795 = vst [vmem:[#allocation2 + $0xb4] sm:$0x1] %v794
        %v796 = vld [vmem:[#allocation2 + $0xc0] sm:$0x1]
        %v797 = vsel %vm747, 0, %v796
        %798 = vst [vmem:[#allocation2 + $0xc0] sm:$0x1] %v797
        %v799 = vld [vmem:[#allocation2 + $0xcc] sm:$0x1]
        %v800 = vsel %vm747, 0, %v799
        %801 = vst [vmem:[#allocation2 + $0xcc] sm:$0x1] %v800
        %vm802 = vsmask.f32 7938
        %vm803 = vmand %vm745, %vm802
        %v804 = vld [vmem:[#allocation2 + $0x8] sm:$0x1]
        %v805 = vsel %vm803, 0, %v804
        %806 = vst [vmem:[#allocation2 + $0x8] sm:$0x1] %v805
        %v807 = vld [vmem:[#allocation2 + $0x14] sm:$0x1]
        %v808 = vsel %vm803, 0, %v807
        %809 = vst [vmem:[#allocation2 + $0x14] sm:$0x1] %v808
        %v810 = vld [vmem:[#allocation2 + $0x20] sm:$0x1]
        %v811 = vsel %vm803, 0, %v810
        %812 = vst [vmem:[#allocation2 + $0x20] sm:$0x1] %v811
        %v813 = vld [vmem:[#allocation2 + $0x2c] sm:$0x1]
        %v814 = vsel %vm803, 0, %v813
        %815 = vst [vmem:[#allocation2 + $0x2c] sm:$0x1] %v814
        %v816 = vld [vmem:[#allocation2 + $0x38] sm:$0x1]
        %v817 = vsel %vm803, 0, %v816
        %818 = vst [vmem:[#allocation2 + $0x38] sm:$0x1] %v817
        %v819 = vld [vmem:[#allocation2 + $0x44] sm:$0x1]
        %v820 = vsel %vm803, 0, %v819
        %821 = vst [vmem:[#allocation2 + $0x44] sm:$0x1] %v820
        %v822 = vld [vmem:[#allocation2 + $0x50] sm:$0x1]
        %v823 = vsel %vm803, 0, %v822
        %824 = vst [vmem:[#allocation2 + $0x50] sm:$0x1] %v823
        %v825 = vld [vmem:[#allocation2 + $0x5c] sm:$0x1]
        %v826 = vsel %vm803, 0, %v825
        %827 = vst [vmem:[#allocation2 + $0x5c] sm:$0x1] %v826
        %v828 = vld [vmem:[#allocation2 + $0x68] sm:$0x1]
        %v829 = vsel %vm803, 0, %v828
        %830 = vst [vmem:[#allocation2 + $0x68] sm:$0x1] %v829
        %v831 = vld [vmem:[#allocation2 + $0x74] sm:$0x1]
        %v832 = vsel %vm803, 0, %v831
        %833 = vst [vmem:[#allocation2 + $0x74] sm:$0x1] %v832
        %v834 = vld [vmem:[#allocation2 + $0x80] sm:$0x1]
        %v835 = vsel %vm803, 0, %v834
        %836 = vst [vmem:[#allocation2 + $0x80] sm:$0x1] %v835
        %v837 = vld [vmem:[#allocation2 + $0x8c] sm:$0x1]
        %v838 = vsel %vm803, 0, %v837
        %839 = vst [vmem:[#allocation2 + $0x8c] sm:$0x1] %v838
        %v840 = vld [vmem:[#allocation2 + $0x98] sm:$0x1]
        %v841 = vsel %vm803, 0, %v840
        %842 = vst [vmem:[#allocation2 + $0x98] sm:$0x1] %v841
        %v843 = vld [vmem:[#allocation2 + $0xa4] sm:$0x1]
        %v844 = vsel %vm803, 0, %v843
        %845 = vst [vmem:[#allocation2 + $0xa4] sm:$0x1] %v844
        %v846 = vld [vmem:[#allocation2 + $0xb0] sm:$0x1]
        %v847 = vsel %vm803, 0, %v846
        %848 = vst [vmem:[#allocation2 + $0xb0] sm:$0x1] %v847
        %v849 = vld [vmem:[#allocation2 + $0xbc] sm:$0x1]
        %v850 = vsel %vm803, 0, %v849
        %851 = vst [vmem:[#allocation2 + $0xbc] sm:$0x1] %v850
        %v852 = vld [vmem:[#allocation2 + $0xc8] sm:$0x1]
        %v853 = vsel %vm803, 0, %v852
        %854 = vst [vmem:[#allocation2 + $0xc8] sm:$0x1] %v853
        %v855 = vld [vmem:[#allocation2 + $0xd4] sm:$0x1]
        %v856 = vsel %vm803, 0, %v855
        %857 = vst [vmem:[#allocation2 + $0xd4] sm:$0x1] %v856
        %v874 = vunpack.c.l.b16 %v722
        %v875 = vunpack.c.h.b16 %v722
        %v876 = vunpack.c.l.b16 %v723
        %v877 = vunpack.c.h.b16 %v723
        %v878 = vunpack.c.l.b16 %v724
        %v879 = vunpack.c.h.b16 %v724
        %v880 = vunpack.c.l.b16 %v725
        %v881 = vunpack.c.h.b16 %v725
        %v882 = vunpack.c.l.b16 %v726
        %v883 = vunpack.c.h.b16 %v726
        %v884 = vunpack.c.l.b16 %v727
        %v885 = vunpack.c.h.b16 %v727
        %v886 = vunpack.c.l.b16 %v728
        %v887 = vunpack.c.h.b16 %v728
        %v888 = vunpack.c.l.b16 %v729
        %v889 = vunpack.c.h.b16 %v729
        %v890 = vunpack.c.l.b16 %v730
        %v891 = vunpack.c.h.b16 %v730
        %v892 = vunpack.c.l.b16 %v731
        %v893 = vunpack.c.h.b16 %v731
        %v894 = vunpack.c.l.b16 %v732
        %v895 = vunpack.c.h.b16 %v732
        %v896 = vunpack.c.l.b16 %v733
        %v897 = vunpack.c.h.b16 %v733
        %v898 = vunpack.c.l.b16 %v734
        %v899 = vunpack.c.h.b16 %v734
        %v900 = vunpack.c.l.b16 %v735
        %v901 = vunpack.c.h.b16 %v735
        %v902 = vunpack.c.l.b16 %v736
        %v903 = vunpack.c.h.b16 %v736
        %v904 = vunpack.c.l.b16 %v737
        %v905 = vunpack.c.h.b16 %v737
        %v906 = vpack.c.b16 %v874, %v874
        %v907 = vpack.c.b16 %v875, %v875
        %v908 = vpack.c.b16 %v876, %v876
        %v909 = vpack.c.b16 %v877, %v877
        %v910 = vpack.c.b16 %v878, %v878
        %v911 = vpack.c.b16 %v879, %v879
        %v912 = vpack.c.b16 %v880, %v880
        %v913 = vpack.c.b16 %v881, %v881
        %v914 = vpack.c.b16 %v882, %v882
        %v915 = vpack.c.b16 %v883, %v883
        %v916 = vpack.c.b16 %v884, %v884
        %v917 = vpack.c.b16 %v885, %v885
        %v918 = vpack.c.b16 %v886, %v886
        %v919 = vpack.c.b16 %v887, %v887
        %v920 = vpack.c.b16 %v888, %v888
        %v921 = vpack.c.b16 %v889, %v889
        %v922 = vpack.c.b16 %v890, %v890
        %v923 = vpack.c.b16 %v891, %v891
        %v924 = vpack.c.b16 %v892, %v892
        %v925 = vpack.c.b16 %v893, %v893
        %v926 = vpack.c.b16 %v894, %v894
        %v927 = vpack.c.b16 %v895, %v895
        %v928 = vpack.c.b16 %v896, %v896
        %v929 = vpack.c.b16 %v897, %v897
        %v930 = vpack.c.b16 %v898, %v898
        %v931 = vpack.c.b16 %v899, %v899
        %v932 = vpack.c.b16 %v900, %v900
        %v933 = vpack.c.b16 %v901, %v901
        %v934 = vpack.c.b16 %v902, %v902
        %v935 = vpack.c.b16 %v903, %v903
        %v936 = vpack.c.b16 %v904, %v904
        %v937 = vpack.c.b16 %v905, %v905
        %vm938 = vsmask.f32 4368
        %vm939 = vmor %vm746, %vm938
        %v941 = vshrl.u32 %v906, 16
        %v943 = vrot.slane %v941, 7
        %v944 = vshll.u32 %v906, 16
        %v946 = vor.u32 %v943, %v944
        %v947 = vrot.slane %v943, 4
        %v949 = vshrl.u32 %v907, 16
        %v951 = vrot.slane %v949, 7
        %v952 = vshll.u32 %v907, 16
        %v954 = vor.u32 %v951, %v952
        %v955 = vsel %vm939, %v947, %v954
        %v956 = vrot.slane %v951, 4
        %v958 = vshrl.u32 %v908, 16
        %v960 = vrot.slane %v958, 7
        %v961 = vshll.u32 %v908, 16
        %v963 = vor.u32 %v960, %v961
        %v964 = vrot.slane %v960, 4
        %v966 = vshrl.u32 %v909, 16
        %v968 = vrot.slane %v966, 7
        %v969 = vshll.u32 %v909, 16
        %v971 = vor.u32 %v968, %v969
        %v972 = vsel %vm939, %v964, %v971
        %v973 = vrot.slane %v968, 4
        %v975 = vshrl.u32 %v910, 16
        %v977 = vrot.slane %v975, 7
        %v978 = vshll.u32 %v910, 16
        %v980 = vor.u32 %v977, %v978
        %v981 = vrot.slane %v977, 4
        %v983 = vshrl.u32 %v911, 16
        %v985 = vrot.slane %v983, 7
        %v986 = vshll.u32 %v911, 16
        %v988 = vor.u32 %v985, %v986
        %v989 = vsel %vm939, %v981, %v988
        %v990 = vrot.slane %v985, 4
        %v992 = vshrl.u32 %v912, 16
        %v994 = vrot.slane %v992, 7
        %v995 = vshll.u32 %v912, 16
        %v997 = vor.u32 %v994, %v995
        %v998 = vrot.slane %v994, 4
        %v1000 = vshrl.u32 %v913, 16
        %v1002 = vrot.slane %v1000, 7
        %v1003 = vshll.u32 %v913, 16
        %v1005 = vor.u32 %v1002, %v1003
        %v1006 = vsel %vm939, %v998, %v1005
        %v1007 = vrot.slane %v1002, 4
        %v1009 = vshrl.u32 %v914, 16
        %v1011 = vrot.slane %v1009, 7
        %v1012 = vshll.u32 %v914, 16
        %v1014 = vor.u32 %v1011, %v1012
        %v1015 = vrot.slane %v1011, 4
        %v1017 = vshrl.u32 %v915, 16
        %v1019 = vrot.slane %v1017, 7
        %v1020 = vshll.u32 %v915, 16
        %v1022 = vor.u32 %v1019, %v1020
        %v1023 = vsel %vm939, %v1015, %v1022
        %v1024 = vrot.slane %v1019, 4
        %v1026 = vshrl.u32 %v916, 16
        %v1028 = vrot.slane %v1026, 7
        %v1029 = vshll.u32 %v916, 16
        %v1031 = vor.u32 %v1028, %v1029
        %v1032 = vrot.slane %v1028, 4
        %v1034 = vshrl.u32 %v917, 16
        %v1036 = vrot.slane %v1034, 7
        %v1037 = vshll.u32 %v917, 16
        %v1039 = vor.u32 %v1036, %v1037
        %v1040 = vsel %vm939, %v1032, %v1039
        %v1041 = vrot.slane %v1036, 4
        %v1043 = vshrl.u32 %v918, 16
        %v1045 = vrot.slane %v1043, 7
        %v1046 = vshll.u32 %v918, 16
        %v1048 = vor.u32 %v1045, %v1046
        %v1049 = vrot.slane %v1045, 4
        %v1051 = vshrl.u32 %v919, 16
        %v1053 = vrot.slane %v1051, 7
        %v1054 = vshll.u32 %v919, 16
        %v1056 = vor.u32 %v1053, %v1054
        %v1057 = vsel %vm939, %v1049, %v1056
        %v1058 = vrot.slane %v1053, 4
        %v1060 = vshrl.u32 %v920, 16
        %v1062 = vrot.slane %v1060, 7
        %v1063 = vshll.u32 %v920, 16
        %v1065 = vor.u32 %v1062, %v1063
        %v1066 = vrot.slane %v1062, 4
        %v1068 = vshrl.u32 %v921, 16
        %v1070 = vrot.slane %v1068, 7
        %v1071 = vshll.u32 %v921, 16
        %v1073 = vor.u32 %v1070, %v1071
        %v1074 = vsel %vm939, %v1066, %v1073
        %v1075 = vrot.slane %v1070, 4
        %v1077 = vshrl.u32 %v922, 16
        %v1079 = vrot.slane %v1077, 7
        %v1080 = vshll.u32 %v922, 16
        %v1082 = vor.u32 %v1079, %v1080
        %v1083 = vrot.slane %v1079, 4
        %v1085 = vshrl.u32 %v923, 16
        %v1087 = vrot.slane %v1085, 7
        %v1088 = vshll.u32 %v923, 16
        %v1090 = vor.u32 %v1087, %v1088
        %v1091 = vsel %vm939, %v1083, %v1090
        %v1092 = vrot.slane %v1087, 4
        %v1094 = vshrl.u32 %v924, 16
        %v1096 = vrot.slane %v1094, 7
        %v1097 = vshll.u32 %v924, 16
        %v1099 = vor.u32 %v1096, %v1097
        %v1100 = vrot.slane %v1096, 4
        %v1102 = vshrl.u32 %v925, 16
        %v1104 = vrot.slane %v1102, 7
        %v1105 = vshll.u32 %v925, 16
        %v1107 = vor.u32 %v1104, %v1105
        %v1108 = vsel %vm939, %v1100, %v1107
        %v1109 = vrot.slane %v1104, 4
        %v1111 = vshrl.u32 %v926, 16
        %v1113 = vrot.slane %v1111, 7
        %v1114 = vshll.u32 %v926, 16
        %v1116 = vor.u32 %v1113, %v1114
        %v1117 = vrot.slane %v1113, 4
        %v1119 = vshrl.u32 %v927, 16
        %v1121 = vrot.slane %v1119, 7
        %v1122 = vshll.u32 %v927, 16
        %v1124 = vor.u32 %v1121, %v1122
        %v1125 = vsel %vm939, %v1117, %v1124
        %v1126 = vrot.slane %v1121, 4
        %v1128 = vshrl.u32 %v928, 16
        %v1130 = vrot.slane %v1128, 7
        %v1131 = vshll.u32 %v928, 16
        %v1133 = vor.u32 %v1130, %v1131
        %v1134 = vrot.slane %v1130, 4
        %v1136 = vshrl.u32 %v929, 16
        %v1138 = vrot.slane %v1136, 7
        %v1139 = vshll.u32 %v929, 16
        %v1141 = vor.u32 %v1138, %v1139
        %v1142 = vsel %vm939, %v1134, %v1141
        %v1143 = vrot.slane %v1138, 4
        %v1145 = vshrl.u32 %v930, 16
        %v1147 = vrot.slane %v1145, 7
        %v1148 = vshll.u32 %v930, 16
        %v1150 = vor.u32 %v1147, %v1148
        %v1151 = vrot.slane %v1147, 4
        %v1153 = vshrl.u32 %v931, 16
        %v1155 = vrot.slane %v1153, 7
        %v1156 = vshll.u32 %v931, 16
        %v1158 = vor.u32 %v1155, %v1156
        %v1159 = vsel %vm939, %v1151, %v1158
        %v1160 = vrot.slane %v1155, 4
        %v1162 = vshrl.u32 %v932, 16
        %v1164 = vrot.slane %v1162, 7
        %v1165 = vshll.u32 %v932, 16
        %v1167 = vor.u32 %v1164, %v1165
        %v1168 = vrot.slane %v1164, 4
        %v1170 = vshrl.u32 %v933, 16
        %v1172 = vrot.slane %v1170, 7
        %v1173 = vshll.u32 %v933, 16
        %v1175 = vor.u32 %v1172, %v1173
        %v1176 = vsel %vm939, %v1168, %v1175
        %v1177 = vrot.slane %v1172, 4
        %v1179 = vshrl.u32 %v934, 16
        %v1181 = vrot.slane %v1179, 7
        %v1182 = vshll.u32 %v934, 16
        %v1184 = vor.u32 %v1181, %v1182
        %v1185 = vrot.slane %v1181, 4
        %v1187 = vshrl.u32 %v935, 16
        %v1189 = vrot.slane %v1187, 7
        %v1190 = vshll.u32 %v935, 16
        %v1192 = vor.u32 %v1189, %v1190
        %v1193 = vsel %vm939, %v1185, %v1192
        %v1194 = vrot.slane %v1189, 4
        %v1196 = vshrl.u32 %v936, 16
        %v1198 = vrot.slane %v1196, 7
        %v1199 = vshll.u32 %v936, 16
        %v1201 = vor.u32 %v1198, %v1199
        %v1202 = vrot.slane %v1198, 4
        %v1204 = vshrl.u32 %v937, 16
        %v1206 = vrot.slane %v1204, 7
        %v1207 = vshll.u32 %v937, 16
        %v1209 = vor.u32 %v1206, %v1207
        %v1210 = vsel %vm939, %v1202, %v1209
        %v1211 = vrot.slane %v1206, 4
        %s1260 = scalar_lea.vmem [#allocation2], 12
        %vm1261 = vcmask 1043456
        %vm1262 = vmand %vm1261, %vm802
        %v1263 = vld [vmem:[%s1260] sm:$0xf]
        %v1264 = vsel %vm1262, %v946, %v1263
        %1265 = vst [vmem:[%s1260] sm:$0xf] %v1264
        %1266 = vst [vmem:[%s1260 + $0x4] sm:$0xf] %v955
        %v1267 = vld [vmem:[%s1260 + $0x8] sm:$0x1]
        %v1268 = vsel %vm747, %v956, %v1267
        %1269 = vst [vmem:[%s1260 + $0x8] sm:$0x1] %v1268
        %v1270 = vld [vmem:[%s1260 + $0xc] sm:$0xf]
        %v1271 = vsel %vm1262, %v963, %v1270
        %1272 = vst [vmem:[%s1260 + $0xc] sm:$0xf] %v1271
        %1273 = vst [vmem:[%s1260 + $0x10] sm:$0xf] %v972
        %v1274 = vld [vmem:[%s1260 + $0x14] sm:$0x1]
        %v1275 = vsel %vm747, %v973, %v1274
        %1276 = vst [vmem:[%s1260 + $0x14] sm:$0x1] %v1275
        %v1277 = vld [vmem:[%s1260 + $0x18] sm:$0xf]
        %v1278 = vsel %vm1262, %v980, %v1277
        %1279 = vst [vmem:[%s1260 + $0x18] sm:$0xf] %v1278
        %1280 = vst [vmem:[%s1260 + $0x1c] sm:$0xf] %v989
        %v1281 = vld [vmem:[%s1260 + $0x20] sm:$0x1]
        %v1282 = vsel %vm747, %v990, %v1281
        %1283 = vst [vmem:[%s1260 + $0x20] sm:$0x1] %v1282
        %v1284 = vld [vmem:[%s1260 + $0x24] sm:$0xf]
        %v1285 = vsel %vm1262, %v997, %v1284
        %1286 = vst [vmem:[%s1260 + $0x24] sm:$0xf] %v1285
        %1287 = vst [vmem:[%s1260 + $0x28] sm:$0xf] %v1006
        %v1288 = vld [vmem:[%s1260 + $0x2c] sm:$0x1]
        %v1289 = vsel %vm747, %v1007, %v1288
        %1290 = vst [vmem:[%s1260 + $0x2c] sm:$0x1] %v1289
        %v1291 = vld [vmem:[%s1260 + $0x30] sm:$0xf]
        %v1292 = vsel %vm1262, %v1014, %v1291
        %1293 = vst [vmem:[%s1260 + $0x30] sm:$0xf] %v1292
        %1294 = vst [vmem:[%s1260 + $0x34] sm:$0xf] %v1023
        %v1295 = vld [vmem:[%s1260 + $0x38] sm:$0x1]
        %v1296 = vsel %vm747, %v1024, %v1295
        %1297 = vst [vmem:[%s1260 + $0x38] sm:$0x1] %v1296
        %v1298 = vld [vmem:[%s1260 + $0x3c] sm:$0xf]
        %v1299 = vsel %vm1262, %v1031, %v1298
        %1300 = vst [vmem:[%s1260 + $0x3c] sm:$0xf] %v1299
        %1301 = vst [vmem:[%s1260 + $0x40] sm:$0xf] %v1040
        %v1302 = vld [vmem:[%s1260 + $0x44] sm:$0x1]
        %v1303 = vsel %vm747, %v1041, %v1302
        %1304 = vst [vmem:[%s1260 + $0x44] sm:$0x1] %v1303
        %v1305 = vld [vmem:[%s1260 + $0x48] sm:$0xf]
        %v1306 = vsel %vm1262, %v1048, %v1305
        %1307 = vst [vmem:[%s1260 + $0x48] sm:$0xf] %v1306
        %1308 = vst [vmem:[%s1260 + $0x4c] sm:$0xf] %v1057
        %v1309 = vld [vmem:[%s1260 + $0x50] sm:$0x1]
        %v1310 = vsel %vm747, %v1058, %v1309
        %1311 = vst [vmem:[%s1260 + $0x50] sm:$0x1] %v1310
        %v1312 = vld [vmem:[%s1260 + $0x54] sm:$0xf]
        %v1313 = vsel %vm1262, %v1065, %v1312
        %1314 = vst [vmem:[%s1260 + $0x54] sm:$0xf] %v1313
        %1315 = vst [vmem:[%s1260 + $0x58] sm:$0xf] %v1074
        %v1316 = vld [vmem:[%s1260 + $0x5c] sm:$0x1]
        %v1317 = vsel %vm747, %v1075, %v1316
        %1318 = vst [vmem:[%s1260 + $0x5c] sm:$0x1] %v1317
        %v1319 = vld [vmem:[%s1260 + $0x60] sm:$0xf]
        %v1320 = vsel %vm1262, %v1082, %v1319
        %1321 = vst [vmem:[%s1260 + $0x60] sm:$0xf] %v1320
        %1322 = vst [vmem:[%s1260 + $0x64] sm:$0xf] %v1091
        %v1323 = vld [vmem:[%s1260 + $0x68] sm:$0x1]
        %v1324 = vsel %vm747, %v1092, %v1323
        %1325 = vst [vmem:[%s1260 + $0x68] sm:$0x1] %v1324
        %v1326 = vld [vmem:[%s1260 + $0x6c] sm:$0xf]
        %v1327 = vsel %vm1262, %v1099, %v1326
        %1328 = vst [vmem:[%s1260 + $0x6c] sm:$0xf] %v1327
        %1329 = vst [vmem:[%s1260 + $0x70] sm:$0xf] %v1108
        %v1330 = vld [vmem:[%s1260 + $0x74] sm:$0x1]
        %v1331 = vsel %vm747, %v1109, %v1330
        %1332 = vst [vmem:[%s1260 + $0x74] sm:$0x1] %v1331
        %v1333 = vld [vmem:[%s1260 + $0x78] sm:$0xf]
        %v1334 = vsel %vm1262, %v1116, %v1333
        %1335 = vst [vmem:[%s1260 + $0x78] sm:$0xf] %v1334
        %1336 = vst [vmem:[%s1260 + $0x7c] sm:$0xf] %v1125
        %v1337 = vld [vmem:[%s1260 + $0x80] sm:$0x1]
        %v1338 = vsel %vm747, %v1126, %v1337
        %1339 = vst [vmem:[%s1260 + $0x80] sm:$0x1] %v1338
        %v1340 = vld [vmem:[%s1260 + $0x84] sm:$0xf]
        %v1341 = vsel %vm1262, %v1133, %v1340
        %1342 = vst [vmem:[%s1260 + $0x84] sm:$0xf] %v1341
        %1343 = vst [vmem:[%s1260 + $0x88] sm:$0xf] %v1142
        %v1344 = vld [vmem:[%s1260 + $0x8c] sm:$0x1]
        %v1345 = vsel %vm747, %v1143, %v1344
        %1346 = vst [vmem:[%s1260 + $0x8c] sm:$0x1] %v1345
        %v1347 = vld [vmem:[%s1260 + $0x90] sm:$0xf]
        %v1348 = vsel %vm1262, %v1150, %v1347
        %1349 = vst [vmem:[%s1260 + $0x90] sm:$0xf] %v1348
        %1350 = vst [vmem:[%s1260 + $0x94] sm:$0xf] %v1159
        %v1351 = vld [vmem:[%s1260 + $0x98] sm:$0x1]
        %v1352 = vsel %vm747, %v1160, %v1351
        %1353 = vst [vmem:[%s1260 + $0x98] sm:$0x1] %v1352
        %v1354 = vld [vmem:[%s1260 + $0x9c] sm:$0xf]
        %v1355 = vsel %vm1262, %v1167, %v1354
        %1356 = vst [vmem:[%s1260 + $0x9c] sm:$0xf] %v1355
        %1357 = vst [vmem:[%s1260 + $0xa0] sm:$0xf] %v1176
        %v1358 = vld [vmem:[%s1260 + $0xa4] sm:$0x1]
        %v1359 = vsel %vm747, %v1177, %v1358
        %1360 = vst [vmem:[%s1260 + $0xa4] sm:$0x1] %v1359
        %v1361 = vld [vmem:[%s1260 + $0xa8] sm:$0xf]
        %v1362 = vsel %vm1262, %v1184, %v1361
        %1363 = vst [vmem:[%s1260 + $0xa8] sm:$0xf] %v1362
        %1364 = vst [vmem:[%s1260 + $0xac] sm:$0xf] %v1193
        %v1365 = vld [vmem:[%s1260 + $0xb0] sm:$0x1]
        %v1366 = vsel %vm747, %v1194, %v1365
        %1367 = vst [vmem:[%s1260 + $0xb0] sm:$0x1] %v1366
        %v1368 = vld [vmem:[%s1260 + $0xb4] sm:$0xf]
        %v1369 = vsel %vm1262, %v1201, %v1368
        %1370 = vst [vmem:[%s1260 + $0xb4] sm:$0xf] %v1369
        %1371 = vst [vmem:[%s1260 + $0xb8] sm:$0xf] %v1210
        %v1372 = vld [vmem:[%s1260 + $0xbc] sm:$0x1]
        %v1373 = vsel %vm747, %v1211, %v1372
        %1374 = vst [vmem:[%s1260 + $0xbc] sm:$0x1] %v1373
        %v1375 = vld [vmem:[#allocation2] sm:$0xf]
        %v1376 = vld [vmem:[#allocation2 + $0x4] sm:$0xf]
        %v1377 = vld [vmem:[#allocation2 + $0xc] sm:$0xf]
        %v1378 = vld [vmem:[#allocation2 + $0x10] sm:$0xf]
        %v1379 = vld [vmem:[#allocation2 + $0x18] sm:$0xf]
        %v1380 = vld [vmem:[#allocation2 + $0x1c] sm:$0xf]
        %v1381 = vld [vmem:[#allocation2 + $0x24] sm:$0xf]
        %v1382 = vld [vmem:[#allocation2 + $0x28] sm:$0xf]
        %v1383 = vld [vmem:[#allocation2 + $0x30] sm:$0xf]
        %v1384 = vld [vmem:[#allocation2 + $0x34] sm:$0xf]
        %v1385 = vld [vmem:[#allocation2 + $0x3c] sm:$0xf]
        %v1386 = vld [vmem:[#allocation2 + $0x40] sm:$0xf]
        %v1387 = vld [vmem:[#allocation2 + $0x48] sm:$0xf]
        %v1388 = vld [vmem:[#allocation2 + $0x4c] sm:$0xf]
        %v1389 = vld [vmem:[#allocation2 + $0x54] sm:$0xf]
        %v1390 = vld [vmem:[#allocation2 + $0x58] sm:$0xf]
        %v1391 = vld [vmem:[#allocation2 + $0x60] sm:$0xf]
        %v1392 = vld [vmem:[#allocation2 + $0x64] sm:$0xf]
        %v1393 = vld [vmem:[#allocation2 + $0x6c] sm:$0xf]
        %v1394 = vld [vmem:[#allocation2 + $0x70] sm:$0xf]
        %v1395 = vld [vmem:[#allocation2 + $0x78] sm:$0xf]
        %v1396 = vld [vmem:[#allocation2 + $0x7c] sm:$0xf]
        %v1397 = vld [vmem:[#allocation2 + $0x84] sm:$0xf]
        %v1398 = vld [vmem:[#allocation2 + $0x88] sm:$0xf]
        %v1399 = vld [vmem:[#allocation2 + $0x90] sm:$0xf]
        %v1400 = vld [vmem:[#allocation2 + $0x94] sm:$0xf]
        %v1401 = vld [vmem:[#allocation2 + $0x9c] sm:$0xf]
        %v1402 = vld [vmem:[#allocation2 + $0xa0] sm:$0xf]
        %v1403 = vld [vmem:[#allocation2 + $0xa8] sm:$0xf]
        %v1404 = vld [vmem:[#allocation2 + $0xac] sm:$0xf]
        %v1405 = vld [vmem:[#allocation2 + $0xb4] sm:$0xf]
        %v1406 = vld [vmem:[#allocation2 + $0xb8] sm:$0xf]
        %v1407 = vld [vmem:[#allocation2 + $0xc0] sm:$0xf]
        %v1408 = vld [vmem:[#allocation2 + $0xc4] sm:$0xf]
        %v1409 = vld [vmem:[#allocation2 + $0xcc] sm:$0xf]
        %v1410 = vld [vmem:[#allocation2 + $0xd0] sm:$0xf]
        %v1411 = vld [vmem:[#allocation2 + $0x8] sm:$0x1]
        %v1412 = vld [vmem:[#allocation2 + $0x14] sm:$0x1]
        %v1413 = vld [vmem:[#allocation2 + $0x20] sm:$0x1]
        %v1414 = vld [vmem:[#allocation2 + $0x2c] sm:$0x1]
        %v1415 = vld [vmem:[#allocation2 + $0x38] sm:$0x1]
        %v1416 = vld [vmem:[#allocation2 + $0x44] sm:$0x1]
        %v1417 = vld [vmem:[#allocation2 + $0x50] sm:$0x1]
        %v1418 = vld [vmem:[#allocation2 + $0x5c] sm:$0x1]
        %v1419 = vld [vmem:[#allocation2 + $0x68] sm:$0x1]
        %v1420 = vld [vmem:[#allocation2 + $0x74] sm:$0x1]
        %v1421 = vld [vmem:[#allocation2 + $0x80] sm:$0x1]
        %v1422 = vld [vmem:[#allocation2 + $0x8c] sm:$0x1]
        %v1423 = vld [vmem:[#allocation2 + $0x98] sm:$0x1]
        %v1424 = vld [vmem:[#allocation2 + $0xa4] sm:$0x1]
        %v1425 = vld [vmem:[#allocation2 + $0xb0] sm:$0x1]
        %v1426 = vld [vmem:[#allocation2 + $0xbc] sm:$0x1]
        %v1427 = vld [vmem:[#allocation2 + $0xc8] sm:$0x1]
        %v1428 = vld [vmem:[#allocation2 + $0xd4] sm:$0x1]
        %v1429 = vld [vmem:[#allocation2] sm:$0xe]
        %v1430 = vld [vmem:[#allocation2 + $0xc] sm:$0xe]
        %v1431 = vld [vmem:[#allocation2 + $0x18] sm:$0xe]
        %v1432 = vld [vmem:[#allocation2 + $0x24] sm:$0xe]
        %v1433 = vld [vmem:[#allocation2 + $0x30] sm:$0xe]
        %v1434 = vld [vmem:[#allocation2 + $0x3c] sm:$0xe]
        %v1435 = vld [vmem:[#allocation2 + $0x48] sm:$0xe]
        %v1436 = vld [vmem:[#allocation2 + $0x54] sm:$0xe]
        %v1437 = vld [vmem:[#allocation2 + $0x60] sm:$0xe]
        %v1438 = vld [vmem:[#allocation2 + $0x6c] sm:$0xe]
        %v1439 = vld [vmem:[#allocation2 + $0x78] sm:$0xe]
        %v1440 = vld [vmem:[#allocation2 + $0x84] sm:$0xe]
        %v1441 = vld [vmem:[#allocation2 + $0x90] sm:$0xe]
        %v1442 = vld [vmem:[#allocation2 + $0x9c] sm:$0xe]
        %v1443 = vld [vmem:[#allocation2 + $0xa8] sm:$0xe]
        %v1444 = vld [vmem:[#allocation2 + $0xb4] sm:$0xe]
        %v1445 = vld [vmem:[#allocation2 + $0xc0] sm:$0xe]
        %v1446 = vld [vmem:[#allocation2 + $0xcc] sm:$0xe]
        %v1479 = vunpack.c.l.b16 %v1375
        %v1480 = vunpack.c.l.b16 %v1376
        %v1481 = vunpack.c.l.b16 %v1377
        %v1482 = vunpack.c.l.b16 %v1378
        %v1483 = vunpack.c.l.b16 %v1379
        %v1484 = vunpack.c.l.b16 %v1380
        %v1485 = vunpack.c.l.b16 %v1381
        %v1486 = vunpack.c.l.b16 %v1382
        %v1487 = vunpack.c.l.b16 %v1383
        %v1488 = vunpack.c.l.b16 %v1384
        %v1489 = vunpack.c.l.b16 %v1385
        %v1490 = vunpack.c.l.b16 %v1386
        %v1491 = vunpack.c.l.b16 %v1387
        %v1492 = vunpack.c.l.b16 %v1388
        %v1493 = vunpack.c.l.b16 %v1389
        %v1494 = vunpack.c.l.b16 %v1390
        %v1495 = vunpack.c.l.b16 %v1391
        %v1496 = vunpack.c.l.b16 %v1392
        %v1497 = vunpack.c.l.b16 %v1393
        %v1498 = vunpack.c.l.b16 %v1394
        %v1499 = vunpack.c.l.b16 %v1395
        %v1500 = vunpack.c.l.b16 %v1396
        %v1501 = vunpack.c.l.b16 %v1397
        %v1502 = vunpack.c.l.b16 %v1398
        %v1503 = vunpack.c.l.b16 %v1399
        %v1504 = vunpack.c.l.b16 %v1400
        %v1505 = vunpack.c.l.b16 %v1401
        %v1506 = vunpack.c.l.b16 %v1402
        %v1507 = vunpack.c.l.b16 %v1403
        %v1508 = vunpack.c.l.b16 %v1404
        %v1509 = vunpack.c.l.b16 %v1405
        %v1510 = vunpack.c.l.b16 %v1406
        %v1511 = vpack.c.b16 %v1480, %v1479
        %v1512 = vpack.c.b16 %v1482, %v1481
        %v1513 = vpack.c.b16 %v1484, %v1483
        %v1514 = vpack.c.b16 %v1486, %v1485
        %v1515 = vpack.c.b16 %v1488, %v1487
        %v1516 = vpack.c.b16 %v1490, %v1489
        %v1517 = vpack.c.b16 %v1492, %v1491
        %v1518 = vpack.c.b16 %v1494, %v1493
        %v1519 = vpack.c.b16 %v1496, %v1495
        %v1520 = vpack.c.b16 %v1498, %v1497
        %v1521 = vpack.c.b16 %v1500, %v1499
        %v1522 = vpack.c.b16 %v1502, %v1501
        %v1523 = vpack.c.b16 %v1504, %v1503
        %v1524 = vpack.c.b16 %v1506, %v1505
        %v1525 = vpack.c.b16 %v1508, %v1507
        %v1526 = vpack.c.b16 %v1510, %v1509
        %1543 = vst [vmem:[#allocation3] sm:$0xff] %v1511
        %1544 = vst [vmem:[#allocation3 + $0x48] sm:$0xff] %v1512
        %1545 = vst [vmem:[#allocation3 + $0x90] sm:$0xff] %v1513
        %1546 = vst [vmem:[#allocation3 + $0xd8] sm:$0xff] %v1514
        %1547 = vst [vmem:[#allocation3 + $0x120] sm:$0xff] %v1515
        %1548 = vst [vmem:[#allocation3 + $0x168] sm:$0xff] %v1516
        %1549 = vst [vmem:[#allocation3 + $0x1b0] sm:$0xff] %v1517
        %1550 = vst [vmem:[#allocation3 + $0x1f8] sm:$0xff] %v1518
        %1551 = vst [vmem:[#allocation3 + $0x240] sm:$0xff] %v1519
        %1552 = vst [vmem:[#allocation3 + $0x288] sm:$0xff] %v1520
        %1553 = vst [vmem:[#allocation3 + $0x2d0] sm:$0xff] %v1521
        %1554 = vst [vmem:[#allocation3 + $0x318] sm:$0xff] %v1522
        %1555 = vst [vmem:[#allocation3 + $0x360] sm:$0xff] %v1523
        %1556 = vst [vmem:[#allocation3 + $0x3a8] sm:$0xff] %v1524
        %1557 = vst [vmem:[#allocation3 + $0x3f0] sm:$0xff] %v1525
        %1558 = vst [vmem:[#allocation3 + $0x438] sm:$0xff] %v1526
        %vm1559 = vsmask.f32 3328
        %vm1560 = vsmask.f32 7440
        %vm1561 = vmor %vm1559, %vm1560
        %v1563 = vshrl.u32 %v1375, 16
        %v1565 = vrot.slane %v1563, 4
        %v1566 = vshll.u32 %v1375, 16
        %v1568 = vrot.slane %v1566, 5
        %v1569 = vor.u32 %v1565, %v1568
        %v1570 = vrot.slane %v1569, 4
        %v1572 = vshll.u32 %v1376, 16
        %v1574 = vrot.slane %v1572, 5
        %v1575 = vsel %vm1561, %v1570, %v1574
        %v1576 = vshrl.u32 %v1376, 16
        %v1578 = vrot.slane %v1576, 4
        %v1579 = vor.u32 %v1578, %v1574
        %v1580 = vrot.slane %v1579, 4
        %v1582 = vshll.u32 %v1411, 16
        %v1584 = vrot.slane %v1582, 5
        %v1585 = vsel %vm1561, %v1580, %v1584
        %v1587 = vshrl.u32 %v1377, 16
        %v1589 = vrot.slane %v1587, 4
        %v1590 = vshll.u32 %v1377, 16
        %v1592 = vrot.slane %v1590, 5
        %v1593 = vor.u32 %v1589, %v1592
        %v1594 = vrot.slane %v1593, 4
        %v1596 = vshll.u32 %v1378, 16
        %v1598 = vrot.slane %v1596, 5
        %v1599 = vsel %vm1561, %v1594, %v1598
        %v1600 = vshrl.u32 %v1378, 16
        %v1602 = vrot.slane %v1600, 4
        %v1603 = vor.u32 %v1602, %v1598
        %v1604 = vrot.slane %v1603, 4
        %v1606 = vshll.u32 %v1412, 16
        %v1608 = vrot.slane %v1606, 5
        %v1609 = vsel %vm1561, %v1604, %v1608
        %v1611 = vshrl.u32 %v1379, 16
        %v1613 = vrot.slane %v1611, 4
        %v1614 = vshll.u32 %v1379, 16
        %v1616 = vrot.slane %v1614, 5
        %v1617 = vor.u32 %v1613, %v1616
        %v1618 = vrot.slane %v1617, 4
        %v1620 = vshll.u32 %v1380, 16
        %v1622 = vrot.slane %v1620, 5
        %v1623 = vsel %vm1561, %v1618, %v1622
        %v1624 = vshrl.u32 %v1380, 16
        %v1626 = vrot.slane %v1624, 4
        %v1627 = vor.u32 %v1626, %v1622
        %v1628 = vrot.slane %v1627, 4
        %v1630 = vshll.u32 %v1413, 16
        %v1632 = vrot.slane %v1630, 5
        %v1633 = vsel %vm1561, %v1628, %v1632
        %v1635 = vshrl.u32 %v1381, 16
        %v1637 = vrot.slane %v1635, 4
        %v1638 = vshll.u32 %v1381, 16
        %v1640 = vrot.slane %v1638, 5
        %v1641 = vor.u32 %v1637, %v1640
        %v1642 = vrot.slane %v1641, 4
        %v1644 = vshll.u32 %v1382, 16
        %v1646 = vrot.slane %v1644, 5
        %v1647 = vsel %vm1561, %v1642, %v1646
        %v1648 = vshrl.u32 %v1382, 16
        %v1650 = vrot.slane %v1648, 4
        %v1651 = vor.u32 %v1650, %v1646
        %v1652 = vrot.slane %v1651, 4
        %v1654 = vshll.u32 %v1414, 16
        %v1656 = vrot.slane %v1654, 5
        %v1657 = vsel %vm1561, %v1652, %v1656
        %v1659 = vshrl.u32 %v1383, 16
        %v1661 = vrot.slane %v1659, 4
        %v1662 = vshll.u32 %v1383, 16
        %v1664 = vrot.slane %v1662, 5
        %v1665 = vor.u32 %v1661, %v1664
        %v1666 = vrot.slane %v1665, 4
        %v1668 = vshll.u32 %v1384, 16
        %v1670 = vrot.slane %v1668, 5
        %v1671 = vsel %vm1561, %v1666, %v1670
        %v1672 = vshrl.u32 %v1384, 16
        %v1674 = vrot.slane %v1672, 4
        %v1675 = vor.u32 %v1674, %v1670
        %v1676 = vrot.slane %v1675, 4
        %v1678 = vshll.u32 %v1415, 16
        %v1680 = vrot.slane %v1678, 5
        %v1681 = vsel %vm1561, %v1676, %v1680
        %v1683 = vshrl.u32 %v1385, 16
        %v1685 = vrot.slane %v1683, 4
        %v1686 = vshll.u32 %v1385, 16
        %v1688 = vrot.slane %v1686, 5
        %v1689 = vor.u32 %v1685, %v1688
        %v1690 = vrot.slane %v1689, 4
        %v1692 = vshll.u32 %v1386, 16
        %v1694 = vrot.slane %v1692, 5
        %v1695 = vsel %vm1561, %v1690, %v1694
        %v1696 = vshrl.u32 %v1386, 16
        %v1698 = vrot.slane %v1696, 4
        %v1699 = vor.u32 %v1698, %v1694
        %v1700 = vrot.slane %v1699, 4
        %v1702 = vshll.u32 %v1416, 16
        %v1704 = vrot.slane %v1702, 5
        %v1705 = vsel %vm1561, %v1700, %v1704
        %v1707 = vshrl.u32 %v1387, 16
        %v1709 = vrot.slane %v1707, 4
        %v1710 = vshll.u32 %v1387, 16
        %v1712 = vrot.slane %v1710, 5
        %v1713 = vor.u32 %v1709, %v1712
        %v1714 = vrot.slane %v1713, 4
        %v1716 = vshll.u32 %v1388, 16
        %v1718 = vrot.slane %v1716, 5
        %v1719 = vsel %vm1561, %v1714, %v1718
        %v1720 = vshrl.u32 %v1388, 16
        %v1722 = vrot.slane %v1720, 4
        %v1723 = vor.u32 %v1722, %v1718
        %v1724 = vrot.slane %v1723, 4
        %v1726 = vshll.u32 %v1417, 16
        %v1728 = vrot.slane %v1726, 5
        %v1729 = vsel %vm1561, %v1724, %v1728
        %v1731 = vshrl.u32 %v1389, 16
        %v1733 = vrot.slane %v1731, 4
        %v1734 = vshll.u32 %v1389, 16
        %v1736 = vrot.slane %v1734, 5
        %v1737 = vor.u32 %v1733, %v1736
        %v1738 = vrot.slane %v1737, 4
        %v1740 = vshll.u32 %v1390, 16
        %v1742 = vrot.slane %v1740, 5
        %v1743 = vsel %vm1561, %v1738, %v1742
        %v1744 = vshrl.u32 %v1390, 16
        %v1746 = vrot.slane %v1744, 4
        %v1747 = vor.u32 %v1746, %v1742
        %v1748 = vrot.slane %v1747, 4
        %v1750 = vshll.u32 %v1418, 16
        %v1752 = vrot.slane %v1750, 5
        %v1753 = vsel %vm1561, %v1748, %v1752
        %v1755 = vshrl.u32 %v1391, 16
        %v1757 = vrot.slane %v1755, 4
        %v1758 = vshll.u32 %v1391, 16
        %v1760 = vrot.slane %v1758, 5
        %v1761 = vor.u32 %v1757, %v1760
        %v1762 = vrot.slane %v1761, 4
        %v1764 = vshll.u32 %v1392, 16
        %v1766 = vrot.slane %v1764, 5
        %v1767 = vsel %vm1561, %v1762, %v1766
        %v1768 = vshrl.u32 %v1392, 16
        %v1770 = vrot.slane %v1768, 4
        %v1771 = vor.u32 %v1770, %v1766
        %v1772 = vrot.slane %v1771, 4
        %v1774 = vshll.u32 %v1419, 16
        %v1776 = vrot.slane %v1774, 5
        %v1777 = vsel %vm1561, %v1772, %v1776
        %v1779 = vshrl.u32 %v1393, 16
        %v1781 = vrot.slane %v1779, 4
        %v1782 = vshll.u32 %v1393, 16
        %v1784 = vrot.slane %v1782, 5
        %v1785 = vor.u32 %v1781, %v1784
        %v1786 = vrot.slane %v1785, 4
        %v1788 = vshll.u32 %v1394, 16
        %v1790 = vrot.slane %v1788, 5
        %v1791 = vsel %vm1561, %v1786, %v1790
        %v1792 = vshrl.u32 %v1394, 16
        %v1794 = vrot.slane %v1792, 4
        %v1795 = vor.u32 %v1794, %v1790
        %v1796 = vrot.slane %v1795, 4
        %v1798 = vshll.u32 %v1420, 16
        %v1800 = vrot.slane %v1798, 5
        %v1801 = vsel %vm1561, %v1796, %v1800
        %v1803 = vshrl.u32 %v1395, 16
        %v1805 = vrot.slane %v1803, 4
        %v1806 = vshll.u32 %v1395, 16
        %v1808 = vrot.slane %v1806, 5
        %v1809 = vor.u32 %v1805, %v1808
        %v1810 = vrot.slane %v1809, 4
        %v1812 = vshll.u32 %v1396, 16
        %v1814 = vrot.slane %v1812, 5
        %v1815 = vsel %vm1561, %v1810, %v1814
        %v1816 = vshrl.u32 %v1396, 16
        %v1818 = vrot.slane %v1816, 4
        %v1819 = vor.u32 %v1818, %v1814
        %v1820 = vrot.slane %v1819, 4
        %v1822 = vshll.u32 %v1421, 16
        %v1824 = vrot.slane %v1822, 5
        %v1825 = vsel %vm1561, %v1820, %v1824
        %v1827 = vshrl.u32 %v1397, 16
        %v1829 = vrot.slane %v1827, 4
        %v1830 = vshll.u32 %v1397, 16
        %v1832 = vrot.slane %v1830, 5
        %v1833 = vor.u32 %v1829, %v1832
        %v1834 = vrot.slane %v1833, 4
        %v1836 = vshll.u32 %v1398, 16
        %v1838 = vrot.slane %v1836, 5
        %v1839 = vsel %vm1561, %v1834, %v1838
        %v1840 = vshrl.u32 %v1398, 16
        %v1842 = vrot.slane %v1840, 4
        %v1843 = vor.u32 %v1842, %v1838
        %v1844 = vrot.slane %v1843, 4
        %v1846 = vshll.u32 %v1422, 16
        %v1848 = vrot.slane %v1846, 5
        %v1849 = vsel %vm1561, %v1844, %v1848
        %v1851 = vshrl.u32 %v1399, 16
        %v1853 = vrot.slane %v1851, 4
        %v1854 = vshll.u32 %v1399, 16
        %v1856 = vrot.slane %v1854, 5
        %v1857 = vor.u32 %v1853, %v1856
        %v1858 = vrot.slane %v1857, 4
        %v1860 = vshll.u32 %v1400, 16
        %v1862 = vrot.slane %v1860, 5
        %v1863 = vsel %vm1561, %v1858, %v1862
        %v1864 = vshrl.u32 %v1400, 16
        %v1866 = vrot.slane %v1864, 4
        %v1867 = vor.u32 %v1866, %v1862
        %v1868 = vrot.slane %v1867, 4
        %v1870 = vshll.u32 %v1423, 16
        %v1872 = vrot.slane %v1870, 5
        %v1873 = vsel %vm1561, %v1868, %v1872
        %v1875 = vshrl.u32 %v1401, 16
        %v1877 = vrot.slane %v1875, 4
        %v1878 = vshll.u32 %v1401, 16
        %v1880 = vrot.slane %v1878, 5
        %v1881 = vor.u32 %v1877, %v1880
        %v1882 = vrot.slane %v1881, 4
        %v1884 = vshll.u32 %v1402, 16
        %v1886 = vrot.slane %v1884, 5
        %v1887 = vsel %vm1561, %v1882, %v1886
        %v1888 = vshrl.u32 %v1402, 16
        %v1890 = vrot.slane %v1888, 4
        %v1891 = vor.u32 %v1890, %v1886
        %v1892 = vrot.slane %v1891, 4
        %v1894 = vshll.u32 %v1424, 16
        %v1896 = vrot.slane %v1894, 5
        %v1897 = vsel %vm1561, %v1892, %v1896
        %v1899 = vshrl.u32 %v1403, 16
        %v1901 = vrot.slane %v1899, 4
        %v1902 = vshll.u32 %v1403, 16
        %v1904 = vrot.slane %v1902, 5
        %v1905 = vor.u32 %v1901, %v1904
        %v1906 = vrot.slane %v1905, 4
        %v1908 = vshll.u32 %v1404, 16
        %v1910 = vrot.slane %v1908, 5
        %v1911 = vsel %vm1561, %v1906, %v1910
        %v1912 = vshrl.u32 %v1404, 16
        %v1914 = vrot.slane %v1912, 4
        %v1915 = vor.u32 %v1914, %v1910
        %v1916 = vrot.slane %v1915, 4
        %v1918 = vshll.u32 %v1425, 16
        %v1920 = vrot.slane %v1918, 5
        %v1921 = vsel %vm1561, %v1916, %v1920
        %v1923 = vshrl.u32 %v1405, 16
        %v1925 = vrot.slane %v1923, 4
        %v1926 = vshll.u32 %v1405, 16
        %v1928 = vrot.slane %v1926, 5
        %v1929 = vor.u32 %v1925, %v1928
        %v1930 = vrot.slane %v1929, 4
        %v1932 = vshll.u32 %v1406, 16
        %v1934 = vrot.slane %v1932, 5
        %v1935 = vsel %vm1561, %v1930, %v1934
        %v1936 = vshrl.u32 %v1406, 16
        %v1938 = vrot.slane %v1936, 4
        %v1939 = vor.u32 %v1938, %v1934
        %v1940 = vrot.slane %v1939, 4
        %v1942 = vshll.u32 %v1426, 16
        %v1944 = vrot.slane %v1942, 5
        %v1945 = vsel %vm1561, %v1940, %v1944
        %v1946 = vunpack.c.l.b16 %v1575
        %v1947 = vunpack.c.l.b16 %v1585
        %v1948 = vunpack.c.l.b16 %v1599
        %v1949 = vunpack.c.l.b16 %v1609
        %v1950 = vunpack.c.l.b16 %v1623
        %v1951 = vunpack.c.l.b16 %v1633
        %v1952 = vunpack.c.l.b16 %v1647
        %v1953 = vunpack.c.l.b16 %v1657
        %v1954 = vunpack.c.l.b16 %v1671
        %v1955 = vunpack.c.l.b16 %v1681
        %v1956 = vunpack.c.l.b16 %v1695
        %v1957 = vunpack.c.l.b16 %v1705
        %v1958 = vunpack.c.l.b16 %v1719
        %v1959 = vunpack.c.l.b16 %v1729
        %v1960 = vunpack.c.l.b16 %v1743
        %v1961 = vunpack.c.l.b16 %v1753
        %v1962 = vunpack.c.l.b16 %v1767
        %v1963 = vunpack.c.l.b16 %v1777
        %v1964 = vunpack.c.l.b16 %v1791
        %v1965 = vunpack.c.l.b16 %v1801
        %v1966 = vunpack.c.l.b16 %v1815
        %v1967 = vunpack.c.l.b16 %v1825
        %v1968 = vunpack.c.l.b16 %v1839
        %v1969 = vunpack.c.l.b16 %v1849
        %v1970 = vunpack.c.l.b16 %v1863
        %v1971 = vunpack.c.l.b16 %v1873
        %v1972 = vunpack.c.l.b16 %v1887
        %v1973 = vunpack.c.l.b16 %v1897
        %v1974 = vunpack.c.l.b16 %v1911
        %v1975 = vunpack.c.l.b16 %v1921
        %v1976 = vunpack.c.l.b16 %v1935
        %v1977 = vunpack.c.l.b16 %v1945
        %v1978 = vpack.c.b16 %v1947, %v1946
        %v1979 = vpack.c.b16 %v1949, %v1948
        %v1980 = vpack.c.b16 %v1951, %v1950
        %v1981 = vpack.c.b16 %v1953, %v1952
        %v1982 = vpack.c.b16 %v1955, %v1954
        %v1983 = vpack.c.b16 %v1957, %v1956
        %v1984 = vpack.c.b16 %v1959, %v1958
        %v1985 = vpack.c.b16 %v1961, %v1960
        %v1986 = vpack.c.b16 %v1963, %v1962
        %v1987 = vpack.c.b16 %v1965, %v1964
        %v1988 = vpack.c.b16 %v1967, %v1966
        %v1989 = vpack.c.b16 %v1969, %v1968
        %v1990 = vpack.c.b16 %v1971, %v1970
        %v1991 = vpack.c.b16 %v1973, %v1972
        %v1992 = vpack.c.b16 %v1975, %v1974
        %v1993 = vpack.c.b16 %v1977, %v1976
        %2010 = vst [vmem:[#allocation3 + $0x8] sm:$0xff] %v1978
        %2011 = vst [vmem:[#allocation3 + $0x50] sm:$0xff] %v1979
        %2012 = vst [vmem:[#allocation3 + $0x98] sm:$0xff] %v1980
        %2013 = vst [vmem:[#allocation3 + $0xe0] sm:$0xff] %v1981
        %2014 = vst [vmem:[#allocation3 + $0x128] sm:$0xff] %v1982
        %2015 = vst [vmem:[#allocation3 + $0x170] sm:$0xff] %v1983
        %2016 = vst [vmem:[#allocation3 + $0x1b8] sm:$0xff] %v1984
        %2017 = vst [vmem:[#allocation3 + $0x200] sm:$0xff] %v1985
        %2018 = vst [vmem:[#allocation3 + $0x248] sm:$0xff] %v1986
        %2019 = vst [vmem:[#allocation3 + $0x290] sm:$0xff] %v1987
        %2020 = vst [vmem:[#allocation3 + $0x2d8] sm:$0xff] %v1988
        %2021 = vst [vmem:[#allocation3 + $0x320] sm:$0xff] %v1989
        %2022 = vst [vmem:[#allocation3 + $0x368] sm:$0xff] %v1990
        %2023 = vst [vmem:[#allocation3 + $0x3b0] sm:$0xff] %v1991
        %2024 = vst [vmem:[#allocation3 + $0x3f8] sm:$0xff] %v1992
        %2025 = vst [vmem:[#allocation3 + $0x440] sm:$0xff] %v1993
        %vm2058 = vcmask 1042432
        %vm2059 = vcmask 1046532
        %vm2060 = vmor %vm2058, %vm2059
        %v2061 = vrot.slane %v1429, 5
        %v2062 = vrot.slane %v2061, 4
        %v2063 = vrot.slane %v1376, 5
        %v2064 = vsel %vm2060, %v2062, %v2063
        %v2065 = vrot.slane %v2063, 4
        %v2066 = vrot.slane %v1411, 5
        %v2067 = vsel %vm2060, %v2065, %v2066
        %v2068 = vrot.slane %v1430, 5
        %v2069 = vrot.slane %v2068, 4
        %v2070 = vrot.slane %v1378, 5
        %v2071 = vsel %vm2060, %v2069, %v2070
        %v2072 = vrot.slane %v2070, 4
        %v2073 = vrot.slane %v1412, 5
        %v2074 = vsel %vm2060, %v2072, %v2073
        %v2075 = vrot.slane %v1431, 5
        %v2076 = vrot.slane %v2075, 4
        %v2077 = vrot.slane %v1380, 5
        %v2078 = vsel %vm2060, %v2076, %v2077
        %v2079 = vrot.slane %v2077, 4
        %v2080 = vrot.slane %v1413, 5
        %v2081 = vsel %vm2060, %v2079, %v2080
        %v2082 = vrot.slane %v1432, 5
        %v2083 = vrot.slane %v2082, 4
        %v2084 = vrot.slane %v1382, 5
        %v2085 = vsel %vm2060, %v2083, %v2084
        %v2086 = vrot.slane %v2084, 4
        %v2087 = vrot.slane %v1414, 5
        %v2088 = vsel %vm2060, %v2086, %v2087
        %v2089 = vrot.slane %v1433, 5
        %v2090 = vrot.slane %v2089, 4
        %v2091 = vrot.slane %v1384, 5
        %v2092 = vsel %vm2060, %v2090, %v2091
        %v2093 = vrot.slane %v2091, 4
        %v2094 = vrot.slane %v1415, 5
        %v2095 = vsel %vm2060, %v2093, %v2094
        %v2096 = vrot.slane %v1434, 5
        %v2097 = vrot.slane %v2096, 4
        %v2098 = vrot.slane %v1386, 5
        %v2099 = vsel %vm2060, %v2097, %v2098
        %v2100 = vrot.slane %v2098, 4
        %v2101 = vrot.slane %v1416, 5
        %v2102 = vsel %vm2060, %v2100, %v2101
        %v2103 = vrot.slane %v1435, 5
        %v2104 = vrot.slane %v2103, 4
        %v2105 = vrot.slane %v1388, 5
        %v2106 = vsel %vm2060, %v2104, %v2105
        %v2107 = vrot.slane %v2105, 4
        %v2108 = vrot.slane %v1417, 5
        %v2109 = vsel %vm2060, %v2107, %v2108
        %v2110 = vrot.slane %v1436, 5
        %v2111 = vrot.slane %v2110, 4
        %v2112 = vrot.slane %v1390, 5
        %v2113 = vsel %vm2060, %v2111, %v2112
        %v2114 = vrot.slane %v2112, 4
        %v2115 = vrot.slane %v1418, 5
        %v2116 = vsel %vm2060, %v2114, %v2115
        %v2117 = vrot.slane %v1437, 5
        %v2118 = vrot.slane %v2117, 4
        %v2119 = vrot.slane %v1392, 5
        %v2120 = vsel %vm2060, %v2118, %v2119
        %v2121 = vrot.slane %v2119, 4
        %v2122 = vrot.slane %v1419, 5
        %v2123 = vsel %vm2060, %v2121, %v2122
        %v2124 = vrot.slane %v1438, 5
        %v2125 = vrot.slane %v2124, 4
        %v2126 = vrot.slane %v1394, 5
        %v2127 = vsel %vm2060, %v2125, %v2126
        %v2128 = vrot.slane %v2126, 4
        %v2129 = vrot.slane %v1420, 5
        %v2130 = vsel %vm2060, %v2128, %v2129
        %v2131 = vrot.slane %v1439, 5
        %v2132 = vrot.slane %v2131, 4
        %v2133 = vrot.slane %v1396, 5
        %v2134 = vsel %vm2060, %v2132, %v2133
        %v2135 = vrot.slane %v2133, 4
        %v2136 = vrot.slane %v1421, 5
        %v2137 = vsel %vm2060, %v2135, %v2136
        %v2138 = vrot.slane %v1440, 5
        %v2139 = vrot.slane %v2138, 4
        %v2140 = vrot.slane %v1398, 5
        %v2141 = vsel %vm2060, %v2139, %v2140
        %v2142 = vrot.slane %v2140, 4
        %v2143 = vrot.slane %v1422, 5
        %v2144 = vsel %vm2060, %v2142, %v2143
        %v2145 = vrot.slane %v1441, 5
        %v2146 = vrot.slane %v2145, 4
        %v2147 = vrot.slane %v1400, 5
        %v2148 = vsel %vm2060, %v2146, %v2147
        %v2149 = vrot.slane %v2147, 4
        %v2150 = vrot.slane %v1423, 5
        %v2151 = vsel %vm2060, %v2149, %v2150
        %v2152 = vrot.slane %v1442, 5
        %v2153 = vrot.slane %v2152, 4
        %v2154 = vrot.slane %v1402, 5
        %v2155 = vsel %vm2060, %v2153, %v2154
        %v2156 = vrot.slane %v2154, 4
        %v2157 = vrot.slane %v1424, 5
        %v2158 = vsel %vm2060, %v2156, %v2157
        %v2159 = vrot.slane %v1443, 5
        %v2160 = vrot.slane %v2159, 4
        %v2161 = vrot.slane %v1404, 5
        %v2162 = vsel %vm2060, %v2160, %v2161
        %v2163 = vrot.slane %v2161, 4
        %v2164 = vrot.slane %v1425, 5
        %v2165 = vsel %vm2060, %v2163, %v2164
        %v2166 = vrot.slane %v1444, 5
        %v2167 = vrot.slane %v2166, 4
        %v2168 = vrot.slane %v1406, 5
        %v2169 = vsel %vm2060, %v2167, %v2168
        %v2170 = vrot.slane %v2168, 4
        %v2171 = vrot.slane %v1426, 5
        %v2172 = vsel %vm2060, %v2170, %v2171
        %v2173 = vunpack.c.l.b16 %v2064
        %v2174 = vunpack.c.l.b16 %v2067
        %v2175 = vunpack.c.l.b16 %v2071
        %v2176 = vunpack.c.l.b16 %v2074
        %v2177 = vunpack.c.l.b16 %v2078
        %v2178 = vunpack.c.l.b16 %v2081
        %v2179 = vunpack.c.l.b16 %v2085
        %v2180 = vunpack.c.l.b16 %v2088
        %v2181 = vunpack.c.l.b16 %v2092
        %v2182 = vunpack.c.l.b16 %v2095
        %v2183 = vunpack.c.l.b16 %v2099
        %v2184 = vunpack.c.l.b16 %v2102
        %v2185 = vunpack.c.l.b16 %v2106
        %v2186 = vunpack.c.l.b16 %v2109
        %v2187 = vunpack.c.l.b16 %v2113
        %v2188 = vunpack.c.l.b16 %v2116
        %v2189 = vunpack.c.l.b16 %v2120
        %v2190 = vunpack.c.l.b16 %v2123
        %v2191 = vunpack.c.l.b16 %v2127
        %v2192 = vunpack.c.l.b16 %v2130
        %v2193 = vunpack.c.l.b16 %v2134
        %v2194 = vunpack.c.l.b16 %v2137
        %v2195 = vunpack.c.l.b16 %v2141
        %v2196 = vunpack.c.l.b16 %v2144
        %v2197 = vunpack.c.l.b16 %v2148
        %v2198 = vunpack.c.l.b16 %v2151
        %v2199 = vunpack.c.l.b16 %v2155
        %v2200 = vunpack.c.l.b16 %v2158
        %v2201 = vunpack.c.l.b16 %v2162
        %v2202 = vunpack.c.l.b16 %v2165
        %v2203 = vunpack.c.l.b16 %v2169
        %v2204 = vunpack.c.l.b16 %v2172
        %v2205 = vpack.c.b16 %v2174, %v2173
        %v2206 = vpack.c.b16 %v2176, %v2175
        %v2207 = vpack.c.b16 %v2178, %v2177
        %v2208 = vpack.c.b16 %v2180, %v2179
        %v2209 = vpack.c.b16 %v2182, %v2181
        %v2210 = vpack.c.b16 %v2184, %v2183
        %v2211 = vpack.c.b16 %v2186, %v2185
        %v2212 = vpack.c.b16 %v2188, %v2187
        %v2213 = vpack.c.b16 %v2190, %v2189
        %v2214 = vpack.c.b16 %v2192, %v2191
        %v2215 = vpack.c.b16 %v2194, %v2193
        %v2216 = vpack.c.b16 %v2196, %v2195
        %v2217 = vpack.c.b16 %v2198, %v2197
        %v2218 = vpack.c.b16 %v2200, %v2199
        %v2219 = vpack.c.b16 %v2202, %v2201
        %v2220 = vpack.c.b16 %v2204, %v2203
        %2237 = vst [vmem:[#allocation3 + $0x10] sm:$0xff] %v2205
        %2238 = vst [vmem:[#allocation3 + $0x58] sm:$0xff] %v2206
        %2239 = vst [vmem:[#allocation3 + $0xa0] sm:$0xff] %v2207
        %2240 = vst [vmem:[#allocation3 + $0xe8] sm:$0xff] %v2208
        %2241 = vst [vmem:[#allocation3 + $0x130] sm:$0xff] %v2209
        %2242 = vst [vmem:[#allocation3 + $0x178] sm:$0xff] %v2210
        %2243 = vst [vmem:[#allocation3 + $0x1c0] sm:$0xff] %v2211
        %2244 = vst [vmem:[#allocation3 + $0x208] sm:$0xff] %v2212
        %2245 = vst [vmem:[#allocation3 + $0x250] sm:$0xff] %v2213
        %2246 = vst [vmem:[#allocation3 + $0x298] sm:$0xff] %v2214
        %2247 = vst [vmem:[#allocation3 + $0x2e0] sm:$0xff] %v2215
        %2248 = vst [vmem:[#allocation3 + $0x328] sm:$0xff] %v2216
        %2249 = vst [vmem:[#allocation3 + $0x370] sm:$0xff] %v2217
        %2250 = vst [vmem:[#allocation3 + $0x3b8] sm:$0xff] %v2218
        %2251 = vst [vmem:[#allocation3 + $0x400] sm:$0xff] %v2219
        %2252 = vst [vmem:[#allocation3 + $0x448] sm:$0xff] %v2220
        %v2255 = vunpack.c.l.b16 %v1407
        %v2256 = vunpack.c.l.b16 %v1408
        %v2257 = vpack.c.b16 %v2256, %v2255
        %2259 = vst [vmem:[#allocation3 + $0x18] sm:$0xff] %v1512
        %2260 = vst [vmem:[#allocation3 + $0x60] sm:$0xff] %v1513
        %2261 = vst [vmem:[#allocation3 + $0xa8] sm:$0xff] %v1514
        %2262 = vst [vmem:[#allocation3 + $0xf0] sm:$0xff] %v1515
        %2263 = vst [vmem:[#allocation3 + $0x138] sm:$0xff] %v1516
        %2264 = vst [vmem:[#allocation3 + $0x180] sm:$0xff] %v1517
        %2265 = vst [vmem:[#allocation3 + $0x1c8] sm:$0xff] %v1518
        %2266 = vst [vmem:[#allocation3 + $0x210] sm:$0xff] %v1519
        %2267 = vst [vmem:[#allocation3 + $0x258] sm:$0xff] %v1520
        %2268 = vst [vmem:[#allocation3 + $0x2a0] sm:$0xff] %v1521
        %2269 = vst [vmem:[#allocation3 + $0x2e8] sm:$0xff] %v1522
        %2270 = vst [vmem:[#allocation3 + $0x330] sm:$0xff] %v1523
        %2271 = vst [vmem:[#allocation3 + $0x378] sm:$0xff] %v1524
        %2272 = vst [vmem:[#allocation3 + $0x3c0] sm:$0xff] %v1525
        %2273 = vst [vmem:[#allocation3 + $0x408] sm:$0xff] %v1526
        %2274 = vst [vmem:[#allocation3 + $0x450] sm:$0xff] %v2257
        %v2276 = vshrl.u32 %v1407, 16
        %v2278 = vrot.slane %v2276, 4
        %v2279 = vshll.u32 %v1407, 16
        %v2281 = vrot.slane %v2279, 5
        %v2282 = vor.u32 %v2278, %v2281
        %v2283 = vrot.slane %v2282, 4
        %v2285 = vshll.u32 %v1408, 16
        %v2287 = vrot.slane %v2285, 5
        %v2288 = vsel %vm1561, %v2283, %v2287
        %v2289 = vshrl.u32 %v1408, 16
        %v2291 = vrot.slane %v2289, 4
        %v2292 = vor.u32 %v2291, %v2287
        %v2293 = vrot.slane %v2292, 4
        %v2295 = vshll.u32 %v1427, 16
        %v2297 = vrot.slane %v2295, 5
        %v2298 = vsel %vm1561, %v2293, %v2297
        %v2299 = vunpack.c.l.b16 %v2288
        %v2300 = vunpack.c.l.b16 %v2298
        %v2301 = vpack.c.b16 %v2300, %v2299
        %2303 = vst [vmem:[#allocation3 + $0x20] sm:$0xff] %v1979
        %2304 = vst [vmem:[#allocation3 + $0x68] sm:$0xff] %v1980
        %2305 = vst [vmem:[#allocation3 + $0xb0] sm:$0xff] %v1981
        %2306 = vst [vmem:[#allocation3 + $0xf8] sm:$0xff] %v1982
        %2307 = vst [vmem:[#allocation3 + $0x140] sm:$0xff] %v1983
        %2308 = vst [vmem:[#allocation3 + $0x188] sm:$0xff] %v1984
        %2309 = vst [vmem:[#allocation3 + $0x1d0] sm:$0xff] %v1985
        %2310 = vst [vmem:[#allocation3 + $0x218] sm:$0xff] %v1986
        %2311 = vst [vmem:[#allocation3 + $0x260] sm:$0xff] %v1987
        %2312 = vst [vmem:[#allocation3 + $0x2a8] sm:$0xff] %v1988
        %2313 = vst [vmem:[#allocation3 + $0x2f0] sm:$0xff] %v1989
        %2314 = vst [vmem:[#allocation3 + $0x338] sm:$0xff] %v1990
        %2315 = vst [vmem:[#allocation3 + $0x380] sm:$0xff] %v1991
        %2316 = vst [vmem:[#allocation3 + $0x3c8] sm:$0xff] %v1992
        %2317 = vst [vmem:[#allocation3 + $0x410] sm:$0xff] %v1993
        %2318 = vst [vmem:[#allocation3 + $0x458] sm:$0xff] %v2301
        %v2321 = vrot.slane %v1445, 5
        %v2322 = vrot.slane %v2321, 4
        %v2323 = vrot.slane %v1408, 5
        %v2324 = vsel %vm2060, %v2322, %v2323
        %v2325 = vrot.slane %v2323, 4
        %v2326 = vrot.slane %v1427, 5
        %v2327 = vsel %vm2060, %v2325, %v2326
        %v2328 = vunpack.c.l.b16 %v2324
        %v2329 = vunpack.c.l.b16 %v2327
        %v2330 = vpack.c.b16 %v2329, %v2328
        %2332 = vst [vmem:[#allocation3 + $0x28] sm:$0xff] %v2206
        %2333 = vst [vmem:[#allocation3 + $0x70] sm:$0xff] %v2207
        %2334 = vst [vmem:[#allocation3 + $0xb8] sm:$0xff] %v2208
        %2335 = vst [vmem:[#allocation3 + $0x100] sm:$0xff] %v2209
        %2336 = vst [vmem:[#allocation3 + $0x148] sm:$0xff] %v2210
        %2337 = vst [vmem:[#allocation3 + $0x190] sm:$0xff] %v2211
        %2338 = vst [vmem:[#allocation3 + $0x1d8] sm:$0xff] %v2212
        %2339 = vst [vmem:[#allocation3 + $0x220] sm:$0xff] %v2213
        %2340 = vst [vmem:[#allocation3 + $0x268] sm:$0xff] %v2214
        %2341 = vst [vmem:[#allocation3 + $0x2b0] sm:$0xff] %v2215
        %2342 = vst [vmem:[#allocation3 + $0x2f8] sm:$0xff] %v2216
        %2343 = vst [vmem:[#allocation3 + $0x340] sm:$0xff] %v2217
        %2344 = vst [vmem:[#allocation3 + $0x388] sm:$0xff] %v2218
        %2345 = vst [vmem:[#allocation3 + $0x3d0] sm:$0xff] %v2219
        %2346 = vst [vmem:[#allocation3 + $0x418] sm:$0xff] %v2220
        %2347 = vst [vmem:[#allocation3 + $0x460] sm:$0xff] %v2330
        %v2350 = vunpack.c.l.b16 %v1409
        %v2351 = vunpack.c.l.b16 %v1410
        %v2352 = vpack.c.b16 %v2351, %v2350
        %2354 = vst [vmem:[#allocation3 + $0x30] sm:$0xff] %v1513
        %2355 = vst [vmem:[#allocation3 + $0x78] sm:$0xff] %v1514
        %2356 = vst [vmem:[#allocation3 + $0xc0] sm:$0xff] %v1515
        %2357 = vst [vmem:[#allocation3 + $0x108] sm:$0xff] %v1516
        %2358 = vst [vmem:[#allocation3 + $0x150] sm:$0xff] %v1517
        %2359 = vst [vmem:[#allocation3 + $0x198] sm:$0xff] %v1518
        %2360 = vst [vmem:[#allocation3 + $0x1e0] sm:$0xff] %v1519
        %2361 = vst [vmem:[#allocation3 + $0x228] sm:$0xff] %v1520
        %2362 = vst [vmem:[#allocation3 + $0x270] sm:$0xff] %v1521
        %2363 = vst [vmem:[#allocation3 + $0x2b8] sm:$0xff] %v1522
        %2364 = vst [vmem:[#allocation3 + $0x300] sm:$0xff] %v1523
        %2365 = vst [vmem:[#allocation3 + $0x348] sm:$0xff] %v1524
        %2366 = vst [vmem:[#allocation3 + $0x390] sm:$0xff] %v1525
        %2367 = vst [vmem:[#allocation3 + $0x3d8] sm:$0xff] %v1526
        %2368 = vst [vmem:[#allocation3 + $0x420] sm:$0xff] %v2257
        %2369 = vst [vmem:[#allocation3 + $0x468] sm:$0xff] %v2352
        %v2371 = vshrl.u32 %v1409, 16
        %v2373 = vrot.slane %v2371, 4
        %v2374 = vshll.u32 %v1409, 16
        %v2376 = vrot.slane %v2374, 5
        %v2377 = vor.u32 %v2373, %v2376
        %v2378 = vrot.slane %v2377, 4
        %v2380 = vshll.u32 %v1410, 16
        %v2382 = vrot.slane %v2380, 5
        %v2383 = vsel %vm1561, %v2378, %v2382
        %v2384 = vshrl.u32 %v1410, 16
        %v2386 = vrot.slane %v2384, 4
        %v2387 = vor.u32 %v2386, %v2382
        %v2388 = vrot.slane %v2387, 4
        %v2390 = vshll.u32 %v1428, 16
        %v2392 = vrot.slane %v2390, 5
        %v2393 = vsel %vm1561, %v2388, %v2392
        %v2394 = vunpack.c.l.b16 %v2383
        %v2395 = vunpack.c.l.b16 %v2393
        %v2396 = vpack.c.b16 %v2395, %v2394
        %2398 = vst [vmem:[#allocation3 + $0x38] sm:$0xff] %v1980
        %2399 = vst [vmem:[#allocation3 + $0x80] sm:$0xff] %v1981
        %2400 = vst [vmem:[#allocation3 + $0xc8] sm:$0xff] %v1982
        %2401 = vst [vmem:[#allocation3 + $0x110] sm:$0xff] %v1983
        %2402 = vst [vmem:[#allocation3 + $0x158] sm:$0xff] %v1984
        %2403 = vst [vmem:[#allocation3 + $0x1a0] sm:$0xff] %v1985
        %2404 = vst [vmem:[#allocation3 + $0x1e8] sm:$0xff] %v1986
        %2405 = vst [vmem:[#allocation3 + $0x230] sm:$0xff] %v1987
        %2406 = vst [vmem:[#allocation3 + $0x278] sm:$0xff] %v1988
        %2407 = vst [vmem:[#allocation3 + $0x2c0] sm:$0xff] %v1989
        %2408 = vst [vmem:[#allocation3 + $0x308] sm:$0xff] %v1990
        %2409 = vst [vmem:[#allocation3 + $0x350] sm:$0xff] %v1991
        %2410 = vst [vmem:[#allocation3 + $0x398] sm:$0xff] %v1992
        %2411 = vst [vmem:[#allocation3 + $0x3e0] sm:$0xff] %v1993
        %2412 = vst [vmem:[#allocation3 + $0x428] sm:$0xff] %v2301
        %2413 = vst [vmem:[#allocation3 + $0x470] sm:$0xff] %v2396
        %v2416 = vrot.slane %v1446, 5
        %v2417 = vrot.slane %v2416, 4
        %v2418 = vrot.slane %v1410, 5
        %v2419 = vsel %vm2060, %v2417, %v2418
        %v2420 = vrot.slane %v2418, 4
        %v2421 = vrot.slane %v1428, 5
        %v2422 = vsel %vm2060, %v2420, %v2421
        %v2423 = vunpack.c.l.b16 %v2419
        %v2424 = vunpack.c.l.b16 %v2422
        %v2425 = vpack.c.b16 %v2424, %v2423
        %2427 = vst [vmem:[#allocation3 + $0x40] sm:$0xff] %v2207
        %2428 = vst [vmem:[#allocation3 + $0x88] sm:$0xff] %v2208
        %2429 = vst [vmem:[#allocation3 + $0xd0] sm:$0xff] %v2209
        %2430 = vst [vmem:[#allocation3 + $0x118] sm:$0xff] %v2210
        %2431 = vst [vmem:[#allocation3 + $0x160] sm:$0xff] %v2211
        %2432 = vst [vmem:[#allocation3 + $0x1a8] sm:$0xff] %v2212
        %2433 = vst [vmem:[#allocation3 + $0x1f0] sm:$0xff] %v2213
        %2434 = vst [vmem:[#allocation3 + $0x238] sm:$0xff] %v2214
        %2435 = vst [vmem:[#allocation3 + $0x280] sm:$0xff] %v2215
        %2436 = vst [vmem:[#allocation3 + $0x2c8] sm:$0xff] %v2216
        %2437 = vst [vmem:[#allocation3 + $0x310] sm:$0xff] %v2217
        %2438 = vst [vmem:[#allocation3 + $0x358] sm:$0xff] %v2218
        %2439 = vst [vmem:[#allocation3 + $0x3a0] sm:$0xff] %v2219
        %2440 = vst [vmem:[#allocation3 + $0x3e8] sm:$0xff] %v2220
        %2441 = vst [vmem:[#allocation3 + $0x430] sm:$0xff] %v2330
        %2442 = vst [vmem:[#allocation3 + $0x478] sm:$0xff] %v2425
        %v2443 = vld [vmem:[#allocation3] sm:$0xff]
        %v2444 = vld [vmem:[#allocation3 + $0x8] sm:$0xff]
        %v2445 = vld [vmem:[#allocation3 + $0x10] sm:$0xff]
        %v2446 = vld [vmem:[#allocation3 + $0x18] sm:$0xff]
        %v2447 = vld [vmem:[#allocation3 + $0x20] sm:$0xff]
        %v2448 = vld [vmem:[#allocation3 + $0x28] sm:$0xff]
        %v2449 = vld [vmem:[#allocation3 + $0x30] sm:$0xff]
        %v2450 = vld [vmem:[#allocation3 + $0x38] sm:$0xff]
        %v2451 = vld [vmem:[#allocation3 + $0x40] sm:$0xff]
        %v2452 = vld [vmem:[#allocation3 + $0x48] sm:$0xff]
        %v2453 = vld [vmem:[#allocation3 + $0x50] sm:$0xff]
        %v2454 = vld [vmem:[#allocation3 + $0x58] sm:$0xff]
        %v2455 = vld [vmem:[#allocation3 + $0x60] sm:$0xff]
        %v2456 = vld [vmem:[#allocation3 + $0x68] sm:$0xff]
        %v2457 = vld [vmem:[#allocation3 + $0x70] sm:$0xff]
        %v2458 = vld [vmem:[#allocation3 + $0x78] sm:$0xff]
        %v2459 = vld [vmem:[#allocation3 + $0x80] sm:$0xff]
        %v2460 = vld [vmem:[#allocation3 + $0x88] sm:$0xff]
        %v2461 = vld [vmem:[#allocation3 + $0x90] sm:$0xff]
        %v2462 = vld [vmem:[#allocation3 + $0x98] sm:$0xff]
        %v2463 = vld [vmem:[#allocation3 + $0xa0] sm:$0xff]
        %v2464 = vld [vmem:[#allocation3 + $0xa8] sm:$0xff]
        %v2465 = vld [vmem:[#allocation3 + $0xb0] sm:$0xff]
        %v2466 = vld [vmem:[#allocation3 + $0xb8] sm:$0xff]
        %v2467 = vld [vmem:[#allocation3 + $0xc0] sm:$0xff]
        %v2468 = vld [vmem:[#allocation3 + $0xc8] sm:$0xff]
        %v2469 = vld [vmem:[#allocation3 + $0xd0] sm:$0xff]
        %v2470 = vld [vmem:[#allocation3 + $0xd8] sm:$0xff]
        %v2471 = vld [vmem:[#allocation3 + $0xe0] sm:$0xff]
        %v2472 = vld [vmem:[#allocation3 + $0xe8] sm:$0xff]
        %v2473 = vld [vmem:[#allocation3 + $0xf0] sm:$0xff]
        %v2474 = vld [vmem:[#allocation3 + $0xf8] sm:$0xff]
        %v2475 = vld [vmem:[#allocation3 + $0x100] sm:$0xff]
        %v2476 = vld [vmem:[#allocation3 + $0x108] sm:$0xff]
        %v2477 = vld [vmem:[#allocation3 + $0x110] sm:$0xff]
        %v2478 = vld [vmem:[#allocation3 + $0x118] sm:$0xff]
        %v2479 = vld [vmem:[#allocation3 + $0x120] sm:$0xff]
        %v2480 = vld [vmem:[#allocation3 + $0x128] sm:$0xff]
        %v2481 = vld [vmem:[#allocation3 + $0x130] sm:$0xff]
        %v2482 = vld [vmem:[#allocation3 + $0x138] sm:$0xff]
        %v2483 = vld [vmem:[#allocation3 + $0x140] sm:$0xff]
        %v2484 = vld [vmem:[#allocation3 + $0x148] sm:$0xff]
        %v2485 = vld [vmem:[#allocation3 + $0x150] sm:$0xff]
        %v2486 = vld [vmem:[#allocation3 + $0x158] sm:$0xff]
        %v2487 = vld [vmem:[#allocation3 + $0x160] sm:$0xff]
        %v2488 = vld [vmem:[#allocation3 + $0x168] sm:$0xff]
        %v2489 = vld [vmem:[#allocation3 + $0x170] sm:$0xff]
        %v2490 = vld [vmem:[#allocation3 + $0x178] sm:$0xff]
        %v2491 = vld [vmem:[#allocation3 + $0x180] sm:$0xff]
        %v2492 = vld [vmem:[#allocation3 + $0x188] sm:$0xff]
        %v2493 = vld [vmem:[#allocation3 + $0x190] sm:$0xff]
        %v2494 = vld [vmem:[#allocation3 + $0x198] sm:$0xff]
        %v2495 = vld [vmem:[#allocation3 + $0x1a0] sm:$0xff]
        %v2496 = vld [vmem:[#allocation3 + $0x1a8] sm:$0xff]
        %v2497 = vld [vmem:[#allocation3 + $0x1b0] sm:$0xff]
        %v2498 = vld [vmem:[#allocation3 + $0x1b8] sm:$0xff]
        %v2499 = vld [vmem:[#allocation3 + $0x1c0] sm:$0xff]
        %v2500 = vld [vmem:[#allocation3 + $0x1c8] sm:$0xff]
        %v2501 = vld [vmem:[#allocation3 + $0x1d0] sm:$0xff]
        %v2502 = vld [vmem:[#allocation3 + $0x1d8] sm:$0xff]
        %v2503 = vld [vmem:[#allocation3 + $0x1e0] sm:$0xff]
        %v2504 = vld [vmem:[#allocation3 + $0x1e8] sm:$0xff]
        %v2505 = vld [vmem:[#allocation3 + $0x1f0] sm:$0xff]
        %v2506 = vld [vmem:[#allocation3 + $0x1f8] sm:$0xff]
        %v2507 = vld [vmem:[#allocation3 + $0x200] sm:$0xff]
        %v2508 = vld [vmem:[#allocation3 + $0x208] sm:$0xff]
        %v2509 = vld [vmem:[#allocation3 + $0x210] sm:$0xff]
        %v2510 = vld [vmem:[#allocation3 + $0x218] sm:$0xff]
        %v2511 = vld [vmem:[#allocation3 + $0x220] sm:$0xff]
        %v2512 = vld [vmem:[#allocation3 + $0x228] sm:$0xff]
        %v2513 = vld [vmem:[#allocation3 + $0x230] sm:$0xff]
        %v2514 = vld [vmem:[#allocation3 + $0x238] sm:$0xff]
        %v2515 = vld [vmem:[#allocation3 + $0x240] sm:$0xff]
        %v2516 = vld [vmem:[#allocation3 + $0x248] sm:$0xff]
        %v2517 = vld [vmem:[#allocation3 + $0x250] sm:$0xff]
        %v2518 = vld [vmem:[#allocation3 + $0x258] sm:$0xff]
        %v2519 = vld [vmem:[#allocation3 + $0x260] sm:$0xff]
        %v2520 = vld [vmem:[#allocation3 + $0x268] sm:$0xff]
        %v2521 = vld [vmem:[#allocation3 + $0x270] sm:$0xff]
        %v2522 = vld [vmem:[#allocation3 + $0x278] sm:$0xff]
        %v2523 = vld [vmem:[#allocation3 + $0x280] sm:$0xff]
        %v2524 = vld [vmem:[#allocation3 + $0x288] sm:$0xff]
        %v2525 = vld [vmem:[#allocation3 + $0x290] sm:$0xff]
        %v2526 = vld [vmem:[#allocation3 + $0x298] sm:$0xff]
        %v2527 = vld [vmem:[#allocation3 + $0x2a0] sm:$0xff]
        %v2528 = vld [vmem:[#allocation3 + $0x2a8] sm:$0xff]
        %v2529 = vld [vmem:[#allocation3 + $0x2b0] sm:$0xff]
        %v2530 = vld [vmem:[#allocation3 + $0x2b8] sm:$0xff]
        %v2531 = vld [vmem:[#allocation3 + $0x2c0] sm:$0xff]
        %v2532 = vld [vmem:[#allocation3 + $0x2c8] sm:$0xff]
        %v2533 = vld [vmem:[#allocation3 + $0x2d0] sm:$0xff]
        %v2534 = vld [vmem:[#allocation3 + $0x2d8] sm:$0xff]
        %v2535 = vld [vmem:[#allocation3 + $0x2e0] sm:$0xff]
        %v2536 = vld [vmem:[#allocation3 + $0x2e8] sm:$0xff]
        %v2537 = vld [vmem:[#allocation3 + $0x2f0] sm:$0xff]
        %v2538 = vld [vmem:[#allocation3 + $0x2f8] sm:$0xff]
        %v2539 = vld [vmem:[#allocation3 + $0x300] sm:$0xff]
        %v2540 = vld [vmem:[#allocation3 + $0x308] sm:$0xff]
        %v2541 = vld [vmem:[#allocation3 + $0x310] sm:$0xff]
        %v2542 = vld [vmem:[#allocation3 + $0x318] sm:$0xff]
        %v2543 = vld [vmem:[#allocation3 + $0x320] sm:$0xff]
        %v2544 = vld [vmem:[#allocation3 + $0x328] sm:$0xff]
        %v2545 = vld [vmem:[#allocation3 + $0x330] sm:$0xff]
        %v2546 = vld [vmem:[#allocation3 + $0x338] sm:$0xff]
        %v2547 = vld [vmem:[#allocation3 + $0x340] sm:$0xff]
        %v2548 = vld [vmem:[#allocation3 + $0x348] sm:$0xff]
        %v2549 = vld [vmem:[#allocation3 + $0x350] sm:$0xff]
        %v2550 = vld [vmem:[#allocation3 + $0x358] sm:$0xff]
        %v2551 = vld [vmem:[#allocation3 + $0x360] sm:$0xff]
        %v2552 = vld [vmem:[#allocation3 + $0x368] sm:$0xff]
        %v2553 = vld [vmem:[#allocation3 + $0x370] sm:$0xff]
        %v2554 = vld [vmem:[#allocation3 + $0x378] sm:$0xff]
        %v2555 = vld [vmem:[#allocation3 + $0x380] sm:$0xff]
        %v2556 = vld [vmem:[#allocation3 + $0x388] sm:$0xff]
        %v2557 = vld [vmem:[#allocation3 + $0x390] sm:$0xff]
        %v2558 = vld [vmem:[#allocation3 + $0x398] sm:$0xff]
        %v2559 = vld [vmem:[#allocation3 + $0x3a0] sm:$0xff]
        %v2560 = vld [vmem:[#allocation3 + $0x3a8] sm:$0xff]
        %v2561 = vld [vmem:[#allocation3 + $0x3b0] sm:$0xff]
        %v2562 = vld [vmem:[#allocation3 + $0x3b8] sm:$0xff]
        %v2563 = vld [vmem:[#allocation3 + $0x3c0] sm:$0xff]
        %v2564 = vld [vmem:[#allocation3 + $0x3c8] sm:$0xff]
        %v2565 = vld [vmem:[#allocation3 + $0x3d0] sm:$0xff]
        %v2566 = vld [vmem:[#allocation3 + $0x3d8] sm:$0xff]
        %v2567 = vld [vmem:[#allocation3 + $0x3e0] sm:$0xff]
        %v2568 = vld [vmem:[#allocation3 + $0x3e8] sm:$0xff]
        %v2569 = vld [vmem:[#allocation3 + $0x3f0] sm:$0xff]
        %v2570 = vld [vmem:[#allocation3 + $0x3f8] sm:$0xff]
        %v2571 = vld [vmem:[#allocation3 + $0x400] sm:$0xff]
        %v2572 = vld [vmem:[#allocation3 + $0x408] sm:$0xff]
        %v2573 = vld [vmem:[#allocation3 + $0x410] sm:$0xff]
        %v2574 = vld [vmem:[#allocation3 + $0x418] sm:$0xff]
        %v2575 = vld [vmem:[#allocation3 + $0x420] sm:$0xff]
        %v2576 = vld [vmem:[#allocation3 + $0x428] sm:$0xff]
        %v2577 = vld [vmem:[#allocation3 + $0x430] sm:$0xff]
        %v2578 = vld [vmem:[#allocation3 + $0x438] sm:$0xff]
        %v2579 = vld [vmem:[#allocation3 + $0x440] sm:$0xff]
        %v2580 = vld [vmem:[#allocation3 + $0x448] sm:$0xff]
        %v2581 = vld [vmem:[#allocation3 + $0x450] sm:$0xff]
        %v2582 = vld [vmem:[#allocation3 + $0x458] sm:$0xff]
        %v2583 = vld [vmem:[#allocation3 + $0x460] sm:$0xff]
        %v2584 = vld [vmem:[#allocation3 + $0x468] sm:$0xff]
        %v2585 = vld [vmem:[#allocation3 + $0x470] sm:$0xff]
        %v2586 = vld [vmem:[#allocation3 + $0x478] sm:$0xff]
        %v2587 = vld [vmem:[#allocation9] sm:$0xf]
        %v2588 = vld [vmem:[#allocation9 + $0x4] sm:$0xf]
        %v2589 = vld [vmem:[#allocation9 + $0x8] sm:$0xf]
        %v2590 = vld [vmem:[#allocation9 + $0xc] sm:$0xf]
        %v2591 = vld [vmem:[#allocation9 + $0x10] sm:$0xf]
        %v2592 = vld [vmem:[#allocation9 + $0x14] sm:$0xf]
        %v2593 = vld [vmem:[#allocation9 + $0x18] sm:$0xf]
        %v2594 = vld [vmem:[#allocation9 + $0x1c] sm:$0xf]
        %v2595 = vld [vmem:[#allocation9 + $0x20] sm:$0xf]
        %v2596 = vld [vmem:[#allocation9 + $0x24] sm:$0xf]
        %v2597 = vld [vmem:[#allocation9 + $0x28] sm:$0xf]
        %v2598 = vld [vmem:[#allocation9 + $0x2c] sm:$0xf]
        %v2599 = vld [vmem:[#allocation9 + $0x30] sm:$0xf]
        %v2600 = vld [vmem:[#allocation9 + $0x34] sm:$0xf]
        %v2601 = vld [vmem:[#allocation9 + $0x38] sm:$0xf]
        %v2602 = vld [vmem:[#allocation9 + $0x3c] sm:$0xf]
        %v2603 = vld [vmem:[#allocation9 + $0x40] sm:$0xf]
        %v2604 = vld [vmem:[#allocation9 + $0x44] sm:$0xf]
        %v2605 = vld [vmem:[#allocation9 + $0x48] sm:$0xf]
        %v2606 = vld [vmem:[#allocation9 + $0x4c] sm:$0xf]
        %v2607 = vld [vmem:[#allocation9 + $0x50] sm:$0xf]
        %v2608 = vld [vmem:[#allocation9 + $0x54] sm:$0xf]
        %v2609 = vld [vmem:[#allocation9 + $0x58] sm:$0xf]
        %v2610 = vld [vmem:[#allocation9 + $0x5c] sm:$0xf]
        %v2611 = vld [vmem:[#allocation9 + $0x60] sm:$0xf]
        %v2612 = vld [vmem:[#allocation9 + $0x64] sm:$0xf]
        %v2613 = vld [vmem:[#allocation9 + $0x68] sm:$0xf]
        %v2614 = vld [vmem:[#allocation9 + $0x6c] sm:$0xf]
        %v2615 = vld [vmem:[#allocation9 + $0x70] sm:$0xf]
        %v2616 = vld [vmem:[#allocation9 + $0x74] sm:$0xf]
        %v2617 = vld [vmem:[#allocation9 + $0x78] sm:$0xf]
        %v2618 = vld [vmem:[#allocation9 + $0x7c] sm:$0xf]
        %v2619 = vld [vmem:[#allocation9 + $0x80] sm:$0xf]
        %v2620 = vld [vmem:[#allocation9 + $0x84] sm:$0xf]
        %v2621 = vld [vmem:[#allocation9 + $0x88] sm:$0xf]
        %v2622 = vld [vmem:[#allocation9 + $0x8c] sm:$0xf]
        %v2623 = vld [vmem:[#allocation9 + $0x90] sm:$0xf]
        %v2624 = vld [vmem:[#allocation9 + $0x94] sm:$0xf]
        %v2625 = vld [vmem:[#allocation9 + $0x98] sm:$0xf]
        %v2626 = vld [vmem:[#allocation9 + $0x9c] sm:$0xf]
        %v2627 = vld [vmem:[#allocation9 + $0xa0] sm:$0xf]
        %v2628 = vld [vmem:[#allocation9 + $0xa4] sm:$0xf]
        %v2629 = vld [vmem:[#allocation9 + $0xa8] sm:$0xf]
        %v2630 = vld [vmem:[#allocation9 + $0xac] sm:$0xf]
        %v2631 = vld [vmem:[#allocation9 + $0xb0] sm:$0xf]
        %v2632 = vld [vmem:[#allocation9 + $0xb4] sm:$0xf]
        %v2633 = vld [vmem:[#allocation9 + $0xb8] sm:$0xf]
        %v2634 = vld [vmem:[#allocation9 + $0xbc] sm:$0xf]
        %v2635 = vld [vmem:[#allocation9 + $0xc0] sm:$0xf]
        %v2636 = vld [vmem:[#allocation9 + $0xc4] sm:$0xf]
        %v2637 = vld [vmem:[#allocation9 + $0xc8] sm:$0xf]
        %v2638 = vld [vmem:[#allocation9 + $0xcc] sm:$0xf]
        %v2639 = vld [vmem:[#allocation9 + $0xd0] sm:$0xf]
        %v2640 = vld [vmem:[#allocation9 + $0xd4] sm:$0xf]
        %v2641 = vld [vmem:[#allocation9 + $0xd8] sm:$0xf]
        %v2642 = vld [vmem:[#allocation9 + $0xdc] sm:$0xf]
        %v2643 = vld [vmem:[#allocation9 + $0xe0] sm:$0xf]
        %v2644 = vld [vmem:[#allocation9 + $0xe4] sm:$0xf]
        %v2645 = vld [vmem:[#allocation9 + $0xe8] sm:$0xf]
        %v2646 = vld [vmem:[#allocation9 + $0xec] sm:$0xf]
        %v2647 = vld [vmem:[#allocation9 + $0xf0] sm:$0xf]
        %v2648 = vld [vmem:[#allocation9 + $0xf4] sm:$0xf]
        %v2649 = vld [vmem:[#allocation9 + $0xf8] sm:$0xf]
        %v2650 = vld [vmem:[#allocation9 + $0xfc] sm:$0xf]
        %v2651 = vld [vmem:[#allocation9 + $0x100] sm:$0xf]
        %v2652 = vld [vmem:[#allocation9 + $0x104] sm:$0xf]
        %v2653 = vld [vmem:[#allocation9 + $0x108] sm:$0xf]
        %v2654 = vld [vmem:[#allocation9 + $0x10c] sm:$0xf]
        %v2655 = vld [vmem:[#allocation9 + $0x110] sm:$0xf]
        %v2656 = vld [vmem:[#allocation9 + $0x114] sm:$0xf]
        %v2657 = vld [vmem:[#allocation9 + $0x118] sm:$0xf]
        %v2658 = vld [vmem:[#allocation9 + $0x11c] sm:$0xf]
        %v2659 = vld [vmem:[#allocation9 + $0x120] sm:$0xf]
        %v2660 = vld [vmem:[#allocation9 + $0x124] sm:$0xf]
        %v2661 = vld [vmem:[#allocation9 + $0x128] sm:$0xf]
        %v2662 = vld [vmem:[#allocation9 + $0x12c] sm:$0xf]
        %v2663 = vld [vmem:[#allocation9 + $0x130] sm:$0xf]
        %v2664 = vld [vmem:[#allocation9 + $0x134] sm:$0xf]
        %v2665 = vld [vmem:[#allocation9 + $0x138] sm:$0xf]
        %v2666 = vld [vmem:[#allocation9 + $0x13c] sm:$0xf]
        %v2667 = vld [vmem:[#allocation9 + $0x140] sm:$0xf]
        %v2668 = vld [vmem:[#allocation9 + $0x144] sm:$0xf]
        %v2669 = vld [vmem:[#allocation9 + $0x148] sm:$0xf]
        %v2670 = vld [vmem:[#allocation9 + $0x14c] sm:$0xf]
        %v2671 = vld [vmem:[#allocation9 + $0x150] sm:$0xf]
        %v2672 = vld [vmem:[#allocation9 + $0x154] sm:$0xf]
        %v2673 = vld [vmem:[#allocation9 + $0x158] sm:$0xf]
        %v2674 = vld [vmem:[#allocation9 + $0x15c] sm:$0xf]
        %v2675 = vld [vmem:[#allocation9 + $0x160] sm:$0xf]
        %v2676 = vld [vmem:[#allocation9 + $0x164] sm:$0xf]
        %v2677 = vld [vmem:[#allocation9 + $0x168] sm:$0xf]
        %v2678 = vld [vmem:[#allocation9 + $0x16c] sm:$0xf]
        %v2679 = vld [vmem:[#allocation9 + $0x170] sm:$0xf]
        %v2680 = vld [vmem:[#allocation9 + $0x174] sm:$0xf]
        %v2681 = vld [vmem:[#allocation9 + $0x178] sm:$0xf]
        %v2682 = vld [vmem:[#allocation9 + $0x17c] sm:$0xf]
        %v2683 = vld [vmem:[#allocation9 + $0x180] sm:$0xf]
        %v2684 = vld [vmem:[#allocation9 + $0x184] sm:$0xf]
        %v2685 = vld [vmem:[#allocation9 + $0x188] sm:$0xf]
        %v2686 = vld [vmem:[#allocation9 + $0x18c] sm:$0xf]
        %v2687 = vld [vmem:[#allocation9 + $0x190] sm:$0xf]
        %v2688 = vld [vmem:[#allocation9 + $0x194] sm:$0xf]
        %v2689 = vld [vmem:[#allocation9 + $0x198] sm:$0xf]
        %v2690 = vld [vmem:[#allocation9 + $0x19c] sm:$0xf]
        %v2691 = vld [vmem:[#allocation9 + $0x1a0] sm:$0xf]
        %v2692 = vld [vmem:[#allocation9 + $0x1a4] sm:$0xf]
        %v2693 = vld [vmem:[#allocation9 + $0x1a8] sm:$0xf]
        %v2694 = vld [vmem:[#allocation9 + $0x1ac] sm:$0xf]
        %v2695 = vld [vmem:[#allocation9 + $0x1b0] sm:$0xf]
        %v2696 = vld [vmem:[#allocation9 + $0x1b4] sm:$0xf]
        %v2697 = vld [vmem:[#allocation9 + $0x1b8] sm:$0xf]
        %v2698 = vld [vmem:[#allocation9 + $0x1bc] sm:$0xf]
        %v2699 = vld [vmem:[#allocation9 + $0x1c0] sm:$0xf]
        %v2700 = vld [vmem:[#allocation9 + $0x1c4] sm:$0xf]
        %v2701 = vld [vmem:[#allocation9 + $0x1c8] sm:$0xf]
        %v2702 = vld [vmem:[#allocation9 + $0x1cc] sm:$0xf]
        %v2703 = vld [vmem:[#allocation9 + $0x1d0] sm:$0xf]
        %v2704 = vld [vmem:[#allocation9 + $0x1d4] sm:$0xf]
        %v2705 = vld [vmem:[#allocation9 + $0x1d8] sm:$0xf]
        %v2706 = vld [vmem:[#allocation9 + $0x1dc] sm:$0xf]
        %v2707 = vld [vmem:[#allocation9 + $0x1e0] sm:$0xf]
        %v2708 = vld [vmem:[#allocation9 + $0x1e4] sm:$0xf]
        %v2709 = vld [vmem:[#allocation9 + $0x1e8] sm:$0xf]
        %v2710 = vld [vmem:[#allocation9 + $0x1ec] sm:$0xf]
        %v2711 = vld [vmem:[#allocation9 + $0x1f0] sm:$0xf]
        %v2712 = vld [vmem:[#allocation9 + $0x1f4] sm:$0xf]
        %v2713 = vld [vmem:[#allocation9 + $0x1f8] sm:$0xf]
        %v2714 = vld [vmem:[#allocation9 + $0x1fc] sm:$0xf]
        %v2715 = vld [vmem:[#allocation9 + $0x200] sm:$0xf]
        %v2716 = vld [vmem:[#allocation9 + $0x204] sm:$0xf]
        %v2717 = vld [vmem:[#allocation9 + $0x208] sm:$0xf]
        %v2718 = vld [vmem:[#allocation9 + $0x20c] sm:$0xf]
        %v2719 = vld [vmem:[#allocation9 + $0x210] sm:$0xf]
        %v2720 = vld [vmem:[#allocation9 + $0x214] sm:$0xf]
        %v2721 = vld [vmem:[#allocation9 + $0x218] sm:$0xf]
        %v2722 = vld [vmem:[#allocation9 + $0x21c] sm:$0xf]
        %v2723 = vld [vmem:[#allocation9 + $0x220] sm:$0xf]
        %v2724 = vld [vmem:[#allocation9 + $0x224] sm:$0xf]
        %v2725 = vld [vmem:[#allocation9 + $0x228] sm:$0xf]
        %v2726 = vld [vmem:[#allocation9 + $0x22c] sm:$0xf]
        %v2727 = vld [vmem:[#allocation9 + $0x230] sm:$0xf]
        %v2728 = vld [vmem:[#allocation9 + $0x234] sm:$0xf]
        %v2729 = vld [vmem:[#allocation9 + $0x238] sm:$0xf]
        %v2730 = vld [vmem:[#allocation9 + $0x23c] sm:$0xf]
        %v2731 = vld [vmem:[%s4] sm:$0x1]
        %v2733 = vlaneseq
        %v2734 = vshrl.u32 %v2733, 7
        %v2735 = vsub.s32 0, %v2734
        %v2736 = vrot.slane %v2731, %v2735
        %v2882 = vunpack.c.l.b16 %v2587
        %v2883 = vunpack.c.l.b16 %v2588
        %v2884 = vunpack.c.l.b16 %v2589
        %v2885 = vunpack.c.l.b16 %v2590
        %v2886 = vunpack.c.l.b16 %v2591
        %v2887 = vunpack.c.l.b16 %v2592
        %v2888 = vunpack.c.l.b16 %v2593
        %v2889 = vunpack.c.l.b16 %v2594
        %v2890 = vunpack.c.l.b16 %v2595
        %v2891 = vunpack.c.l.b16 %v2596
        %v2892 = vunpack.c.l.b16 %v2597
        %v2893 = vunpack.c.l.b16 %v2598
        %v2894 = vunpack.c.l.b16 %v2599
        %v2895 = vunpack.c.l.b16 %v2600
        %v2896 = vunpack.c.l.b16 %v2601
        %v2897 = vunpack.c.l.b16 %v2602
        %v2898 = vunpack.c.l.b16 %v2603
        %v2899 = vunpack.c.l.b16 %v2604
        %v2900 = vunpack.c.l.b16 %v2605
        %v2901 = vunpack.c.l.b16 %v2606
        %v2902 = vunpack.c.l.b16 %v2607
        %v2903 = vunpack.c.l.b16 %v2608
        %v2904 = vunpack.c.l.b16 %v2609
        %v2905 = vunpack.c.l.b16 %v2610
        %v2906 = vunpack.c.l.b16 %v2611
        %v2907 = vunpack.c.l.b16 %v2612
        %v2908 = vunpack.c.l.b16 %v2613
        %v2909 = vunpack.c.l.b16 %v2614
        %v2910 = vunpack.c.l.b16 %v2615
        %v2911 = vunpack.c.l.b16 %v2616
        %v2912 = vunpack.c.l.b16 %v2617
        %v2913 = vunpack.c.l.b16 %v2618
        %v2914 = vunpack.c.l.b16 %v2619
        %v2915 = vunpack.c.l.b16 %v2620
        %v2916 = vunpack.c.l.b16 %v2621
        %v2917 = vunpack.c.l.b16 %v2622
        %v2918 = vunpack.c.l.b16 %v2623
        %v2919 = vunpack.c.l.b16 %v2624
        %v2920 = vunpack.c.l.b16 %v2625
        %v2921 = vunpack.c.l.b16 %v2626
        %v2922 = vunpack.c.l.b16 %v2627
        %v2923 = vunpack.c.l.b16 %v2628
        %v2924 = vunpack.c.l.b16 %v2629
        %v2925 = vunpack.c.l.b16 %v2630
        %v2926 = vunpack.c.l.b16 %v2631
        %v2927 = vunpack.c.l.b16 %v2632
        %v2928 = vunpack.c.l.b16 %v2633
        %v2929 = vunpack.c.l.b16 %v2634
        %v2930 = vunpack.c.l.b16 %v2635
        %v2931 = vunpack.c.l.b16 %v2636
        %v2932 = vunpack.c.l.b16 %v2637
        %v2933 = vunpack.c.l.b16 %v2638
        %v2934 = vunpack.c.l.b16 %v2639
        %v2935 = vunpack.c.l.b16 %v2640
        %v2936 = vunpack.c.l.b16 %v2641
        %v2937 = vunpack.c.l.b16 %v2642
        %v2938 = vunpack.c.l.b16 %v2643
        %v2939 = vunpack.c.l.b16 %v2644
        %v2940 = vunpack.c.l.b16 %v2645
        %v2941 = vunpack.c.l.b16 %v2646
        %v2942 = vunpack.c.l.b16 %v2647
        %v2943 = vunpack.c.l.b16 %v2648
        %v2944 = vunpack.c.l.b16 %v2649
        %v2945 = vunpack.c.l.b16 %v2650
        %v2946 = vunpack.c.l.b16 %v2651
        %v2947 = vunpack.c.l.b16 %v2652
        %v2948 = vunpack.c.l.b16 %v2653
        %v2949 = vunpack.c.l.b16 %v2654
        %v2950 = vunpack.c.l.b16 %v2655
        %v2951 = vunpack.c.l.b16 %v2656
        %v2952 = vunpack.c.l.b16 %v2657
        %v2953 = vunpack.c.l.b16 %v2658
        %v2954 = vunpack.c.l.b16 %v2659
        %v2955 = vunpack.c.l.b16 %v2660
        %v2956 = vunpack.c.l.b16 %v2661
        %v2957 = vunpack.c.l.b16 %v2662
        %v2958 = vunpack.c.l.b16 %v2663
        %v2959 = vunpack.c.l.b16 %v2664
        %v2960 = vunpack.c.l.b16 %v2665
        %v2961 = vunpack.c.l.b16 %v2666
        %v2962 = vunpack.c.l.b16 %v2667
        %v2963 = vunpack.c.l.b16 %v2668
        %v2964 = vunpack.c.l.b16 %v2669
        %v2965 = vunpack.c.l.b16 %v2670
        %v2966 = vunpack.c.l.b16 %v2671
        %v2967 = vunpack.c.l.b16 %v2672
        %v2968 = vunpack.c.l.b16 %v2673
        %v2969 = vunpack.c.l.b16 %v2674
        %v2970 = vunpack.c.l.b16 %v2675
        %v2971 = vunpack.c.l.b16 %v2676
        %v2972 = vunpack.c.l.b16 %v2677
        %v2973 = vunpack.c.l.b16 %v2678
        %v2974 = vunpack.c.l.b16 %v2679
        %v2975 = vunpack.c.l.b16 %v2680
        %v2976 = vunpack.c.l.b16 %v2681
        %v2977 = vunpack.c.l.b16 %v2682
        %v2978 = vunpack.c.l.b16 %v2683
        %v2979 = vunpack.c.l.b16 %v2684
        %v2980 = vunpack.c.l.b16 %v2685
        %v2981 = vunpack.c.l.b16 %v2686
        %v2982 = vunpack.c.l.b16 %v2687
        %v2983 = vunpack.c.l.b16 %v2688
        %v2984 = vunpack.c.l.b16 %v2689
        %v2985 = vunpack.c.l.b16 %v2690
        %v2986 = vunpack.c.l.b16 %v2691
        %v2987 = vunpack.c.l.b16 %v2692
        %v2988 = vunpack.c.l.b16 %v2693
        %v2989 = vunpack.c.l.b16 %v2694
        %v2990 = vunpack.c.l.b16 %v2695
        %v2991 = vunpack.c.l.b16 %v2696
        %v2992 = vunpack.c.l.b16 %v2697
        %v2993 = vunpack.c.l.b16 %v2698
        %v2994 = vunpack.c.l.b16 %v2699
        %v2995 = vunpack.c.l.b16 %v2700
        %v2996 = vunpack.c.l.b16 %v2701
        %v2997 = vunpack.c.l.b16 %v2702
        %v2998 = vunpack.c.l.b16 %v2703
        %v2999 = vunpack.c.l.b16 %v2704
        %v3000 = vunpack.c.l.b16 %v2705
        %v3001 = vunpack.c.l.b16 %v2706
        %v3002 = vunpack.c.l.b16 %v2707
        %v3003 = vunpack.c.l.b16 %v2708
        %v3004 = vunpack.c.l.b16 %v2709
        %v3005 = vunpack.c.l.b16 %v2710
        %v3006 = vunpack.c.l.b16 %v2711
        %v3007 = vunpack.c.l.b16 %v2712
        %v3008 = vunpack.c.l.b16 %v2713
        %v3009 = vunpack.c.l.b16 %v2714
        %v3010 = vunpack.c.l.b16 %v2715
        %v3011 = vunpack.c.l.b16 %v2716
        %v3012 = vunpack.c.l.b16 %v2717
        %v3013 = vunpack.c.l.b16 %v2718
        %v3014 = vunpack.c.l.b16 %v2719
        %v3015 = vunpack.c.l.b16 %v2720
        %v3016 = vunpack.c.l.b16 %v2721
        %v3017 = vunpack.c.l.b16 %v2722
        %v3018 = vunpack.c.l.b16 %v2723
        %v3019 = vunpack.c.l.b16 %v2724
        %v3020 = vunpack.c.l.b16 %v2725
        %v3021 = vunpack.c.l.b16 %v2726
        %v3022 = vunpack.c.l.b16 %v2727
        %v3023 = vunpack.c.l.b16 %v2728
        %v3024 = vunpack.c.l.b16 %v2729
        %v3025 = vunpack.c.l.b16 %v2730
        %v3026 = vpack.c.b16 %v2883, %v2882
        %v3027 = vpack.c.b16 %v2885, %v2884
        %v3028 = vpack.c.b16 %v2887, %v2886
        %v3029 = vpack.c.b16 %v2889, %v2888
        %v3030 = vpack.c.b16 %v2891, %v2890
        %v3031 = vpack.c.b16 %v2893, %v2892
        %v3032 = vpack.c.b16 %v2895, %v2894
        %v3033 = vpack.c.b16 %v2897, %v2896
        %v3034 = vpack.c.b16 %v2899, %v2898
        %v3035 = vpack.c.b16 %v2901, %v2900
        %v3036 = vpack.c.b16 %v2903, %v2902
        %v3037 = vpack.c.b16 %v2905, %v2904
        %v3038 = vpack.c.b16 %v2907, %v2906
        %v3039 = vpack.c.b16 %v2909, %v2908
        %v3040 = vpack.c.b16 %v2911, %v2910
        %v3041 = vpack.c.b16 %v2913, %v2912
        %v3042 = vpack.c.b16 %v2915, %v2914
        %v3043 = vpack.c.b16 %v2917, %v2916
        %v3044 = vpack.c.b16 %v2919, %v2918
        %v3045 = vpack.c.b16 %v2921, %v2920
        %v3046 = vpack.c.b16 %v2923, %v2922
        %v3047 = vpack.c.b16 %v2925, %v2924
        %v3048 = vpack.c.b16 %v2927, %v2926
        %v3049 = vpack.c.b16 %v2929, %v2928
        %v3050 = vpack.c.b16 %v2931, %v2930
        %v3051 = vpack.c.b16 %v2933, %v2932
        %v3052 = vpack.c.b16 %v2935, %v2934
        %v3053 = vpack.c.b16 %v2937, %v2936
        %v3054 = vpack.c.b16 %v2939, %v2938
        %v3055 = vpack.c.b16 %v2941, %v2940
        %v3056 = vpack.c.b16 %v2943, %v2942
        %v3057 = vpack.c.b16 %v2945, %v2944
        %v3058 = vpack.c.b16 %v2947, %v2946
        %v3059 = vpack.c.b16 %v2949, %v2948
        %v3060 = vpack.c.b16 %v2951, %v2950
        %v3061 = vpack.c.b16 %v2953, %v2952
        %v3062 = vpack.c.b16 %v2955, %v2954
        %v3063 = vpack.c.b16 %v2957, %v2956
        %v3064 = vpack.c.b16 %v2959, %v2958
        %v3065 = vpack.c.b16 %v2961, %v2960
        %v3066 = vpack.c.b16 %v2963, %v2962
        %v3067 = vpack.c.b16 %v2965, %v2964
        %v3068 = vpack.c.b16 %v2967, %v2966
        %v3069 = vpack.c.b16 %v2969, %v2968
        %v3070 = vpack.c.b16 %v2971, %v2970
        %v3071 = vpack.c.b16 %v2973, %v2972
        %v3072 = vpack.c.b16 %v2975, %v2974
        %v3073 = vpack.c.b16 %v2977, %v2976
        %v3074 = vpack.c.b16 %v2979, %v2978
        %v3075 = vpack.c.b16 %v2981, %v2980
        %v3076 = vpack.c.b16 %v2983, %v2982
        %v3077 = vpack.c.b16 %v2985, %v2984
        %v3078 = vpack.c.b16 %v2987, %v2986
        %v3079 = vpack.c.b16 %v2989, %v2988
        %v3080 = vpack.c.b16 %v2991, %v2990
        %v3081 = vpack.c.b16 %v2993, %v2992
        %v3082 = vpack.c.b16 %v2995, %v2994
        %v3083 = vpack.c.b16 %v2997, %v2996
        %v3084 = vpack.c.b16 %v2999, %v2998
        %v3085 = vpack.c.b16 %v3001, %v3000
        %v3086 = vpack.c.b16 %v3003, %v3002
        %v3087 = vpack.c.b16 %v3005, %v3004
        %v3088 = vpack.c.b16 %v3007, %v3006
        %v3089 = vpack.c.b16 %v3009, %v3008
        %v3090 = vpack.c.b16 %v3011, %v3010
        %v3091 = vpack.c.b16 %v3013, %v3012
        %v3092 = vpack.c.b16 %v3015, %v3014
        %v3093 = vpack.c.b16 %v3017, %v3016
        %v3094 = vpack.c.b16 %v3019, %v3018
        %v3095 = vpack.c.b16 %v3021, %v3020
        %v3096 = vpack.c.b16 %v3023, %v3022
        %v3097 = vpack.c.b16 %v3025, %v3024
        %3170 = vmatprep.subr.bf16.mxu0 0
        %3171 = vmatpush1.bf16.msra.mxu0 %v3026
        %3172 = vmatprep.subr.bf16.mxu0 0
        %3173 = vmatpush1.bf16.msra.mxu0 %v3027
        %3174 = vmatprep.subr.bf16.mxu0 0
        %3175 = vmatpush1.bf16.msra.mxu0 %v3028
        %3176 = vmatprep.subr.bf16.mxu0 0
        %3177 = vmatpush1.bf16.msra.mxu0 %v3029
        %3178 = vmatprep.subr.bf16.mxu0 0
        %3179 = vmatpush1.bf16.msra.mxu0 %v3030
        %3180 = vmatprep.subr.bf16.mxu0 0
        %3181 = vmatpush1.bf16.msra.mxu0 %v3031
        %3182 = vmatprep.subr.bf16.mxu0 0
        %3183 = vmatpush1.bf16.msra.mxu0 %v3032
        %3184 = vmatprep.subr.bf16.mxu0 0
        %3185 = vmatpush1.bf16.msra.mxu0 %v3033
        %3186 = vmatprep.subr.bf16.mxu0 0
        %3187 = vmatpush1.bf16.msra.mxu0 %v3034
        %3188 = vmatprep.subr.bf16.mxu0 0
        %3189 = vmatpush1.bf16.msra.mxu0 %v3035
        %3190 = vmatprep.subr.bf16.mxu0 0
        %3191 = vmatpush1.bf16.msra.mxu0 %v3036
        %3192 = vmatprep.subr.bf16.mxu0 0
        %3193 = vmatpush1.bf16.msra.mxu0 %v3037
        %3194 = vmatprep.subr.bf16.mxu0 0
        %3195 = vmatpush1.bf16.msra.mxu0 %v3038
        %3196 = vmatprep.subr.bf16.mxu0 0
        %3197 = vmatpush1.bf16.msra.mxu0 %v3039
        %3198 = vmatprep.subr.bf16.mxu0 0
        %3199 = vmatpush1.bf16.msra.mxu0 %v3040
        %3200 = vmatprep.subr.bf16.mxu0 0
        %3201 = vmatpush1.bf16.msra.mxu0 %v3041
        %3202 = vmatprep.mubr.bf16.mxu0 %v2444
        %3203 = vmatmul.mubr.bf16.gmra.mrb[0].mxu0 %v2443
        %v3204 = vpop.f32.mrb[0].mxu0
        %v3205 = vadd.f32 %v2736, %v3204
        %v3206 = vpop.f32.mrb[0].mxu0
        %v3207 = vpop.f32.mrb[0].mxu0
        %v3208 = vadd.f32 %v2736, %v3207
        %v3209 = vpop.f32.mrb[0].mxu0
        %3210 = vmatprep.mubr.bf16.mxu0 %v2453
        %3211 = vmatmul.mubr.bf16.gmra.mrb[0].mxu0 %v2452
        %v3212 = vpop.f32.mrb[0].mxu0
        %v3213 = vadd.f32 %v2736, %v3212
        %v3214 = vpop.f32.mrb[0].mxu0
        %v3215 = vpop.f32.mrb[0].mxu0
        %v3216 = vadd.f32 %v2736, %v3215
        %v3217 = vpop.f32.mrb[0].mxu0
        %3218 = vmatprep.mubr.bf16.mxu0 %v2462
        %3219 = vmatmul.mubr.bf16.gmra.mrb[0].mxu0 %v2461
        %v3220 = vpop.f32.mrb[0].mxu0
        %v3221 = vadd.f32 %v2736, %v3220
        %v3222 = vpop.f32.mrb[0].mxu0
        %v3223 = vpop.f32.mrb[0].mxu0
        %v3224 = vadd.f32 %v2736, %v3223
        %v3225 = vpop.f32.mrb[0].mxu0
        %3226 = vmatprep.mubr.bf16.mxu0 %v2471
        %3227 = vmatmul.mubr.bf16.gmra.mrb[0].mxu0 %v2470
        %v3228 = vpop.f32.mrb[0].mxu0
        %v3229 = vadd.f32 %v2736, %v3228
        %v3230 = vpop.f32.mrb[0].mxu0
        %v3231 = vpop.f32.mrb[0].mxu0
        %v3232 = vadd.f32 %v2736, %v3231
        %v3233 = vpop.f32.mrb[0].mxu0
        %3234 = vmatprep.mubr.bf16.mxu0 %v2480
        %3235 = vmatmul.mubr.bf16.gmra.mrb[0].mxu0 %v2479
        %v3236 = vpop.f32.mrb[0].mxu0
        %v3237 = vadd.f32 %v2736, %v3236
        %v3238 = vpop.f32.mrb[0].mxu0
        %v3239 = vpop.f32.mrb[0].mxu0
        %v3240 = vadd.f32 %v2736, %v3239
        %v3241 = vpop.f32.mrb[0].mxu0
        %3242 = vmatprep.mubr.bf16.mxu0 %v2489
        %3243 = vmatmul.mubr.bf16.gmra.mrb[0].mxu0 %v2488
        %v3244 = vpop.f32.mrb[0].mxu0
        %v3245 = vadd.f32 %v2736, %v3244
        %v3246 = vpop.f32.mrb[0].mxu0
        %v3247 = vpop.f32.mrb[0].mxu0
        %v3248 = vadd.f32 %v2736, %v3247
        %v3249 = vpop.f32.mrb[0].mxu0
        %3250 = vmatprep.mubr.bf16.mxu0 %v2498
        %3251 = vmatmul.mubr.bf16.gmra.mrb[0].mxu0 %v2497
        %v3252 = vpop.f32.mrb[0].mxu0
        %v3253 = vadd.f32 %v2736, %v3252
        %v3254 = vpop.f32.mrb[0].mxu0
        %v3255 = vpop.f32.mrb[0].mxu0
        %v3256 = vadd.f32 %v2736, %v3255
        %v3257 = vpop.f32.mrb[0].mxu0
        %3258 = vmatprep.mubr.bf16.mxu0 %v2507
        %3259 = vmatmul.mubr.bf16.gmra.mrb[0].mxu0 %v2506
        %v3260 = vpop.f32.mrb[0].mxu0
        %v3261 = vadd.f32 %v2736, %v3260
        %v3262 = vpop.f32.mrb[0].mxu0
        %v3263 = vpop.f32.mrb[0].mxu0
        %v3264 = vadd.f32 %v2736, %v3263
        %v3265 = vpop.f32.mrb[0].mxu0
        %3266 = vmatprep.mubr.bf16.mxu0 %v2516
        %3267 = vmatmul.mubr.bf16.gmra.mrb[0].mxu0 %v2515
        %v3268 = vpop.f32.mrb[0].mxu0
        %v3269 = vadd.f32 %v2736, %v3268
        %v3270 = vpop.f32.mrb[0].mxu0
        %v3271 = vpop.f32.mrb[0].mxu0
        %v3272 = vadd.f32 %v2736, %v3271
        %v3273 = vpop.f32.mrb[0].mxu0
        %3274 = vmatprep.mubr.bf16.mxu0 %v2525
        %3275 = vmatmul.mubr.bf16.gmra.mrb[0].mxu0 %v2524
        %v3276 = vpop.f32.mrb[0].mxu0
        %v3277 = vadd.f32 %v2736, %v3276
        %v3278 = vpop.f32.mrb[0].mxu0
        %v3279 = vpop.f32.mrb[0].mxu0
        %v3280 = vadd.f32 %v2736, %v3279
        %v3281 = vpop.f32.mrb[0].mxu0
        %3282 = vmatprep.mubr.bf16.mxu0 %v2534
        %3283 = vmatmul.mubr.bf16.gmra.mrb[0].mxu0 %v2533
        %v3284 = vpop.f32.mrb[0].mxu0
        %v3285 = vadd.f32 %v2736, %v3284
        %v3286 = vpop.f32.mrb[0].mxu0
        %v3287 = vpop.f32.mrb[0].mxu0
        %v3288 = vadd.f32 %v2736, %v3287
        %v3289 = vpop.f32.mrb[0].mxu0
        %3290 = vmatprep.mubr.bf16.mxu0 %v2543
        %3291 = vmatmul.mubr.bf16.gmra.mrb[0].mxu0 %v2542
        %v3292 = vpop.f32.mrb[0].mxu0
        %v3293 = vadd.f32 %v2736, %v3292
        %v3294 = vpop.f32.mrb[0].mxu0
        %v3295 = vpop.f32.mrb[0].mxu0
        %v3296 = vadd.f32 %v2736, %v3295
        %v3297 = vpop.f32.mrb[0].mxu0
        %3298 = vmatprep.mubr.bf16.mxu0 %v2552
        %3299 = vmatmul.mubr.bf16.gmra.mrb[0].mxu0 %v2551
        %v3300 = vpop.f32.mrb[0].mxu0
        %v3301 = vadd.f32 %v2736, %v3300
        %v3302 = vpop.f32.mrb[0].mxu0
        %v3303 = vpop.f32.mrb[0].mxu0
        %v3304 = vadd.f32 %v2736, %v3303
        %v3305 = vpop.f32.mrb[0].mxu0
        %3306 = vmatprep.mubr.bf16.mxu0 %v2561
        %3307 = vmatmul.mubr.bf16.gmra.mrb[0].mxu0 %v2560
        %v3308 = vpop.f32.mrb[0].mxu0
        %v3309 = vadd.f32 %v2736, %v3308
        %v3310 = vpop.f32.mrb[0].mxu0
        %v3311 = vpop.f32.mrb[0].mxu0
        %v3312 = vadd.f32 %v2736, %v3311
        %v3313 = vpop.f32.mrb[0].mxu0
        %3314 = vmatprep.mubr.bf16.mxu0 %v2570
        %3315 = vmatmul.mubr.bf16.gmra.mrb[0].mxu0 %v2569
        %v3316 = vpop.f32.mrb[0].mxu0
        %v3317 = vadd.f32 %v2736, %v3316
        %v3318 = vpop.f32.mrb[0].mxu0
        %v3319 = vpop.f32.mrb[0].mxu0
        %v3320 = vadd.f32 %v2736, %v3319
        %v3321 = vpop.f32.mrb[0].mxu0
        %3322 = vmatprep.mubr.bf16.mxu0 %v2579
        %3323 = vmatmul.mubr.bf16.gmra.mrb[0].mxu0 %v2578
        %v3324 = vpop.f32.mrb[0].mxu0
        %v3325 = vadd.f32 %v2736, %v3324
        %v3326 = vpop.f32.mrb[0].mxu0
        %v3327 = vpop.f32.mrb[0].mxu0
        %v3328 = vadd.f32 %v2736, %v3327
        %v3329 = vpop.f32.mrb[0].mxu0
        %3330 = vdwg.mxu0
        %3331 = vmatprep.subr.bf16.mxu0 0
        %3332 = vmatpush1.bf16.msra.mxu0 %v3042
        %3333 = vmatprep.subr.bf16.mxu0 0
        %3334 = vmatpush1.bf16.msra.mxu0 %v3043
        %3335 = vmatprep.subr.bf16.mxu0 0
        %3336 = vmatpush1.bf16.msra.mxu0 %v3044
        %3337 = vmatprep.subr.bf16.mxu0 0
        %3338 = vmatpush1.bf16.msra.mxu0 %v3045
        %3339 = vmatprep.subr.bf16.mxu0 0
        %3340 = vmatpush1.bf16.msra.mxu0 %v3046
        %3341 = vmatprep.subr.bf16.mxu0 0
        %3342 = vmatpush1.bf16.msra.mxu0 %v3047
        %3343 = vmatprep.subr.bf16.mxu0 0
        %3344 = vmatpush1.bf16.msra.mxu0 %v3048
        %3345 = vmatprep.subr.bf16.mxu0 0
        %3346 = vmatpush1.bf16.msra.mxu0 %v3049
        %3347 = vmatprep.subr.bf16.mxu0 0
        %3348 = vmatpush1.bf16.msra.mxu0 %v3050
        %3349 = vmatprep.subr.bf16.mxu0 0
        %3350 = vmatpush1.bf16.msra.mxu0 %v3051
        %3351 = vmatprep.subr.bf16.mxu0 0
        %3352 = vmatpush1.bf16.msra.mxu0 %v3052
        %3353 = vmatprep.subr.bf16.mxu0 0
        %3354 = vmatpush1.bf16.msra.mxu0 %v3053
        %3355 = vmatprep.subr.bf16.mxu0 0
        %3356 = vmatpush1.bf16.msra.mxu0 %v3054
        %3357 = vmatprep.subr.bf16.mxu0 0
        %3358 = vmatpush1.bf16.msra.mxu0 %v3055
        %3359 = vmatprep.subr.bf16.mxu0 0
        %3360 = vmatpush1.bf16.msra.mxu0 %v3056
        %3361 = vmatprep.subr.bf16.mxu0 0
        %3362 = vmatpush1.bf16.msra.mxu0 %v3057
        %3363 = vmatprep.mubr.bf16.mxu0 %v2446
        %3364 = vmatmul.mubr.bf16.gmra.mrb[0].mxu0 %v2445
        %v3365 = vpop.f32.mrb[0].mxu0
        %v3366 = vadd.f32 %v3205, %v3365
        %v3367 = vpop.f32.mrb[0].mxu0
        %v3368 = vpop.f32.mrb[0].mxu0
        %v3369 = vadd.f32 %v3208, %v3368
        %v3370 = vpop.f32.mrb[0].mxu0
        %3371 = vmatprep.mubr.bf16.mxu0 %v2455
        %3372 = vmatmul.mubr.bf16.gmra.mrb[0].mxu0 %v2454
        %v3373 = vpop.f32.mrb[0].mxu0
        %v3374 = vadd.f32 %v3213, %v3373
        %v3375 = vpop.f32.mrb[0].mxu0
        %v3376 = vpop.f32.mrb[0].mxu0
        %v3377 = vadd.f32 %v3216, %v3376
        %v3378 = vpop.f32.mrb[0].mxu0
        %3379 = vmatprep.mubr.bf16.mxu0 %v2464
        %3380 = vmatmul.mubr.bf16.gmra.mrb[0].mxu0 %v2463
        %v3381 = vpop.f32.mrb[0].mxu0
        %v3382 = vadd.f32 %v3221, %v3381
        %v3383 = vpop.f32.mrb[0].mxu0
        %v3384 = vpop.f32.mrb[0].mxu0
        %v3385 = vadd.f32 %v3224, %v3384
        %v3386 = vpop.f32.mrb[0].mxu0
        %3387 = vmatprep.mubr.bf16.mxu0 %v2473
        %3388 = vmatmul.mubr.bf16.gmra.mrb[0].mxu0 %v2472
        %v3389 = vpop.f32.mrb[0].mxu0
        %v3390 = vadd.f32 %v3229, %v3389
        %v3391 = vpop.f32.mrb[0].mxu0
        %v3392 = vpop.f32.mrb[0].mxu0
        %v3393 = vadd.f32 %v3232, %v3392
        %v3394 = vpop.f32.mrb[0].mxu0
        %3395 = vmatprep.mubr.bf16.mxu0 %v2482
        %3396 = vmatmul.mubr.bf16.gmra.mrb[0].mxu0 %v2481
        %v3397 = vpop.f32.mrb[0].mxu0
        %v3398 = vadd.f32 %v3237, %v3397
        %v3399 = vpop.f32.mrb[0].mxu0
        %v3400 = vpop.f32.mrb[0].mxu0
        %v3401 = vadd.f32 %v3240, %v3400
        %v3402 = vpop.f32.mrb[0].mxu0
        %3403 = vmatprep.mubr.bf16.mxu0 %v2491
        %3404 = vmatmul.mubr.bf16.gmra.mrb[0].mxu0 %v2490
        %v3405 = vpop.f32.mrb[0].mxu0
        %v3406 = vadd.f32 %v3245, %v3405
        %v3407 = vpop.f32.mrb[0].mxu0
        %v3408 = vpop.f32.mrb[0].mxu0
        %v3409 = vadd.f32 %v3248, %v3408
        %v3410 = vpop.f32.mrb[0].mxu0
        %3411 = vmatprep.mubr.bf16.mxu0 %v2500
        %3412 = vmatmul.mubr.bf16.gmra.mrb[0].mxu0 %v2499
        %v3413 = vpop.f32.mrb[0].mxu0
        %v3414 = vadd.f32 %v3253, %v3413
        %v3415 = vpop.f32.mrb[0].mxu0
        %v3416 = vpop.f32.mrb[0].mxu0
        %v3417 = vadd.f32 %v3256, %v3416
        %v3418 = vpop.f32.mrb[0].mxu0
        %3419 = vmatprep.mubr.bf16.mxu0 %v2509
        %3420 = vmatmul.mubr.bf16.gmra.mrb[0].mxu0 %v2508
        %v3421 = vpop.f32.mrb[0].mxu0
        %v3422 = vadd.f32 %v3261, %v3421
        %v3423 = vpop.f32.mrb[0].mxu0
        %v3424 = vpop.f32.mrb[0].mxu0
        %v3425 = vadd.f32 %v3264, %v3424
        %v3426 = vpop.f32.mrb[0].mxu0
        %3427 = vmatprep.mubr.bf16.mxu0 %v2518
        %3428 = vmatmul.mubr.bf16.gmra.mrb[0].mxu0 %v2517
        %v3429 = vpop.f32.mrb[0].mxu0
        %v3430 = vadd.f32 %v3269, %v3429
        %v3431 = vpop.f32.mrb[0].mxu0
        %v3432 = vpop.f32.mrb[0].mxu0
        %v3433 = vadd.f32 %v3272, %v3432
        %v3434 = vpop.f32.mrb[0].mxu0
        %3435 = vmatprep.mubr.bf16.mxu0 %v2527
        %3436 = vmatmul.mubr.bf16.gmra.mrb[0].mxu0 %v2526
        %v3437 = vpop.f32.mrb[0].mxu0
        %v3438 = vadd.f32 %v3277, %v3437
        %v3439 = vpop.f32.mrb[0].mxu0
        %v3440 = vpop.f32.mrb[0].mxu0
        %v3441 = vadd.f32 %v3280, %v3440
        %v3442 = vpop.f32.mrb[0].mxu0
        %3443 = vmatprep.mubr.bf16.mxu0 %v2536
        %3444 = vmatmul.mubr.bf16.gmra.mrb[0].mxu0 %v2535
        %v3445 = vpop.f32.mrb[0].mxu0
        %v3446 = vadd.f32 %v3285, %v3445
        %v3447 = vpop.f32.mrb[0].mxu0
        %v3448 = vpop.f32.mrb[0].mxu0
        %v3449 = vadd.f32 %v3288, %v3448
        %v3450 = vpop.f32.mrb[0].mxu0
        %3451 = vmatprep.mubr.bf16.mxu0 %v2545
        %3452 = vmatmul.mubr.bf16.gmra.mrb[0].mxu0 %v2544
        %v3453 = vpop.f32.mrb[0].mxu0
        %v3454 = vadd.f32 %v3293, %v3453
        %v3455 = vpop.f32.mrb[0].mxu0
        %v3456 = vpop.f32.mrb[0].mxu0
        %v3457 = vadd.f32 %v3296, %v3456
        %v3458 = vpop.f32.mrb[0].mxu0
        %3459 = vmatprep.mubr.bf16.mxu0 %v2554
        %3460 = vmatmul.mubr.bf16.gmra.mrb[0].mxu0 %v2553
        %v3461 = vpop.f32.mrb[0].mxu0
        %v3462 = vadd.f32 %v3301, %v3461
        %v3463 = vpop.f32.mrb[0].mxu0
        %v3464 = vpop.f32.mrb[0].mxu0
        %v3465 = vadd.f32 %v3304, %v3464
        %v3466 = vpop.f32.mrb[0].mxu0
        %3467 = vmatprep.mubr.bf16.mxu0 %v2563
        %3468 = vmatmul.mubr.bf16.gmra.mrb[0].mxu0 %v2562
        %v3469 = vpop.f32.mrb[0].mxu0
        %v3470 = vadd.f32 %v3309, %v3469
        %v3471 = vpop.f32.mrb[0].mxu0
        %v3472 = vpop.f32.mrb[0].mxu0
        %v3473 = vadd.f32 %v3312, %v3472
        %v3474 = vpop.f32.mrb[0].mxu0
        %3475 = vmatprep.mubr.bf16.mxu0 %v2572
        %3476 = vmatmul.mubr.bf16.gmra.mrb[0].mxu0 %v2571
        %v3477 = vpop.f32.mrb[0].mxu0
        %v3478 = vadd.f32 %v3317, %v3477
        %v3479 = vpop.f32.mrb[0].mxu0
        %v3480 = vpop.f32.mrb[0].mxu0
        %v3481 = vadd.f32 %v3320, %v3480
        %v3482 = vpop.f32.mrb[0].mxu0
        %3483 = vmatprep.mubr.bf16.mxu0 %v2581
        %3484 = vmatmul.mubr.bf16.gmra.mrb[0].mxu0 %v2580
        %v3485 = vpop.f32.mrb[0].mxu0
        %v3486 = vadd.f32 %v3325, %v3485
        %v3487 = vpop.f32.mrb[0].mxu0
        %v3488 = vpop.f32.mrb[0].mxu0
        %v3489 = vadd.f32 %v3328, %v3488
        %v3490 = vpop.f32.mrb[0].mxu0
        %3491 = vdwg.mxu0
        %3492 = vmatprep.subr.bf16.mxu0 0
        %3493 = vmatpush1.bf16.msra.mxu0 %v3058
        %3494 = vmatprep.subr.bf16.mxu0 0
        %3495 = vmatpush1.bf16.msra.mxu0 %v3059
        %3496 = vmatprep.subr.bf16.mxu0 0
        %3497 = vmatpush1.bf16.msra.mxu0 %v3060
        %3498 = vmatprep.subr.bf16.mxu0 0
        %3499 = vmatpush1.bf16.msra.mxu0 %v3061
        %3500 = vmatprep.subr.bf16.mxu0 0
        %3501 = vmatpush1.bf16.msra.mxu0 %v3062
        %3502 = vmatprep.subr.bf16.mxu0 0
        %3503 = vmatpush1.bf16.msra.mxu0 %v3063
        %3504 = vmatprep.subr.bf16.mxu0 0
        %3505 = vmatpush1.bf16.msra.mxu0 %v3064
        %3506 = vmatprep.subr.bf16.mxu0 0
        %3507 = vmatpush1.bf16.msra.mxu0 %v3065
        %3508 = vmatprep.subr.bf16.mxu0 0
        %3509 = vmatpush1.bf16.msra.mxu0 %v3066
        %3510 = vmatprep.subr.bf16.mxu0 0
        %3511 = vmatpush1.bf16.msra.mxu0 %v3067
        %3512 = vmatprep.subr.bf16.mxu0 0
        %3513 = vmatpush1.bf16.msra.mxu0 %v3068
        %3514 = vmatprep.subr.bf16.mxu0 0
        %3515 = vmatpush1.bf16.msra.mxu0 %v3069
        %3516 = vmatprep.subr.bf16.mxu0 0
        %3517 = vmatpush1.bf16.msra.mxu0 %v3070
        %3518 = vmatprep.subr.bf16.mxu0 0
        %3519 = vmatpush1.bf16.msra.mxu0 %v3071
        %3520 = vmatprep.subr.bf16.mxu0 0
        %3521 = vmatpush1.bf16.msra.mxu0 %v3072
        %3522 = vmatprep.subr.bf16.mxu0 0
        %3523 = vmatpush1.bf16.msra.mxu0 %v3073
        %3524 = vmatprep.mubr.bf16.mxu0 %v2448
        %3525 = vmatmul.mubr.bf16.gmra.mrb[0].mxu0 %v2447
        %v3526 = vpop.f32.mrb[0].mxu0
        %v3527 = vadd.f32 %v3366, %v3526
        %v3528 = vpop.f32.mrb[0].mxu0
        %v3529 = vpop.f32.mrb[0].mxu0
        %v3530 = vadd.f32 %v3369, %v3529
        %v3531 = vpop.f32.mrb[0].mxu0
        %3532 = vmatprep.mubr.bf16.mxu0 %v2457
        %3533 = vmatmul.mubr.bf16.gmra.mrb[0].mxu0 %v2456
        %v3534 = vpop.f32.mrb[0].mxu0
        %v3535 = vadd.f32 %v3374, %v3534
        %v3536 = vpop.f32.mrb[0].mxu0
        %v3537 = vpop.f32.mrb[0].mxu0
        %v3538 = vadd.f32 %v3377, %v3537
        %v3539 = vpop.f32.mrb[0].mxu0
        %3540 = vmatprep.mubr.bf16.mxu0 %v2466
        %3541 = vmatmul.mubr.bf16.gmra.mrb[0].mxu0 %v2465
        %v3542 = vpop.f32.mrb[0].mxu0
        %v3543 = vadd.f32 %v3382, %v3542
        %v3544 = vpop.f32.mrb[0].mxu0
        %v3545 = vpop.f32.mrb[0].mxu0
        %v3546 = vadd.f32 %v3385, %v3545
        %v3547 = vpop.f32.mrb[0].mxu0
        %3548 = vmatprep.mubr.bf16.mxu0 %v2475
        %3549 = vmatmul.mubr.bf16.gmra.mrb[0].mxu0 %v2474
        %v3550 = vpop.f32.mrb[0].mxu0
        %v3551 = vadd.f32 %v3390, %v3550
        %v3552 = vpop.f32.mrb[0].mxu0
        %v3553 = vpop.f32.mrb[0].mxu0
        %v3554 = vadd.f32 %v3393, %v3553
        %v3555 = vpop.f32.mrb[0].mxu0
        %3556 = vmatprep.mubr.bf16.mxu0 %v2484
        %3557 = vmatmul.mubr.bf16.gmra.mrb[0].mxu0 %v2483
        %v3558 = vpop.f32.mrb[0].mxu0
        %v3559 = vadd.f32 %v3398, %v3558
        %v3560 = vpop.f32.mrb[0].mxu0
        %v3561 = vpop.f32.mrb[0].mxu0
        %v3562 = vadd.f32 %v3401, %v3561
        %v3563 = vpop.f32.mrb[0].mxu0
        %3564 = vmatprep.mubr.bf16.mxu0 %v2493
        %3565 = vmatmul.mubr.bf16.gmra.mrb[0].mxu0 %v2492
        %v3566 = vpop.f32.mrb[0].mxu0
        %v3567 = vadd.f32 %v3406, %v3566
        %v3568 = vpop.f32.mrb[0].mxu0
        %v3569 = vpop.f32.mrb[0].mxu0
        %v3570 = vadd.f32 %v3409, %v3569
        %v3571 = vpop.f32.mrb[0].mxu0
        %3572 = vmatprep.mubr.bf16.mxu0 %v2502
        %3573 = vmatmul.mubr.bf16.gmra.mrb[0].mxu0 %v2501
        %v3574 = vpop.f32.mrb[0].mxu0
        %v3575 = vadd.f32 %v3414, %v3574
        %v3576 = vpop.f32.mrb[0].mxu0
        %v3577 = vpop.f32.mrb[0].mxu0
        %v3578 = vadd.f32 %v3417, %v3577
        %v3579 = vpop.f32.mrb[0].mxu0
        %3580 = vmatprep.mubr.bf16.mxu0 %v2511
        %3581 = vmatmul.mubr.bf16.gmra.mrb[0].mxu0 %v2510
        %v3582 = vpop.f32.mrb[0].mxu0
        %v3583 = vadd.f32 %v3422, %v3582
        %v3584 = vpop.f32.mrb[0].mxu0
        %v3585 = vpop.f32.mrb[0].mxu0
        %v3586 = vadd.f32 %v3425, %v3585
        %v3587 = vpop.f32.mrb[0].mxu0
        %3588 = vmatprep.mubr.bf16.mxu0 %v2520
        %3589 = vmatmul.mubr.bf16.gmra.mrb[0].mxu0 %v2519
        %v3590 = vpop.f32.mrb[0].mxu0
        %v3591 = vadd.f32 %v3430, %v3590
        %v3592 = vpop.f32.mrb[0].mxu0
        %v3593 = vpop.f32.mrb[0].mxu0
        %v3594 = vadd.f32 %v3433, %v3593
        %v3595 = vpop.f32.mrb[0].mxu0
        %3596 = vmatprep.mubr.bf16.mxu0 %v2529
        %3597 = vmatmul.mubr.bf16.gmra.mrb[0].mxu0 %v2528
        %v3598 = vpop.f32.mrb[0].mxu0
        %v3599 = vadd.f32 %v3438, %v3598
        %v3600 = vpop.f32.mrb[0].mxu0
        %v3601 = vpop.f32.mrb[0].mxu0
        %v3602 = vadd.f32 %v3441, %v3601
        %v3603 = vpop.f32.mrb[0].mxu0
        %3604 = vmatprep.mubr.bf16.mxu0 %v2538
        %3605 = vmatmul.mubr.bf16.gmra.mrb[0].mxu0 %v2537
        %v3606 = vpop.f32.mrb[0].mxu0
        %v3607 = vadd.f32 %v3446, %v3606
        %v3608 = vpop.f32.mrb[0].mxu0
        %v3609 = vpop.f32.mrb[0].mxu0
        %v3610 = vadd.f32 %v3449, %v3609
        %v3611 = vpop.f32.mrb[0].mxu0
        %3612 = vmatprep.mubr.bf16.mxu0 %v2547
        %3613 = vmatmul.mubr.bf16.gmra.mrb[0].mxu0 %v2546
        %v3614 = vpop.f32.mrb[0].mxu0
        %v3615 = vadd.f32 %v3454, %v3614
        %v3616 = vpop.f32.mrb[0].mxu0
        %v3617 = vpop.f32.mrb[0].mxu0
        %v3618 = vadd.f32 %v3457, %v3617
        %v3619 = vpop.f32.mrb[0].mxu0
        %3620 = vmatprep.mubr.bf16.mxu0 %v2556
        %3621 = vmatmul.mubr.bf16.gmra.mrb[0].mxu0 %v2555
        %v3622 = vpop.f32.mrb[0].mxu0
        %v3623 = vadd.f32 %v3462, %v3622
        %v3624 = vpop.f32.mrb[0].mxu0
        %v3625 = vpop.f32.mrb[0].mxu0
        %v3626 = vadd.f32 %v3465, %v3625
        %v3627 = vpop.f32.mrb[0].mxu0
        %3628 = vmatprep.mubr.bf16.mxu0 %v2565
        %3629 = vmatmul.mubr.bf16.gmra.mrb[0].mxu0 %v2564
        %v3630 = vpop.f32.mrb[0].mxu0
        %v3631 = vadd.f32 %v3470, %v3630
        %v3632 = vpop.f32.mrb[0].mxu0
        %v3633 = vpop.f32.mrb[0].mxu0
        %v3634 = vadd.f32 %v3473, %v3633
        %v3635 = vpop.f32.mrb[0].mxu0
        %3636 = vmatprep.mubr.bf16.mxu0 %v2574
        %3637 = vmatmul.mubr.bf16.gmra.mrb[0].mxu0 %v2573
        %v3638 = vpop.f32.mrb[0].mxu0
        %v3639 = vadd.f32 %v3478, %v3638
        %v3640 = vpop.f32.mrb[0].mxu0
        %v3641 = vpop.f32.mrb[0].mxu0
        %v3642 = vadd.f32 %v3481, %v3641
        %v3643 = vpop.f32.mrb[0].mxu0
        %3644 = vmatprep.mubr.bf16.mxu0 %v2583
        %3645 = vmatmul.mubr.bf16.gmra.mrb[0].mxu0 %v2582
        %v3646 = vpop.f32.mrb[0].mxu0
        %v3647 = vadd.f32 %v3486, %v3646
        %v3648 = vpop.f32.mrb[0].mxu0
        %v3649 = vpop.f32.mrb[0].mxu0
        %v3650 = vadd.f32 %v3489, %v3649
        %v3651 = vpop.f32.mrb[0].mxu0
        %3652 = vdwg.mxu0
        %3653 = vmatprep.subr.bf16.mxu0 0
        %3654 = vmatpush1.bf16.msra.mxu0 %v3074
        %3655 = vmatprep.subr.bf16.mxu0 0
        %3656 = vmatpush1.bf16.msra.mxu0 %v3075
        %3657 = vmatprep.subr.bf16.mxu0 0
        %3658 = vmatpush1.bf16.msra.mxu0 %v3076
        %3659 = vmatprep.subr.bf16.mxu0 0
        %3660 = vmatpush1.bf16.msra.mxu0 %v3077
        %3661 = vmatprep.subr.bf16.mxu0 0
        %3662 = vmatpush1.bf16.msra.mxu0 %v3078
        %3663 = vmatprep.subr.bf16.mxu0 0
        %3664 = vmatpush1.bf16.msra.mxu0 %v3079
        %3665 = vmatprep.subr.bf16.mxu0 0
        %3666 = vmatpush1.bf16.msra.mxu0 %v3080
        %3667 = vmatprep.subr.bf16.mxu0 0
        %3668 = vmatpush1.bf16.msra.mxu0 %v3081
        %3669 = vmatprep.subr.bf16.mxu0 0
        %3670 = vmatpush1.bf16.msra.mxu0 %v3082
        %3671 = vmatprep.subr.bf16.mxu0 0
        %3672 = vmatpush1.bf16.msra.mxu0 %v3083
        %3673 = vmatprep.subr.bf16.mxu0 0
        %3674 = vmatpush1.bf16.msra.mxu0 %v3084
        %3675 = vmatprep.subr.bf16.mxu0 0
        %3676 = vmatpush1.bf16.msra.mxu0 %v3085
        %3677 = vmatprep.subr.bf16.mxu0 0
        %3678 = vmatpush1.bf16.msra.mxu0 %v3086
        %3679 = vmatprep.subr.bf16.mxu0 0
        %3680 = vmatpush1.bf16.msra.mxu0 %v3087
        %3681 = vmatprep.subr.bf16.mxu0 0
        %3682 = vmatpush1.bf16.msra.mxu0 %v3088
        %3683 = vmatprep.subr.bf16.mxu0 0
        %3684 = vmatpush1.bf16.msra.mxu0 %v3089
        %3685 = vmatprep.mubr.bf16.mxu0 %v2450
        %3686 = vmatmul.mubr.bf16.gmra.mrb[0].mxu0 %v2449
        %v3687 = vpop.f32.mrb[0].mxu0
        %v3688 = vadd.f32 %v3527, %v3687
        %v3689 = vpop.f32.mrb[0].mxu0
        %v3690 = vpop.f32.mrb[0].mxu0
        %v3691 = vadd.f32 %v3530, %v3690
        %v3692 = vpop.f32.mrb[0].mxu0
        %3693 = vmatprep.mubr.bf16.mxu0 %v2459
        %3694 = vmatmul.mubr.bf16.gmra.mrb[0].mxu0 %v2458
        %v3695 = vpop.f32.mrb[0].mxu0
        %v3696 = vadd.f32 %v3535, %v3695
        %v3697 = vpop.f32.mrb[0].mxu0
        %v3698 = vpop.f32.mrb[0].mxu0
        %v3699 = vadd.f32 %v3538, %v3698
        %v3700 = vpop.f32.mrb[0].mxu0
        %3701 = vmatprep.mubr.bf16.mxu0 %v2468
        %3702 = vmatmul.mubr.bf16.gmra.mrb[0].mxu0 %v2467
        %v3703 = vpop.f32.mrb[0].mxu0
        %v3704 = vadd.f32 %v3543, %v3703
        %v3705 = vpop.f32.mrb[0].mxu0
        %v3706 = vpop.f32.mrb[0].mxu0
        %v3707 = vadd.f32 %v3546, %v3706
        %v3708 = vpop.f32.mrb[0].mxu0
        %3709 = vmatprep.mubr.bf16.mxu0 %v2477
        %3710 = vmatmul.mubr.bf16.gmra.mrb[0].mxu0 %v2476
        %v3711 = vpop.f32.mrb[0].mxu0
        %v3712 = vadd.f32 %v3551, %v3711
        %v3713 = vpop.f32.mrb[0].mxu0
        %v3714 = vpop.f32.mrb[0].mxu0
        %v3715 = vadd.f32 %v3554, %v3714
        %v3716 = vpop.f32.mrb[0].mxu0
        %3717 = vmatprep.mubr.bf16.mxu0 %v2486
        %3718 = vmatmul.mubr.bf16.gmra.mrb[0].mxu0 %v2485
        %v3719 = vpop.f32.mrb[0].mxu0
        %v3720 = vadd.f32 %v3559, %v3719
        %v3721 = vpop.f32.mrb[0].mxu0
        %v3722 = vpop.f32.mrb[0].mxu0
        %v3723 = vadd.f32 %v3562, %v3722
        %v3724 = vpop.f32.mrb[0].mxu0
        %3725 = vmatprep.mubr.bf16.mxu0 %v2495
        %3726 = vmatmul.mubr.bf16.gmra.mrb[0].mxu0 %v2494
        %v3727 = vpop.f32.mrb[0].mxu0
        %v3728 = vadd.f32 %v3567, %v3727
        %v3729 = vpop.f32.mrb[0].mxu0
        %v3730 = vpop.f32.mrb[0].mxu0
        %v3731 = vadd.f32 %v3570, %v3730
        %v3732 = vpop.f32.mrb[0].mxu0
        %3733 = vmatprep.mubr.bf16.mxu0 %v2504
        %3734 = vmatmul.mubr.bf16.gmra.mrb[0].mxu0 %v2503
        %v3735 = vpop.f32.mrb[0].mxu0
        %v3736 = vadd.f32 %v3575, %v3735
        %v3737 = vpop.f32.mrb[0].mxu0
        %v3738 = vpop.f32.mrb[0].mxu0
        %v3739 = vadd.f32 %v3578, %v3738
        %v3740 = vpop.f32.mrb[0].mxu0
        %3741 = vmatprep.mubr.bf16.mxu0 %v2513
        %3742 = vmatmul.mubr.bf16.gmra.mrb[0].mxu0 %v2512
        %v3743 = vpop.f32.mrb[0].mxu0
        %v3744 = vadd.f32 %v3583, %v3743
        %v3745 = vpop.f32.mrb[0].mxu0
        %v3746 = vpop.f32.mrb[0].mxu0
        %v3747 = vadd.f32 %v3586, %v3746
        %v3748 = vpop.f32.mrb[0].mxu0
        %3749 = vmatprep.mubr.bf16.mxu0 %v2522
        %3750 = vmatmul.mubr.bf16.gmra.mrb[0].mxu0 %v2521
        %v3751 = vpop.f32.mrb[0].mxu0
        %v3752 = vadd.f32 %v3591, %v3751
        %v3753 = vpop.f32.mrb[0].mxu0
        %v3754 = vpop.f32.mrb[0].mxu0
        %v3755 = vadd.f32 %v3594, %v3754
        %v3756 = vpop.f32.mrb[0].mxu0
        %3757 = vmatprep.mubr.bf16.mxu0 %v2531
        %3758 = vmatmul.mubr.bf16.gmra.mrb[0].mxu0 %v2530
        %v3759 = vpop.f32.mrb[0].mxu0
        %v3760 = vadd.f32 %v3599, %v3759
        %v3761 = vpop.f32.mrb[0].mxu0
        %v3762 = vpop.f32.mrb[0].mxu0
        %v3763 = vadd.f32 %v3602, %v3762
        %v3764 = vpop.f32.mrb[0].mxu0
        %3765 = vmatprep.mubr.bf16.mxu0 %v2540
        %3766 = vmatmul.mubr.bf16.gmra.mrb[0].mxu0 %v2539
        %v3767 = vpop.f32.mrb[0].mxu0
        %v3768 = vadd.f32 %v3607, %v3767
        %v3769 = vpop.f32.mrb[0].mxu0
        %v3770 = vpop.f32.mrb[0].mxu0
        %v3771 = vadd.f32 %v3610, %v3770
        %v3772 = vpop.f32.mrb[0].mxu0
        %3773 = vmatprep.mubr.bf16.mxu0 %v2549
        %3774 = vmatmul.mubr.bf16.gmra.mrb[0].mxu0 %v2548
        %v3775 = vpop.f32.mrb[0].mxu0
        %v3776 = vadd.f32 %v3615, %v3775
        %v3777 = vpop.f32.mrb[0].mxu0
        %v3778 = vpop.f32.mrb[0].mxu0
        %v3779 = vadd.f32 %v3618, %v3778
        %v3780 = vpop.f32.mrb[0].mxu0
        %3781 = vmatprep.mubr.bf16.mxu0 %v2558
        %3782 = vmatmul.mubr.bf16.gmra.mrb[0].mxu0 %v2557
        %v3783 = vpop.f32.mrb[0].mxu0
        %v3784 = vadd.f32 %v3623, %v3783
        %v3785 = vpop.f32.mrb[0].mxu0
        %v3786 = vpop.f32.mrb[0].mxu0
        %v3787 = vadd.f32 %v3626, %v3786
        %v3788 = vpop.f32.mrb[0].mxu0
        %3789 = vmatprep.mubr.bf16.mxu0 %v2567
        %3790 = vmatmul.mubr.bf16.gmra.mrb[0].mxu0 %v2566
        %v3791 = vpop.f32.mrb[0].mxu0
        %v3792 = vadd.f32 %v3631, %v3791
        %v3793 = vpop.f32.mrb[0].mxu0
        %v3794 = vpop.f32.mrb[0].mxu0
        %v3795 = vadd.f32 %v3634, %v3794
        %v3796 = vpop.f32.mrb[0].mxu0
        %3797 = vmatprep.mubr.bf16.mxu0 %v2576
        %3798 = vmatmul.mubr.bf16.gmra.mrb[0].mxu0 %v2575
        %v3799 = vpop.f32.mrb[0].mxu0
        %v3800 = vadd.f32 %v3639, %v3799
        %v3801 = vpop.f32.mrb[0].mxu0
        %v3802 = vpop.f32.mrb[0].mxu0
        %v3803 = vadd.f32 %v3642, %v3802
        %v3804 = vpop.f32.mrb[0].mxu0
        %3805 = vmatprep.mubr.bf16.mxu0 %v2585
        %3806 = vmatmul.mubr.bf16.gmra.mrb[0].mxu0 %v2584
        %v3807 = vpop.f32.mrb[0].mxu0
        %v3808 = vadd.f32 %v3647, %v3807
        %v3809 = vpop.f32.mrb[0].mxu0
        %v3810 = vpop.f32.mrb[0].mxu0
        %v3811 = vadd.f32 %v3650, %v3810
        %v3812 = vpop.f32.mrb[0].mxu0
        %3813 = vdwg.mxu0
        %3814 = vmatprep.subr.bf16.mxu0 0
        %3815 = vmatpush1.bf16.msra.mxu0 %v3090
        %3816 = vmatprep.subr.bf16.mxu0 0
        %3817 = vmatpush1.bf16.msra.mxu0 %v3091
        %3818 = vmatprep.subr.bf16.mxu0 0
        %3819 = vmatpush1.bf16.msra.mxu0 %v3092
        %3820 = vmatprep.subr.bf16.mxu0 0
        %3821 = vmatpush1.bf16.msra.mxu0 %v3093
        %3822 = vmatprep.subr.bf16.mxu0 0
        %3823 = vmatpush1.bf16.msra.mxu0 %v3094
        %3824 = vmatprep.subr.bf16.mxu0 0
        %3825 = vmatpush1.bf16.msra.mxu0 %v3095
        %3826 = vmatprep.subr.bf16.mxu0 0
        %3827 = vmatpush1.bf16.msra.mxu0 %v3096
        %3828 = vmatprep.subr.bf16.mxu0 0
        %3829 = vmatpush1.bf16.msra.mxu0 %v3097
        %3830 = vmatprep.subr.bf16.mxu0 0
        %3831 = vmatpush1.bf16.msra.mxu0 0
        %3832 = vmatprep.subr.bf16.mxu0 0
        %3833 = vmatpush1.bf16.msra.mxu0 0
        %3834 = vmatprep.subr.bf16.mxu0 0
        %3835 = vmatpush1.bf16.msra.mxu0 0
        %3836 = vmatprep.subr.bf16.mxu0 0
        %3837 = vmatpush1.bf16.msra.mxu0 0
        %3838 = vmatprep.subr.bf16.mxu0 0
        %3839 = vmatpush1.bf16.msra.mxu0 0
        %3840 = vmatprep.subr.bf16.mxu0 0
        %3841 = vmatpush1.bf16.msra.mxu0 0
        %3842 = vmatprep.subr.bf16.mxu0 0
        %3843 = vmatpush1.bf16.msra.mxu0 0
        %3844 = vmatprep.subr.bf16.mxu0 0
        %3845 = vmatpush1.bf16.msra.mxu0 0
        %3846 = vmatprep.mubr.bf16.mxu0 0
        %3847 = vmatmul.mubr.bf16.gmra.mrb[0].mxu0 %v2451
        %v3848 = vpop.f32.mrb[0].mxu0
        %v3849 = vadd.f32 %v3688, %v3848
        %v3850 = vpop.f32.mrb[0].mxu0
        %v3851 = vpop.f32.mrb[0].mxu0
        %v3852 = vadd.f32 %v3691, %v3851
        %v3853 = vpop.f32.mrb[0].mxu0
        %3854 = vmatprep.mubr.bf16.mxu0 0
        %3855 = vmatmul.mubr.bf16.gmra.mrb[0].mxu0 %v2460
        %v3856 = vpop.f32.mrb[0].mxu0
        %v3857 = vadd.f32 %v3696, %v3856
        %v3858 = vpop.f32.mrb[0].mxu0
        %v3859 = vpop.f32.mrb[0].mxu0
        %v3860 = vadd.f32 %v3699, %v3859
        %v3861 = vpop.f32.mrb[0].mxu0
        %3862 = vmatprep.mubr.bf16.mxu0 0
        %3863 = vmatmul.mubr.bf16.gmra.mrb[0].mxu0 %v2469
        %v3864 = vpop.f32.mrb[0].mxu0
        %v3865 = vadd.f32 %v3704, %v3864
        %v3866 = vpop.f32.mrb[0].mxu0
        %v3867 = vpop.f32.mrb[0].mxu0
        %v3868 = vadd.f32 %v3707, %v3867
        %v3869 = vpop.f32.mrb[0].mxu0
        %3870 = vmatprep.mubr.bf16.mxu0 0
        %3871 = vmatmul.mubr.bf16.gmra.mrb[0].mxu0 %v2478
        %v3872 = vpop.f32.mrb[0].mxu0
        %v3873 = vadd.f32 %v3712, %v3872
        %v3874 = vpop.f32.mrb[0].mxu0
        %v3875 = vpop.f32.mrb[0].mxu0
        %v3876 = vadd.f32 %v3715, %v3875
        %v3877 = vpop.f32.mrb[0].mxu0
        %3878 = vmatprep.mubr.bf16.mxu0 0
        %3879 = vmatmul.mubr.bf16.gmra.mrb[0].mxu0 %v2487
        %v3880 = vpop.f32.mrb[0].mxu0
        %v3881 = vadd.f32 %v3720, %v3880
        %v3882 = vpop.f32.mrb[0].mxu0
        %v3883 = vpop.f32.mrb[0].mxu0
        %v3884 = vadd.f32 %v3723, %v3883
        %v3885 = vpop.f32.mrb[0].mxu0
        %3886 = vmatprep.mubr.bf16.mxu0 0
        %3887 = vmatmul.mubr.bf16.gmra.mrb[0].mxu0 %v2496
        %v3888 = vpop.f32.mrb[0].mxu0
        %v3889 = vadd.f32 %v3728, %v3888
        %v3890 = vpop.f32.mrb[0].mxu0
        %v3891 = vpop.f32.mrb[0].mxu0
        %v3892 = vadd.f32 %v3731, %v3891
        %v3893 = vpop.f32.mrb[0].mxu0
        %3894 = vmatprep.mubr.bf16.mxu0 0
        %3895 = vmatmul.mubr.bf16.gmra.mrb[0].mxu0 %v2505
        %v3896 = vpop.f32.mrb[0].mxu0
        %v3897 = vadd.f32 %v3736, %v3896
        %v3898 = vpop.f32.mrb[0].mxu0
        %v3899 = vpop.f32.mrb[0].mxu0
        %v3900 = vadd.f32 %v3739, %v3899
        %v3901 = vpop.f32.mrb[0].mxu0
        %3902 = vmatprep.mubr.bf16.mxu0 0
        %3903 = vmatmul.mubr.bf16.gmra.mrb[0].mxu0 %v2514
        %v3904 = vpop.f32.mrb[0].mxu0
        %v3905 = vadd.f32 %v3744, %v3904
        %v3906 = vpop.f32.mrb[0].mxu0
        %v3907 = vpop.f32.mrb[0].mxu0
        %v3908 = vadd.f32 %v3747, %v3907
        %v3909 = vpop.f32.mrb[0].mxu0
        %3910 = vmatprep.mubr.bf16.mxu0 0
        %3911 = vmatmul.mubr.bf16.gmra.mrb[0].mxu0 %v2523
        %v3912 = vpop.f32.mrb[0].mxu0
        %v3913 = vadd.f32 %v3752, %v3912
        %v3914 = vpop.f32.mrb[0].mxu0
        %v3915 = vpop.f32.mrb[0].mxu0
        %v3916 = vadd.f32 %v3755, %v3915
        %v3917 = vpop.f32.mrb[0].mxu0
        %3918 = vmatprep.mubr.bf16.mxu0 0
        %3919 = vmatmul.mubr.bf16.gmra.mrb[0].mxu0 %v2532
        %v3920 = vpop.f32.mrb[0].mxu0
        %v3921 = vadd.f32 %v3760, %v3920
        %v3922 = vpop.f32.mrb[0].mxu0
        %v3923 = vpop.f32.mrb[0].mxu0
        %v3924 = vadd.f32 %v3763, %v3923
        %v3925 = vpop.f32.mrb[0].mxu0
        %3926 = vmatprep.mubr.bf16.mxu0 0
        %3927 = vmatmul.mubr.bf16.gmra.mrb[0].mxu0 %v2541
        %v3928 = vpop.f32.mrb[0].mxu0
        %v3929 = vadd.f32 %v3768, %v3928
        %v3930 = vpop.f32.mrb[0].mxu0
        %v3931 = vpop.f32.mrb[0].mxu0
        %v3932 = vadd.f32 %v3771, %v3931
        %v3933 = vpop.f32.mrb[0].mxu0
        %3934 = vmatprep.mubr.bf16.mxu0 0
        %3935 = vmatmul.mubr.bf16.gmra.mrb[0].mxu0 %v2550
        %v3936 = vpop.f32.mrb[0].mxu0
        %v3937 = vadd.f32 %v3776, %v3936
        %v3938 = vpop.f32.mrb[0].mxu0
        %v3939 = vpop.f32.mrb[0].mxu0
        %v3940 = vadd.f32 %v3779, %v3939
        %v3941 = vpop.f32.mrb[0].mxu0
        %3942 = vmatprep.mubr.bf16.mxu0 0
        %3943 = vmatmul.mubr.bf16.gmra.mrb[0].mxu0 %v2559
        %v3944 = vpop.f32.mrb[0].mxu0
        %v3945 = vadd.f32 %v3784, %v3944
        %v3946 = vpop.f32.mrb[0].mxu0
        %v3947 = vpop.f32.mrb[0].mxu0
        %v3948 = vadd.f32 %v3787, %v3947
        %v3949 = vpop.f32.mrb[0].mxu0
        %3950 = vmatprep.mubr.bf16.mxu0 0
        %3951 = vmatmul.mubr.bf16.gmra.mrb[0].mxu0 %v2568
        %v3952 = vpop.f32.mrb[0].mxu0
        %v3953 = vadd.f32 %v3792, %v3952
        %v3954 = vpop.f32.mrb[0].mxu0
        %v3955 = vpop.f32.mrb[0].mxu0
        %v3956 = vadd.f32 %v3795, %v3955
        %v3957 = vpop.f32.mrb[0].mxu0
        %3958 = vmatprep.mubr.bf16.mxu0 0
        %3959 = vmatmul.mubr.bf16.gmra.mrb[0].mxu0 %v2577
        %v3960 = vpop.f32.mrb[0].mxu0
        %v3961 = vadd.f32 %v3800, %v3960
        %v3962 = vpop.f32.mrb[0].mxu0
        %v3963 = vpop.f32.mrb[0].mxu0
        %v3964 = vadd.f32 %v3803, %v3963
        %v3965 = vpop.f32.mrb[0].mxu0
        %3966 = vmatprep.mubr.bf16.mxu0 0
        %3967 = vmatmul.mubr.bf16.gmra.mrb[0].mxu0 %v2586
        %v3968 = vpop.f32.mrb[0].mxu0
        %v3969 = vadd.f32 %v3808, %v3968
        %v3970 = vpop.f32.mrb[0].mxu0
        %v3971 = vpop.f32.mrb[0].mxu0
        %v3972 = vadd.f32 %v3811, %v3971
        %v3973 = vpop.f32.mrb[0].mxu0
        %3974 = vdwg.mxu0
        %v3975 = vmax.f32 %v3849, 0.0
        %v3976 = vmax.f32 %v3852, 0.0
        %v3977 = vmax.f32 %v3857, 0.0
        %v3978 = vmax.f32 %v3860, 0.0
        %v3979 = vmax.f32 %v3865, 0.0
        %v3980 = vmax.f32 %v3868, 0.0
        %v3981 = vmax.f32 %v3873, 0.0
        %v3982 = vmax.f32 %v3876, 0.0
        %v3983 = vmax.f32 %v3881, 0.0
        %v3984 = vmax.f32 %v3884, 0.0
        %v3985 = vmax.f32 %v3889, 0.0
        %v3986 = vmax.f32 %v3892, 0.0
        %v3987 = vmax.f32 %v3897, 0.0
        %v3988 = vmax.f32 %v3900, 0.0
        %v3989 = vmax.f32 %v3905, 0.0
        %v3990 = vmax.f32 %v3908, 0.0
        %v3991 = vmax.f32 %v3913, 0.0
        %v3992 = vmax.f32 %v3916, 0.0
        %v3993 = vmax.f32 %v3921, 0.0
        %v3994 = vmax.f32 %v3924, 0.0
        %v3995 = vmax.f32 %v3929, 0.0
        %v3996 = vmax.f32 %v3932, 0.0
        %v3997 = vmax.f32 %v3937, 0.0
        %v3998 = vmax.f32 %v3940, 0.0
        %v3999 = vmax.f32 %v3945, 0.0
        %v4000 = vmax.f32 %v3948, 0.0
        %v4001 = vmax.f32 %v3953, 0.0
        %v4002 = vmax.f32 %v3956, 0.0
        %v4003 = vmax.f32 %v3961, 0.0
        %v4004 = vmax.f32 %v3964, 0.0
        %v4005 = vmax.f32 %v3969, 0.0
        %v4006 = vmax.f32 %v3972, 0.0
        %v4007 = vmin.f32 %v3849, 0.0
        %v4008 = vmin.f32 %v3852, 0.0
        %v4009 = vmin.f32 %v3857, 0.0
        %v4010 = vmin.f32 %v3860, 0.0
        %v4011 = vmin.f32 %v3865, 0.0
        %v4012 = vmin.f32 %v3868, 0.0
        %v4013 = vmin.f32 %v3873, 0.0
        %v4014 = vmin.f32 %v3876, 0.0
        %v4015 = vmin.f32 %v3881, 0.0
        %v4016 = vmin.f32 %v3884, 0.0
        %v4017 = vmin.f32 %v3889, 0.0
        %v4018 = vmin.f32 %v3892, 0.0
        %v4019 = vmin.f32 %v3897, 0.0
        %v4020 = vmin.f32 %v3900, 0.0
        %v4021 = vmin.f32 %v3905, 0.0
        %v4022 = vmin.f32 %v3908, 0.0
        %v4023 = vmin.f32 %v3913, 0.0
        %v4024 = vmin.f32 %v3916, 0.0
        %v4025 = vmin.f32 %v3921, 0.0
        %v4026 = vmin.f32 %v3924, 0.0
        %v4027 = vmin.f32 %v3929, 0.0
        %v4028 = vmin.f32 %v3932, 0.0
        %v4029 = vmin.f32 %v3937, 0.0
        %v4030 = vmin.f32 %v3940, 0.0
        %v4031 = vmin.f32 %v3945, 0.0
        %v4032 = vmin.f32 %v3948, 0.0
        %v4033 = vmin.f32 %v3953, 0.0
        %v4034 = vmin.f32 %v3956, 0.0
        %v4035 = vmin.f32 %v3961, 0.0
        %v4036 = vmin.f32 %v3964, 0.0
        %v4037 = vmin.f32 %v3969, 0.0
        %v4038 = vmin.f32 %v3972, 0.0
        %v4039 = vsel %vm344, %v3975, %v4007
        %v4040 = vsel %vm344, %v3976, %v4008
        %v4041 = vsel %vm344, %v3977, %v4009
        %v4042 = vsel %vm344, %v3978, %v4010
        %v4043 = vsel %vm344, %v3979, %v4011
        %v4044 = vsel %vm344, %v3980, %v4012
        %v4045 = vsel %vm344, %v3981, %v4013
        %v4046 = vsel %vm344, %v3982, %v4014
        %v4047 = vsel %vm344, %v3983, %v4015
        %v4048 = vsel %vm344, %v3984, %v4016
        %v4049 = vsel %vm344, %v3985, %v4017
        %v4050 = vsel %vm344, %v3986, %v4018
        %v4051 = vsel %vm344, %v3987, %v4019
        %v4052 = vsel %vm344, %v3988, %v4020
        %v4053 = vsel %vm344, %v3989, %v4021
        %v4054 = vsel %vm344, %v3990, %v4022
        %v4055 = vsel %vm344, %v3991, %v4023
        %v4056 = vsel %vm344, %v3992, %v4024
        %v4057 = vsel %vm344, %v3993, %v4025
        %v4058 = vsel %vm344, %v3994, %v4026
        %v4059 = vsel %vm344, %v3995, %v4027
        %v4060 = vsel %vm344, %v3996, %v4028
        %v4061 = vsel %vm344, %v3997, %v4029
        %v4062 = vsel %vm344, %v3998, %v4030
        %v4063 = vsel %vm344, %v3999, %v4031
        %v4064 = vsel %vm344, %v4000, %v4032
        %v4065 = vsel %vm344, %v4001, %v4033
        %v4066 = vsel %vm344, %v4002, %v4034
        %v4067 = vsel %vm344, %v4003, %v4035
        %v4068 = vsel %vm344, %v4004, %v4036
        %v4069 = vsel %vm344, %v4005, %v4037
        %v4070 = vsel %vm344, %v4006, %v4038
        %v4071 = vpack.c.bf16 %v4040, %v4039
        %v4072 = vpack.c.bf16 %v4042, %v4041
        %v4073 = vpack.c.bf16 %v4044, %v4043
        %v4074 = vpack.c.bf16 %v4046, %v4045
        %v4075 = vpack.c.bf16 %v4048, %v4047
        %v4076 = vpack.c.bf16 %v4050, %v4049
        %v4077 = vpack.c.bf16 %v4052, %v4051
        %v4078 = vpack.c.bf16 %v4054, %v4053
        %v4079 = vpack.c.bf16 %v4056, %v4055
        %v4080 = vpack.c.bf16 %v4058, %v4057
        %v4081 = vpack.c.bf16 %v4060, %v4059
        %v4082 = vpack.c.bf16 %v4062, %v4061
        %v4083 = vpack.c.bf16 %v4064, %v4063
        %v4084 = vpack.c.bf16 %v4066, %v4065
        %v4085 = vpack.c.bf16 %v4068, %v4067
        %v4086 = vpack.c.bf16 %v4070, %v4069
        %v4087 = vld [vmem:[#allocation10] sm:$0xf]
        %v4088 = vld [vmem:[#allocation10 + $0x4] sm:$0xf]
        %v4089 = vld [vmem:[#allocation10 + $0x8] sm:$0xf]
        %v4090 = vld [vmem:[#allocation10 + $0xc] sm:$0xf]
        %v4091 = vld [vmem:[#allocation10 + $0x10] sm:$0xf]
        %v4092 = vld [vmem:[#allocation10 + $0x14] sm:$0xf]
        %v4093 = vld [vmem:[#allocation10 + $0x18] sm:$0xf]
        %v4094 = vld [vmem:[#allocation10 + $0x1c] sm:$0xf]
        %v4095 = vld [vmem:[#allocation10 + $0x20] sm:$0xf]
        %v4096 = vld [vmem:[#allocation10 + $0x24] sm:$0xf]
        %v4097 = vld [vmem:[#allocation10 + $0x28] sm:$0xf]
        %v4098 = vld [vmem:[#allocation10 + $0x2c] sm:$0xf]
        %v4099 = vld [vmem:[#allocation10 + $0x30] sm:$0xf]
        %v4100 = vld [vmem:[#allocation10 + $0x34] sm:$0xf]
        %v4101 = vld [vmem:[#allocation10 + $0x38] sm:$0xf]
        %v4102 = vld [vmem:[#allocation10 + $0x3c] sm:$0xf]
        %v4103 = vld [vmem:[%s6] sm:$0x1]
        %v4105 = vlaneseq
        %v4106 = vshrl.u32 %v4105, 7
        %v4107 = vsub.s32 0, %v4106
        %v4108 = vrot.slane %v4103, %v4107
        %v4126 = vunpack.c.l.b16 %v4087
        %v4127 = vunpack.c.l.b16 %v4088
        %v4128 = vunpack.c.l.b16 %v4089
        %v4129 = vunpack.c.l.b16 %v4090
        %v4130 = vunpack.c.l.b16 %v4091
        %v4131 = vunpack.c.l.b16 %v4092
        %v4132 = vunpack.c.l.b16 %v4093
        %v4133 = vunpack.c.l.b16 %v4094
        %v4134 = vunpack.c.l.b16 %v4095
        %v4135 = vunpack.c.l.b16 %v4096
        %v4136 = vunpack.c.l.b16 %v4097
        %v4137 = vunpack.c.l.b16 %v4098
        %v4138 = vunpack.c.l.b16 %v4099
        %v4139 = vunpack.c.l.b16 %v4100
        %v4140 = vunpack.c.l.b16 %v4101
        %v4141 = vunpack.c.l.b16 %v4102
        %v4142 = vpack.c.b16 %v4127, %v4126
        %v4143 = vpack.c.b16 %v4129, %v4128
        %v4144 = vpack.c.b16 %v4131, %v4130
        %v4145 = vpack.c.b16 %v4133, %v4132
        %v4146 = vpack.c.b16 %v4135, %v4134
        %v4147 = vpack.c.b16 %v4137, %v4136
        %v4148 = vpack.c.b16 %v4139, %v4138
        %v4149 = vpack.c.b16 %v4141, %v4140
        %4158 = vmatprep.subr.bf16.mxu0 0
        %4159 = vmatpush1.bf16.msra.mxu0 %v4142
        %4160 = vmatprep.subr.bf16.mxu0 0
        %4161 = vmatpush1.bf16.msra.mxu0 %v4143
        %4162 = vmatprep.subr.bf16.mxu0 0
        %4163 = vmatpush1.bf16.msra.mxu0 %v4144
        %4164 = vmatprep.subr.bf16.mxu0 0
        %4165 = vmatpush1.bf16.msra.mxu0 %v4145
        %4166 = vmatprep.subr.bf16.mxu0 0
        %4167 = vmatpush1.bf16.msra.mxu0 %v4146
        %4168 = vmatprep.subr.bf16.mxu0 0
        %4169 = vmatpush1.bf16.msra.mxu0 %v4147
        %4170 = vmatprep.subr.bf16.mxu0 0
        %4171 = vmatpush1.bf16.msra.mxu0 %v4148
        %4172 = vmatprep.subr.bf16.mxu0 0
        %4173 = vmatpush1.bf16.msra.mxu0 %v4149
        %4174 = vmatprep.subr.bf16.mxu0 0
        %4175 = vmatpush1.bf16.msra.mxu0 0
        %4176 = vmatprep.subr.bf16.mxu0 0
        %4177 = vmatpush1.bf16.msra.mxu0 0
        %4178 = vmatprep.subr.bf16.mxu0 0
        %4179 = vmatpush1.bf16.msra.mxu0 0
        %4180 = vmatprep.subr.bf16.mxu0 0
        %4181 = vmatpush1.bf16.msra.mxu0 0
        %4182 = vmatprep.subr.bf16.mxu0 0
        %4183 = vmatpush1.bf16.msra.mxu0 0
        %4184 = vmatprep.subr.bf16.mxu0 0
        %4185 = vmatpush1.bf16.msra.mxu0 0
        %4186 = vmatprep.subr.bf16.mxu0 0
        %4187 = vmatpush1.bf16.msra.mxu0 0
        %4188 = vmatprep.subr.bf16.mxu0 0
        %4189 = vmatpush1.bf16.msra.mxu0 0
        %4190 = vmatprep.mubr.bf16.mxu0 0
        %4191 = vmatmul.mubr.bf16.gmra.mrb[0].mxu0 %v4071
        %v4192 = vpop.f32.mrb[0].mxu0
        %v4193 = vadd.f32 %v4108, %v4192
        %v4194 = vpop.f32.mrb[0].mxu0
        %v4195 = vpop.f32.mrb[0].mxu0
        %v4196 = vadd.f32 %v4108, %v4195
        %v4197 = vpop.f32.mrb[0].mxu0
        %4198 = vmatprep.mubr.bf16.mxu0 0
        %4199 = vmatmul.mubr.bf16.gmra.mrb[0].mxu0 %v4072
        %v4200 = vpop.f32.mrb[0].mxu0
        %v4201 = vadd.f32 %v4108, %v4200
        %v4202 = vpop.f32.mrb[0].mxu0
        %v4203 = vpop.f32.mrb[0].mxu0
        %v4204 = vadd.f32 %v4108, %v4203
        %v4205 = vpop.f32.mrb[0].mxu0
        %4206 = vmatprep.mubr.bf16.mxu0 0
        %4207 = vmatmul.mubr.bf16.gmra.mrb[0].mxu0 %v4073
        %v4208 = vpop.f32.mrb[0].mxu0
        %v4209 = vadd.f32 %v4108, %v4208
        %v4210 = vpop.f32.mrb[0].mxu0
        %v4211 = vpop.f32.mrb[0].mxu0
        %v4212 = vadd.f32 %v4108, %v4211
        %v4213 = vpop.f32.mrb[0].mxu0
        %4214 = vmatprep.mubr.bf16.mxu0 0
        %4215 = vmatmul.mubr.bf16.gmra.mrb[0].mxu0 %v4074
        %v4216 = vpop.f32.mrb[0].mxu0
        %v4217 = vadd.f32 %v4108, %v4216
        %v4218 = vpop.f32.mrb[0].mxu0
        %v4219 = vpop.f32.mrb[0].mxu0
        %v4220 = vadd.f32 %v4108, %v4219
        %v4221 = vpop.f32.mrb[0].mxu0
        %4222 = vmatprep.mubr.bf16.mxu0 0
        %4223 = vmatmul.mubr.bf16.gmra.mrb[0].mxu0 %v4075
        %v4224 = vpop.f32.mrb[0].mxu0
        %v4225 = vadd.f32 %v4108, %v4224
        %v4226 = vpop.f32.mrb[0].mxu0
        %v4227 = vpop.f32.mrb[0].mxu0
        %v4228 = vadd.f32 %v4108, %v4227
        %v4229 = vpop.f32.mrb[0].mxu0
        %4230 = vmatprep.mubr.bf16.mxu0 0
        %4231 = vmatmul.mubr.bf16.gmra.mrb[0].mxu0 %v4076
        %v4232 = vpop.f32.mrb[0].mxu0
        %v4233 = vadd.f32 %v4108, %v4232
        %v4234 = vpop.f32.mrb[0].mxu0
        %v4235 = vpop.f32.mrb[0].mxu0
        %v4236 = vadd.f32 %v4108, %v4235
        %v4237 = vpop.f32.mrb[0].mxu0
        %4238 = vmatprep.mubr.bf16.mxu0 0
        %4239 = vmatmul.mubr.bf16.gmra.mrb[0].mxu0 %v4077
        %v4240 = vpop.f32.mrb[0].mxu0
        %v4241 = vadd.f32 %v4108, %v4240
        %v4242 = vpop.f32.mrb[0].mxu0
        %v4243 = vpop.f32.mrb[0].mxu0
        %v4244 = vadd.f32 %v4108, %v4243
        %v4245 = vpop.f32.mrb[0].mxu0
        %4246 = vmatprep.mubr.bf16.mxu0 0
        %4247 = vmatmul.mubr.bf16.gmra.mrb[0].mxu0 %v4078
        %v4248 = vpop.f32.mrb[0].mxu0
        %v4249 = vadd.f32 %v4108, %v4248
        %v4250 = vpop.f32.mrb[0].mxu0
        %v4251 = vpop.f32.mrb[0].mxu0
        %v4252 = vadd.f32 %v4108, %v4251
        %v4253 = vpop.f32.mrb[0].mxu0
        %4254 = vmatprep.mubr.bf16.mxu0 0
        %4255 = vmatmul.mubr.bf16.gmra.mrb[0].mxu0 %v4079
        %v4256 = vpop.f32.mrb[0].mxu0
        %v4257 = vadd.f32 %v4108, %v4256
        %v4258 = vpop.f32.mrb[0].mxu0
        %v4259 = vpop.f32.mrb[0].mxu0
        %v4260 = vadd.f32 %v4108, %v4259
        %v4261 = vpop.f32.mrb[0].mxu0
        %4262 = vmatprep.mubr.bf16.mxu0 0
        %4263 = vmatmul.mubr.bf16.gmra.mrb[0].mxu0 %v4080
        %v4264 = vpop.f32.mrb[0].mxu0
        %v4265 = vadd.f32 %v4108, %v4264
        %v4266 = vpop.f32.mrb[0].mxu0
        %v4267 = vpop.f32.mrb[0].mxu0
        %v4268 = vadd.f32 %v4108, %v4267
        %v4269 = vpop.f32.mrb[0].mxu0
        %4270 = vmatprep.mubr.bf16.mxu0 0
        %4271 = vmatmul.mubr.bf16.gmra.mrb[0].mxu0 %v4081
        %v4272 = vpop.f32.mrb[0].mxu0
        %v4273 = vadd.f32 %v4108, %v4272
        %v4274 = vpop.f32.mrb[0].mxu0
        %v4275 = vpop.f32.mrb[0].mxu0
        %v4276 = vadd.f32 %v4108, %v4275
        %v4277 = vpop.f32.mrb[0].mxu0
        %4278 = vmatprep.mubr.bf16.mxu0 0
        %4279 = vmatmul.mubr.bf16.gmra.mrb[0].mxu0 %v4082
        %v4280 = vpop.f32.mrb[0].mxu0
        %v4281 = vadd.f32 %v4108, %v4280
        %v4282 = vpop.f32.mrb[0].mxu0
        %v4283 = vpop.f32.mrb[0].mxu0
        %v4284 = vadd.f32 %v4108, %v4283
        %v4285 = vpop.f32.mrb[0].mxu0
        %4286 = vmatprep.mubr.bf16.mxu0 0
        %4287 = vmatmul.mubr.bf16.gmra.mrb[0].mxu0 %v4083
        %v4288 = vpop.f32.mrb[0].mxu0
        %v4289 = vadd.f32 %v4108, %v4288
        %v4290 = vpop.f32.mrb[0].mxu0
        %v4291 = vpop.f32.mrb[0].mxu0
        %v4292 = vadd.f32 %v4108, %v4291
        %v4293 = vpop.f32.mrb[0].mxu0
        %4294 = vmatprep.mubr.bf16.mxu0 0
        %4295 = vmatmul.mubr.bf16.gmra.mrb[0].mxu0 %v4084
        %v4296 = vpop.f32.mrb[0].mxu0
        %v4297 = vadd.f32 %v4108, %v4296
        %v4298 = vpop.f32.mrb[0].mxu0
        %v4299 = vpop.f32.mrb[0].mxu0
        %v4300 = vadd.f32 %v4108, %v4299
        %v4301 = vpop.f32.mrb[0].mxu0
        %4302 = vmatprep.mubr.bf16.mxu0 0
        %4303 = vmatmul.mubr.bf16.gmra.mrb[0].mxu0 %v4085
        %v4304 = vpop.f32.mrb[0].mxu0
        %v4305 = vadd.f32 %v4108, %v4304
        %v4306 = vpop.f32.mrb[0].mxu0
        %v4307 = vpop.f32.mrb[0].mxu0
        %v4308 = vadd.f32 %v4108, %v4307
        %v4309 = vpop.f32.mrb[0].mxu0
        %4310 = vmatprep.mubr.bf16.mxu0 0
        %4311 = vmatmul.mubr.bf16.gmra.mrb[0].mxu0 %v4086
        %v4312 = vpop.f32.mrb[0].mxu0
        %v4313 = vadd.f32 %v4108, %v4312
        %v4314 = vpop.f32.mrb[0].mxu0
        %v4315 = vpop.f32.mrb[0].mxu0
        %v4316 = vadd.f32 %v4108, %v4315
        %v4317 = vpop.f32.mrb[0].mxu0
        %4318 = vdwg.mxu0
        %v4319 = vadd.f32 %v4193, %v346
        %v4320 = vadd.f32 %v4196, %v347
        %v4321 = vadd.f32 %v4201, %v348
        %v4322 = vadd.f32 %v4204, %v349
        %v4323 = vadd.f32 %v4209, %v350
        %v4324 = vadd.f32 %v4212, %v351
        %v4325 = vadd.f32 %v4217, %v352
        %v4326 = vadd.f32 %v4220, %v353
        %v4327 = vadd.f32 %v4225, %v354
        %v4328 = vadd.f32 %v4228, %v355
        %v4329 = vadd.f32 %v4233, %v356
        %v4330 = vadd.f32 %v4236, %v357
        %v4331 = vadd.f32 %v4241, %v358
        %v4332 = vadd.f32 %v4244, %v359
        %v4333 = vadd.f32 %v4249, %v360
        %v4334 = vadd.f32 %v4252, %v361
        %v4335 = vadd.f32 %v4257, %v362
        %v4336 = vadd.f32 %v4260, %v363
        %v4337 = vadd.f32 %v4265, %v364
        %v4338 = vadd.f32 %v4268, %v365
        %v4339 = vadd.f32 %v4273, %v366
        %v4340 = vadd.f32 %v4276, %v367
        %v4341 = vadd.f32 %v4281, %v368
        %v4342 = vadd.f32 %v4284, %v369
        %v4343 = vadd.f32 %v4289, %v370
        %v4344 = vadd.f32 %v4292, %v371
        %v4345 = vadd.f32 %v4297, %v372
        %v4346 = vadd.f32 %v4300, %v373
        %v4347 = vadd.f32 %v4305, %v374
        %v4348 = vadd.f32 %v4308, %v375
        %v4349 = vadd.f32 %v4313, %v376
        %v4350 = vadd.f32 %v4316, %v377
        %v4351 = vmax.f32 %v4319, 0.0
        %v4352 = vmax.f32 %v4320, 0.0
        %v4353 = vmax.f32 %v4321, 0.0
        %v4354 = vmax.f32 %v4322, 0.0
        %v4355 = vmax.f32 %v4323, 0.0
        %v4356 = vmax.f32 %v4324, 0.0
        %v4357 = vmax.f32 %v4325, 0.0
        %v4358 = vmax.f32 %v4326, 0.0
        %v4359 = vmax.f32 %v4327, 0.0
        %v4360 = vmax.f32 %v4328, 0.0
        %v4361 = vmax.f32 %v4329, 0.0
        %v4362 = vmax.f32 %v4330, 0.0
        %v4363 = vmax.f32 %v4331, 0.0
        %v4364 = vmax.f32 %v4332, 0.0
        %v4365 = vmax.f32 %v4333, 0.0
        %v4366 = vmax.f32 %v4334, 0.0
        %v4367 = vmax.f32 %v4335, 0.0
        %v4368 = vmax.f32 %v4336, 0.0
        %v4369 = vmax.f32 %v4337, 0.0
        %v4370 = vmax.f32 %v4338, 0.0
        %v4371 = vmax.f32 %v4339, 0.0
        %v4372 = vmax.f32 %v4340, 0.0
        %v4373 = vmax.f32 %v4341, 0.0
        %v4374 = vmax.f32 %v4342, 0.0
        %v4375 = vmax.f32 %v4343, 0.0
        %v4376 = vmax.f32 %v4344, 0.0
        %v4377 = vmax.f32 %v4345, 0.0
        %v4378 = vmax.f32 %v4346, 0.0
        %v4379 = vmax.f32 %v4347, 0.0
        %v4380 = vmax.f32 %v4348, 0.0
        %v4381 = vmax.f32 %v4349, 0.0
        %v4382 = vmax.f32 %v4350, 0.0
        %v4383 = vmin.f32 %v4319, 0.0
        %v4384 = vmin.f32 %v4320, 0.0
        %v4385 = vmin.f32 %v4321, 0.0
        %v4386 = vmin.f32 %v4322, 0.0
        %v4387 = vmin.f32 %v4323, 0.0
        %v4388 = vmin.f32 %v4324, 0.0
        %v4389 = vmin.f32 %v4325, 0.0
        %v4390 = vmin.f32 %v4326, 0.0
        %v4391 = vmin.f32 %v4327, 0.0
        %v4392 = vmin.f32 %v4328, 0.0
        %v4393 = vmin.f32 %v4329, 0.0
        %v4394 = vmin.f32 %v4330, 0.0
        %v4395 = vmin.f32 %v4331, 0.0
        %v4396 = vmin.f32 %v4332, 0.0
        %v4397 = vmin.f32 %v4333, 0.0
        %v4398 = vmin.f32 %v4334, 0.0
        %v4399 = vmin.f32 %v4335, 0.0
        %v4400 = vmin.f32 %v4336, 0.0
        %v4401 = vmin.f32 %v4337, 0.0
        %v4402 = vmin.f32 %v4338, 0.0
        %v4403 = vmin.f32 %v4339, 0.0
        %v4404 = vmin.f32 %v4340, 0.0
        %v4405 = vmin.f32 %v4341, 0.0
        %v4406 = vmin.f32 %v4342, 0.0
        %v4407 = vmin.f32 %v4343, 0.0
        %v4408 = vmin.f32 %v4344, 0.0
        %v4409 = vmin.f32 %v4345, 0.0
        %v4410 = vmin.f32 %v4346, 0.0
        %v4411 = vmin.f32 %v4347, 0.0
        %v4412 = vmin.f32 %v4348, 0.0
        %v4413 = vmin.f32 %v4349, 0.0
        %v4414 = vmin.f32 %v4350, 0.0
        %v4415 = vsel %vm345, %v4351, %v4383
        %v4416 = vsel %vm345, %v4352, %v4384
        %v4417 = vsel %vm345, %v4353, %v4385
        %v4418 = vsel %vm345, %v4354, %v4386
        %v4419 = vsel %vm345, %v4355, %v4387
        %v4420 = vsel %vm345, %v4356, %v4388
        %v4421 = vsel %vm345, %v4357, %v4389
        %v4422 = vsel %vm345, %v4358, %v4390
        %v4423 = vsel %vm345, %v4359, %v4391
        %v4424 = vsel %vm345, %v4360, %v4392
        %v4425 = vsel %vm345, %v4361, %v4393
        %v4426 = vsel %vm345, %v4362, %v4394
        %v4427 = vsel %vm345, %v4363, %v4395
        %v4428 = vsel %vm345, %v4364, %v4396
        %v4429 = vsel %vm345, %v4365, %v4397
        %v4430 = vsel %vm345, %v4366, %v4398
        %v4431 = vsel %vm345, %v4367, %v4399
        %v4432 = vsel %vm345, %v4368, %v4400
        %v4433 = vsel %vm345, %v4369, %v4401
        %v4434 = vsel %vm345, %v4370, %v4402
        %v4435 = vsel %vm345, %v4371, %v4403
        %v4436 = vsel %vm345, %v4372, %v4404
        %v4437 = vsel %vm345, %v4373, %v4405
        %v4438 = vsel %vm345, %v4374, %v4406
        %v4439 = vsel %vm345, %v4375, %v4407
        %v4440 = vsel %vm345, %v4376, %v4408
        %v4441 = vsel %vm345, %v4377, %v4409
        %v4442 = vsel %vm345, %v4378, %v4410
        %v4443 = vsel %vm345, %v4379, %v4411
        %v4444 = vsel %vm345, %v4380, %v4412
        %v4445 = vsel %vm345, %v4381, %v4413
        %v4446 = vsel %vm345, %v4382, %v4414
        %4447 = vst [vmem:[%s340] sm:$0xff] %v4415
        %4448 = vst [vmem:[%s340 + $0x8] sm:$0xff] %v4416
        %4449 = vst [vmem:[%s340 + $0x10] sm:$0xff] %v4417
        %4450 = vst [vmem:[%s340 + $0x18] sm:$0xff] %v4418
        %4451 = vst [vmem:[%s340 + $0x20] sm:$0xff] %v4419
        %4452 = vst [vmem:[%s340 + $0x28] sm:$0xff] %v4420
        %4453 = vst [vmem:[%s340 + $0x30] sm:$0xff] %v4421
        %4454 = vst [vmem:[%s340 + $0x38] sm:$0xff] %v4422
        %4455 = vst [vmem:[%s340 + $0x40] sm:$0xff] %v4423
        %4456 = vst [vmem:[%s340 + $0x48] sm:$0xff] %v4424
        %4457 = vst [vmem:[%s340 + $0x50] sm:$0xff] %v4425
        %4458 = vst [vmem:[%s340 + $0x58] sm:$0xff] %v4426
        %4459 = vst [vmem:[%s340 + $0x60] sm:$0xff] %v4427
        %4460 = vst [vmem:[%s340 + $0x68] sm:$0xff] %v4428
        %4461 = vst [vmem:[%s340 + $0x70] sm:$0xff] %v4429
        %4462 = vst [vmem:[%s340 + $0x78] sm:$0xff] %v4430
        %4463 = vst [vmem:[%s340 + $0x80] sm:$0xff] %v4431
        %4464 = vst [vmem:[%s340 + $0x88] sm:$0xff] %v4432
        %4465 = vst [vmem:[%s340 + $0x90] sm:$0xff] %v4433
        %4466 = vst [vmem:[%s340 + $0x98] sm:$0xff] %v4434
        %4467 = vst [vmem:[%s340 + $0xa0] sm:$0xff] %v4435
        %4468 = vst [vmem:[%s340 + $0xa8] sm:$0xff] %v4436
        %4469 = vst [vmem:[%s340 + $0xb0] sm:$0xff] %v4437
        %4470 = vst [vmem:[%s340 + $0xb8] sm:$0xff] %v4438
        %4471 = vst [vmem:[%s340 + $0xc0] sm:$0xff] %v4439
        %4472 = vst [vmem:[%s340 + $0xc8] sm:$0xff] %v4440
        %4473 = vst [vmem:[%s340 + $0xd0] sm:$0xff] %v4441
        %4474 = vst [vmem:[%s340 + $0xd8] sm:$0xff] %v4442
        %4475 = vst [vmem:[%s340 + $0xe0] sm:$0xff] %v4443
        %4476 = vst [vmem:[%s340 + $0xe8] sm:$0xff] %v4444
        %4477 = vst [vmem:[%s340 + $0xf0] sm:$0xff] %v4445
        %4478 = vst [vmem:[%s340 + $0xf8] sm:$0xff] %v4446
        %s4479 = sand.u32 %s186, 1
        %s4480 = scalar_lea.sflag [#allocation6], %s4479
        %s4481 = sand.u32 %s186, 1
        %s4482 = smul.addr %s4481, 256
        %s4483 = scalar_lea.vmem [#allocation12], %s4482
        // Predicated region
        $region65: #{tpu_custom_call.1} parent=47 // pred_check
          %p4484 = pneg %p196
        $region66: #{tpu_custom_call.1} parent=47 // pred_check_branch
          %4486 = sbr.rel (%p4484) target = $region68
        $region67: #{tpu_custom_call.1} parent=47 // pred_region
          %s4488 = ssub.s32 4096, 4096
          %4489 = vsyncadd %s4480, %s4488
          %s4490 = smul.addr %s26, 32
          %s4491 = smul.addr %s4490, 128
          %s4492 = scalar_lea.hbm %s7, %s4491
          %s4493 = sshll.u32 %s4483, 4
          %s4494 = int_to_ptr.vmem [resolvable:$true] %s4493
          %4499 = dma.vmem_to_hbm [thread:$0]  %s4494, 4096, %s4492, %s4480, 128, 128, 8
        $region68: #{tpu_custom_call.1} parent=47 // pred_fallthru
          _
      $region48: #{tpu_custom_call.1} parent=5 // pred_fallthru
        _
      %p4500 = scmp.le.s32.totalorder 2, %s21
      // Predicated region
      $region69: #{tpu_custom_call.1} parent=5 // pred_check
        %p4501 = pneg %p4500
      $region70: #{tpu_custom_call.1} parent=5 // pred_check_branch
        %4503 = sbr.rel (%p4501) target = $region72
      $region71: #{tpu_custom_call.1} parent=5 // pred_region
        %s4504 = ssub.s32 %s21, 2
        // Predicated region
        $region73: #{tpu_custom_call.1} parent=71 // pred_check
          %p4505 = pneg %p202
        $region74: #{tpu_custom_call.1} parent=71 // pred_check_branch
          %4507 = sbr.rel (%p4505) target = $region76
        $region75: #{tpu_custom_call.1} parent=71 // pred_region
          %s4508 = sand.u32 %s187, 1
          %s4509 = scalar_lea.sflag [#allocation6], %s4508
          %s4510 = sand.u32 %s187, 1
          %s4511 = smul.addr %s4510, 256
          %s4512 = scalar_lea.vmem [#allocation12], %s4511
          %4513 = dma.done %s4509, 4096
        $region76: #{tpu_custom_call.1} parent=71 // pred_fallthru
          _
      $region72: #{tpu_custom_call.1} parent=5 // pred_fallthru
        _
    $region6: #{tpu_custom_call.1} parent=1 // loop_footer
      %s25 = sadd.s32 1, %s21
    $region7: #{tpu_custom_call.1} parent=1 // loop_footer_branch
      %20 = sbr.rel target = $region3
    $region8: #{tpu_custom_call.1} parent=1 // loop_exit
      _
    %4514 = vsyncpa [#allocation5], 1
    %s4515 = scalar_lea.sflag [#allocation5], 1
    %4516 = vsyncpa %s4515, 1
    %4517 = vsyncpa [#allocation8], 1
    %4518 = vsyncpa [#allocation11], 1
    %4519 = vsyncpa [#allocation6], 1
    %s4520 = scalar_lea.sflag [#allocation6], 1
    %4521 = vsyncpa %s4520, 1

</llo_original>
